<compile_context>
chip_gen: v7x
topology: tpu7x:2x2x1
jax: 0.10.0
libtpu: 0.0.40
codegen_flags: <defaults>
</compile_context>

<pallas_src>
import math
from functools import partial

import jax
import jax.numpy as jnp
from jax.experimental import pallas as pl
from jax.experimental.pallas import tpu as pltpu

_BN_EPS = 1e-5
_OUT_PAD = 128  # lane-dense padding of the final projection output


# ----------------------------------------------------------------------------
# Fused Pallas kernel
# ----------------------------------------------------------------------------
def _build_semgcn7_kernel(num_layers):
    """Build the fused forward kernel for a static num_layers."""

    def kernel(x_ref, win_ref, bin_ref, gin_ref, bein_ref,
               wstk_ref, bstk_ref, gstk_ref, bestk_ref,
               wout_ref, bout_ref,
               diag_n_ref, off_n_ref, diag_s_ref, off_s_ref,
               o_ref):
        diag_n = diag_n_ref[...]      # (N, 1) f32 diagonal of softmaxed adj
        off_n = off_n_ref[...]        # (N, N) bf16 block-diag off-diagonal
        diag_s = diag_s_ref[...]
        off_s = off_s_ref[...]

        def mix(h0, h1, bias, diag, off_blk):
            # out = (adj*I)@h0 + (adj*(1-I))@h1 + bias.  Diagonal term is a
            # VPU row-scale; off-diagonal term is ONE block-diagonal MXU
            # matmul (bf16 operands, f32 accumulation).
            mixed = jnp.dot(off_blk, h1.astype(jnp.bfloat16),
                            preferred_element_type=jnp.float32)
            return diag * h0 + mixed + bias

        def sem_conv(h, w0, w1, bias, diag, off_blk):
            # Separate, lane-aligned W0 / W1 matmuls (no offset-32 slices).
            hb = h.astype(jnp.bfloat16)
            h0 = jnp.dot(hb, w0, preferred_element_type=jnp.float32)
            h1 = jnp.dot(hb, w1, preferred_element_type=jnp.float32)
            return mix(h0, h1, bias, diag, off_blk)

        def bn_relu(y, gamma, beta):
            # BatchNorm1d (training-mode batch stats over all B*J rows,
            # biased variance, eps=1e-5) + ReLU.  Sum and sum-of-squares are
            # merged into one cross-sublane reduce by stacking along lanes.
            # One-pass E[x^2]-E[x]^2 is safe here: activations are ~unit
            # scale thanks to the repeated normalization.
            rows, cols = y.shape
            inv_n = 1.0 / rows
            if 2 * cols <= 128:
                stats = jnp.sum(jnp.concatenate([y, y * y], axis=1),
                                axis=0, keepdims=True) * inv_n
                mean = stats[:, :cols]
                ex2 = stats[:, cols:]
            else:
                mean = jnp.sum(y, axis=0, keepdims=True) * inv_n
                ex2 = jnp.sum(y * y, axis=0, keepdims=True) * inv_n
            var = ex2 - mean * mean
            yhat = (y - mean) * jax.lax.rsqrt(var + _BN_EPS)
            return jnp.maximum(yhat * gamma + beta, 0.0)

        # ---- gconv_input: SemGraphConv(coords_in -> hid, adj_n) + BN + ReLU.
        # Cin is tiny (2): f32 VPU broadcast MACs instead of a padded MXU
        # contraction; the off-diagonal mix still uses the bf16 MXU path.
        cin = x_ref.shape[0]

        def input_proj(k):
            acc = x_ref[0] * win_ref[k * cin + 0]        # (N,1) * (1,hid)
            for c in range(1, cin):
                acc = acc + x_ref[c] * win_ref[k * cin + c]
            return acc

        h = bn_relu(mix(input_proj(0), input_proj(1), bin_ref[...],
                        diag_n, off_n),
                    gin_ref[...], bein_ref[...])

        # ---- gconv_layers: num_layers x [ResGraphConv(adj_n), GraphConv(adj_s)]
        # TODO(synk): convert to lax.fori_loop w/ dynamic weight indexing if
        # hid grows (>=128) to bound vreg/VMEM live ranges.
        for blk in range(num_layers):
            base = 3 * blk
            residual = h
            for c in range(2):
                idx = base + c
                h = bn_relu(sem_conv(h, wstk_ref[2 * idx], wstk_ref[2 * idx + 1],
                                     bstk_ref[idx], diag_n, off_n),
                            gstk_ref[idx], bestk_ref[idx])
            h = residual + h                    # residual add fused in-kernel
            idx = base + 2
            h = bn_relu(sem_conv(h, wstk_ref[2 * idx], wstk_ref[2 * idx + 1],
                                 bstk_ref[idx], diag_s, off_s),
                        gstk_ref[idx], bestk_ref[idx])

        # ---- gconv_output: SemGraphConv(hid -> 3, adj_n), no BN / ReLU.
        # Weights/bias zero-padded to 128 lanes -> single lane-dense HBM store.
        out = sem_conv(h, wout_ref[0], wout_ref[1], bout_ref[...],
                       diag_n, off_n)
        o_ref[...] = out.astype(o_ref.dtype)

    return kernel


@partial(jax.jit, static_argnames=("num_layers",))
def semgcn7_forward(x, params, num_layers=4):
    """x: (B, J, coords_in) -> (B, J, 3).  p_dropout=None => no dropout."""
    b, j, cin = x.shape
    n = b * j
    hid = params["wstk"].shape[-1]
    cout = params["wout"].shape[-1]
    nw = 3 * num_layers

    x2d = x.reshape(n, cin).astype(jnp.float32)
    # Pre-split x per input channel: (cin, N, 1) -> clean VPU broadcast path.
    x_cols = jnp.transpose(x2d)[:, :, None]

    def adj_operands(adj):
        # (J,J) softmaxed adj -> (N,1) diagonal row-scale (f32)
        #                      + (N,N) block-diagonal off-part (bf16, one MXU op).
        diag = jnp.tile(jnp.diagonal(adj), b).reshape(n, 1)
        off = adj * (1.0 - jnp.eye(j, dtype=adj.dtype))
        off_blk = jnp.kron(jnp.eye(b, dtype=adj.dtype), off).astype(jnp.bfloat16)
        return diag, off_blk

    diag_n, off_n = adj_operands(params["adj_n"])
    diag_s, off_s = adj_operands(params["adj_s"])

    # Pack weights for the kernel: W0/W1 separate, bf16 operands (f32 accum).
    win = params["win"].reshape(2 * cin, 1, hid)               # f32 VPU path
    wstk = params["wstk"].reshape(2 * nw, hid, hid).astype(jnp.bfloat16)
    wout = (jnp.zeros((2, hid, _OUT_PAD), jnp.float32)
            .at[:, :, :cout].set(params["wout"]).astype(jnp.bfloat16))
    bout = jnp.zeros((1, _OUT_PAD), jnp.float32).at[:, :cout].set(params["bout"])

    kernel = _build_semgcn7_kernel(num_layers)
    out_pad = pl.pallas_call(
        kernel,
        out_shape=jax.ShapeDtypeStruct((n, _OUT_PAD), jnp.float32),
        in_specs=[pl.BlockSpec(memory_space=pltpu.MemorySpace.VMEM)] * 15,
        out_specs=pl.BlockSpec(memory_space=pltpu.MemorySpace.VMEM),
        compiler_params=pltpu.CompilerParams(
            vmem_limit_bytes=32 * 1024 * 1024),
    )(x_cols, win, params["bin"], params["gin"], params["bein"],
      wstk, params["bstk"], params["gstk"], params["bestk"],
      wout, bout, diag_n, off_n, diag_s, off_s)
    return out_pad[:, :cout].reshape(b, j, cout)


# ----------------------------------------------------------------------------
# Adjacency / parameter setup (plain JAX glue, runs once)
# ----------------------------------------------------------------------------
def softmax_masked_adj(mask):
    """SemGraphConv adjacency: e=1 on mask, -9e15 elsewhere, row softmax."""
    logits = jnp.where(mask > 0, 1.0, -9e15).astype(jnp.float32)
    return jax.nn.softmax(logits, axis=1)


def _init_sem_graph_conv(key, cin, cout):
    kw, kb = jax.random.split(key)
    gain = 1.414
    limit = gain * math.sqrt(6.0 / (cin + cout))            # xavier_uniform
    w = jax.random.uniform(kw, (2, cin, cout), minval=-limit, maxval=limit,
                           dtype=jnp.float32)
    stdv = 1.0 / math.sqrt(cout)
    bias = jax.random.uniform(kb, (1, cout), minval=-stdv, maxval=stdv,
                              dtype=jnp.float32)
    return w, bias


def init_semgcn7_params(key, hid_dim, adj_n_mask, adj_s_mask,
                        coords_dim=(2, 3), num_layers=4):
    """Parameters (f32, batch-independent) mirroring the PyTorch module."""
    nw = 3 * num_layers
    keys = iter(jax.random.split(key, nw + 2))
    params = {}

    w, bias = _init_sem_graph_conv(next(keys), coords_dim[0], hid_dim)
    params["win"] = w                                        # (2, cin, hid)
    params["bin"] = bias
    params["gin"] = jnp.ones((1, hid_dim), jnp.float32)      # BN default init
    params["bein"] = jnp.zeros((1, hid_dim), jnp.float32)

    ws, bs, gs, bes = [], [], [], []
    for _ in range(nw):                                      # [res1,res2,gconv_s]*L
        w, bias = _init_sem_graph_conv(next(keys), hid_dim, hid_dim)
        ws.append(w)
        bs.append(bias)
        gs.append(jnp.ones((1, hid_dim), jnp.float32))
        bes.append(jnp.zeros((1, hid_dim), jnp.float32))
    params["wstk"] = jnp.stack(ws)                           # (3L, 2, hid, hid)
    params["bstk"] = jnp.stack(bs)                           # (3L, 1, hid)
    params["gstk"] = jnp.stack(gs)
    params["bestk"] = jnp.stack(bes)

    w, bias = _init_sem_graph_conv(next(keys), hid_dim, coords_dim[1])
    params["wout"] = w                                       # (2, hid, 3)
    params["bout"] = bias                                    # (1, 3)

    params["adj_n"] = softmax_masked_adj(adj_n_mask)         # (J, J)
    params["adj_s"] = softmax_masked_adj(adj_s_mask)
    return params


# ----------------------------------------------------------------------------
# Pure-JAX reference (mirrors the PyTorch forward).  bf16_matmuls=True applies
# the same bf16 MXU casts as the kernel -> tight validation of kernel logic.
# ----------------------------------------------------------------------------
def semgcn7_reference(x, params, num_layers=4, bf16_matmuls=False):
    hp = jax.lax.Precision.HIGHEST
    b, j, cin = x.shape
    n = b * j
    cout_final = params["wout"].shape[-1]

    def bf(a):
        return a.astype(jnp.bfloat16)

    def operands(adj):
        diag = jnp.tile(jnp.diagonal(adj), b).reshape(n, 1)
        off = adj * (1.0 - jnp.eye(j, dtype=adj.dtype))
        return diag, off

    diag_n, off_n = operands(params["adj_n"])
    diag_s, off_s = operands(params["adj_s"])

    def conv(h, w, bias, diag, off, cast_w):
        if bf16_matmuls and cast_w:
            h0 = jnp.dot(bf(h), bf(w[0]), preferred_element_type=jnp.float32)
            h1 = jnp.dot(bf(h), bf(w[1]), preferred_element_type=jnp.float32)
        else:
            h0 = jnp.dot(h, w[0], precision=hp, preferred_element_type=jnp.float32)
            h1 = jnp.dot(h, w[1], precision=hp, preferred_element_type=jnp.float32)
        co = h1.shape[-1]
        if bf16_matmuls:
            mixed = jnp.einsum("jk,bkc->bjc", bf(off), bf(h1).reshape(b, j, co),
                               preferred_element_type=jnp.float32).reshape(n, co)
        else:
            mixed = jnp.einsum("jk,bkc->bjc", off, h1.reshape(b, j, co),
                               precision=hp,
                               preferred_element_type=jnp.float32).reshape(n, co)
        return diag * h0 + mixed + bias

    def bn_relu(y, gamma, beta):
        mean = jnp.mean(y, axis=0, keepdims=True)
        var = jnp.mean((y - mean) ** 2, axis=0, keepdims=True)
        return jnp.maximum((y - mean) / jnp.sqrt(var + _BN_EPS) * gamma + beta, 0.0)

    h = x.reshape(n, cin).astype(jnp.float32)
    # Input projection stays f32 in the kernel too (Cin=2 VPU MACs).
    h = bn_relu(conv(h, params["win"], params["bin"], diag_n, off_n, cast_w=False),
                params["gin"], params["bein"])
    for blk in range(num_layers):
        base = 3 * blk
        res = h
        for c in range(2):
            idx = base + c
            h = bn_relu(conv(h, params["wstk"][idx], params["bstk"][idx],
                             diag_n, off_n, cast_w=True),
                        params["gstk"][idx], params["bestk"][idx])
        h = res + h
        idx = base + 2
        h = bn_relu(conv(h, params["wstk"][idx], params["bstk"][idx],
                         diag_s, off_s, cast_w=True),
                    params["gstk"][idx], params["bestk"][idx])
    out = conv(h, params["wout"], params["bout"], diag_n, off_n, cast_w=True)
    return out.reshape(b, j, cout_final)


# ----------------------------------------------------------------------------
if __name__ == "__main__":
    B, J, HID = 2, 16, 32
    key = jax.random.PRNGKey(0)
    kx, kp = jax.random.split(key)
    x = jax.random.normal(kx, (B, J, 2), dtype=jnp.float32)

    # Deterministic skeleton-like adjacency masks: chain + self-loops for
    # adj_n, plus a few extra symmetric edges for adj_s.
    adj_n = jnp.eye(J, dtype=jnp.float32)
    for a in range(J - 1):
        adj_n = adj_n.at[a, a + 1].set(1.0).at[a + 1, a].set(1.0)
    adj_s = adj_n
    for a in range(J // 2):
        adj_s = adj_s.at[a, J - 1 - a].set(1.0).at[J - 1 - a, a].set(1.0)

    params = init_semgcn7_params(kp, HID, adj_n, adj_s,
                                 coords_dim=(2, 3), num_layers=4)

    out = semgcn7_forward(x, params, num_layers=4)
    jax.block_until_ready(out)
    assert out.shape == (B, J, 3) and out.dtype == jnp.float32

    # Tight check vs a reference applying the SAME bf16 MXU casts: catches
    # any layout / indexing / adjacency bug in the kernel.
    ref_bf16 = semgcn7_reference(x, params, num_layers=4, bf16_matmuls=True)
    err_bf16 = float(jnp.max(jnp.abs(out - ref_bf16)))
    assert jnp.allclose(out, ref_bf16, rtol=5e-3, atol=5e-3), (
        "bf16-matched reference max abs diff: %f" % err_bf16)

    # Semantic check vs the full-f32 PyTorch-equivalent forward; the looser
    # tolerance is the deliberate bf16-matmul precision budget.
    ref_f32 = semgcn7_reference(x, params, num_layers=4, bf16_matmuls=False)
    err_f32 = float(jnp.max(jnp.abs(out - ref_f32)))
    assert jnp.allclose(out, ref_f32, rtol=5e-2, atol=5e-2), (
        "f32 reference max abs diff: %f" % err_f32)

    print("KERNEL_OK")
</pallas_src>

<mosaic_0001>
module attributes {stable_mosaic.version = 11 : i64} {
  func.func @kernel(%arg0: memref<2x32x1xf32, #tpu.memory_space<vmem>>, %arg1: memref<4x1x32xf32, #tpu.memory_space<vmem>>, %arg2: memref<1x32xf32, #tpu.memory_space<vmem>>, %arg3: memref<1x32xf32, #tpu.memory_space<vmem>>, %arg4: memref<1x32xf32, #tpu.memory_space<vmem>>, %arg5: memref<24x32x32xbf16, #tpu.memory_space<vmem>>, %arg6: memref<12x1x32xf32, #tpu.memory_space<vmem>>, %arg7: memref<12x1x32xf32, #tpu.memory_space<vmem>>, %arg8: memref<12x1x32xf32, #tpu.memory_space<vmem>>, %arg9: memref<2x32x128xbf16, #tpu.memory_space<vmem>>, %arg10: memref<1x128xf32, #tpu.memory_space<vmem>>, %arg11: memref<32x1xf32, #tpu.memory_space<vmem>>, %arg12: memref<32x32xbf16, #tpu.memory_space<vmem>>, %arg13: memref<32x1xf32, #tpu.memory_space<vmem>>, %arg14: memref<32x32xbf16, #tpu.memory_space<vmem>>, %arg15: memref<32x128xf32, #tpu.memory_space<vmem>>) attributes {dimension_semantics = [], scalar_prefetch = 0 : i64, scratch_operands = 0 : i64, tpu.core_type = #tpu.core_type<tc>} {
    %c0 = arith.constant 0 : index
    %c0_0 = arith.constant 0 : index
    %0 = vector.load %arg11[%c0, %c0_0] : memref<32x1xf32, #tpu.memory_space<vmem>>, vector<32x1xf32>
    %c0_1 = arith.constant 0 : index
    %c0_2 = arith.constant 0 : index
    %1 = vector.load %arg12[%c0_1, %c0_2] : memref<32x32xbf16, #tpu.memory_space<vmem>>, vector<32x32xbf16>
    %c0_3 = arith.constant 0 : index
    %c0_4 = arith.constant 0 : index
    %2 = vector.load %arg13[%c0_3, %c0_4] : memref<32x1xf32, #tpu.memory_space<vmem>>, vector<32x1xf32>
    %c0_5 = arith.constant 0 : index
    %c0_6 = arith.constant 0 : index
    %3 = vector.load %arg14[%c0_5, %c0_6] : memref<32x32xbf16, #tpu.memory_space<vmem>>, vector<32x32xbf16>
    %c0_7 = arith.constant 0 : index
    %c0_8 = arith.constant 0 : index
    %c0_9 = arith.constant 0 : index
    %4 = vector.load %arg0[%c0_7, %c0_8, %c0_9] : memref<2x32x1xf32, #tpu.memory_space<vmem>>, vector<1x32x1xf32>
    %5 = vector.shape_cast %4 : vector<1x32x1xf32> to vector<32x1xf32>
    %c0_10 = arith.constant 0 : index
    %c0_11 = arith.constant 0 : index
    %c0_12 = arith.constant 0 : index
    %6 = vector.load %arg1[%c0_10, %c0_11, %c0_12] : memref<4x1x32xf32, #tpu.memory_space<vmem>>, vector<1x1x32xf32>
    %7 = vector.shape_cast %6 : vector<1x1x32xf32> to vector<1x32xf32>
    %8 = vector.broadcast %5 : vector<32x1xf32> to vector<32x32xf32>
    %9 = vector.broadcast %7 : vector<1x32xf32> to vector<32x32xf32>
    %10 = arith.mulf %8, %9 : vector<32x32xf32>
    %c1 = arith.constant 1 : index
    %c0_13 = arith.constant 0 : index
    %c0_14 = arith.constant 0 : index
    %11 = vector.load %arg0[%c1, %c0_13, %c0_14] : memref<2x32x1xf32, #tpu.memory_space<vmem>>, vector<1x32x1xf32>
    %12 = vector.shape_cast %11 : vector<1x32x1xf32> to vector<32x1xf32>
    %c1_15 = arith.constant 1 : index
    %c0_16 = arith.constant 0 : index
    %c0_17 = arith.constant 0 : index
    %13 = vector.load %arg1[%c1_15, %c0_16, %c0_17] : memref<4x1x32xf32, #tpu.memory_space<vmem>>, vector<1x1x32xf32>
    %14 = vector.shape_cast %13 : vector<1x1x32xf32> to vector<1x32xf32>
    %15 = vector.broadcast %12 : vector<32x1xf32> to vector<32x32xf32>
    %16 = vector.broadcast %14 : vector<1x32xf32> to vector<32x32xf32>
    %17 = arith.mulf %15, %16 : vector<32x32xf32>
    %18 = arith.addf %10, %17 : vector<32x32xf32>
    %c0_18 = arith.constant 0 : index
    %c0_19 = arith.constant 0 : index
    %c0_20 = arith.constant 0 : index
    %19 = vector.load %arg0[%c0_18, %c0_19, %c0_20] : memref<2x32x1xf32, #tpu.memory_space<vmem>>, vector<1x32x1xf32>
    %20 = vector.shape_cast %19 : vector<1x32x1xf32> to vector<32x1xf32>
    %c2 = arith.constant 2 : index
    %c0_21 = arith.constant 0 : index
    %c0_22 = arith.constant 0 : index
    %21 = vector.load %arg1[%c2, %c0_21, %c0_22] : memref<4x1x32xf32, #tpu.memory_space<vmem>>, vector<1x1x32xf32>
    %22 = vector.shape_cast %21 : vector<1x1x32xf32> to vector<1x32xf32>
    %23 = vector.broadcast %20 : vector<32x1xf32> to vector<32x32xf32>
    %24 = vector.broadcast %22 : vector<1x32xf32> to vector<32x32xf32>
    %25 = arith.mulf %23, %24 : vector<32x32xf32>
    %c1_23 = arith.constant 1 : index
    %c0_24 = arith.constant 0 : index
    %c0_25 = arith.constant 0 : index
    %26 = vector.load %arg0[%c1_23, %c0_24, %c0_25] : memref<2x32x1xf32, #tpu.memory_space<vmem>>, vector<1x32x1xf32>
    %27 = vector.shape_cast %26 : vector<1x32x1xf32> to vector<32x1xf32>
    %c3 = arith.constant 3 : index
    %c0_26 = arith.constant 0 : index
    %c0_27 = arith.constant 0 : index
    %28 = vector.load %arg1[%c3, %c0_26, %c0_27] : memref<4x1x32xf32, #tpu.memory_space<vmem>>, vector<1x1x32xf32>
    %29 = vector.shape_cast %28 : vector<1x1x32xf32> to vector<1x32xf32>
    %30 = vector.broadcast %27 : vector<32x1xf32> to vector<32x32xf32>
    %31 = vector.broadcast %29 : vector<1x32xf32> to vector<32x32xf32>
    %32 = arith.mulf %30, %31 : vector<32x32xf32>
    %33 = arith.addf %25, %32 : vector<32x32xf32>
    %c0_28 = arith.constant 0 : index
    %c0_29 = arith.constant 0 : index
    %34 = vector.load %arg2[%c0_28, %c0_29] : memref<1x32xf32, #tpu.memory_space<vmem>>, vector<1x32xf32>
    %35 = arith.truncf %33 : vector<32x32xf32> to vector<32x32xbf16>
    %cst = arith.constant dense<0.000000e+00> : vector<32x32xf32>
    %36 = tpu.matmul %1, %35, %cst {dimension_numbers = #tpu.dot_dimension_numbers<[1], [0], [0], [1], [0, 0, 1, 1], [], []>} : vector<32x32xbf16>, vector<32x32xbf16>, vector<32x32xf32> -> vector<32x32xf32>
    %37 = vector.broadcast %0 : vector<32x1xf32> to vector<32x32xf32>
    %38 = arith.mulf %37, %18 : vector<32x32xf32>
    %39 = arith.addf %38, %36 : vector<32x32xf32>
    %40 = vector.broadcast %34 : vector<1x32xf32> to vector<32x32xf32>
    %41 = arith.addf %39, %40 : vector<32x32xf32>
    %c0_30 = arith.constant 0 : index
    %c0_31 = arith.constant 0 : index
    %42 = vector.load %arg3[%c0_30, %c0_31] : memref<1x32xf32, #tpu.memory_space<vmem>>, vector<1x32xf32>
    %c0_32 = arith.constant 0 : index
    %c0_33 = arith.constant 0 : index
    %43 = vector.load %arg4[%c0_32, %c0_33] : memref<1x32xf32, #tpu.memory_space<vmem>>, vector<1x32xf32>
    %44 = arith.mulf %41, %41 : vector<32x32xf32>
    %45 = tpu.concatenate %41, %44 in 1 : vector<32x32xf32>, vector<32x32xf32> -> vector<32x64xf32>
    %cst_34 = arith.constant dense<0.000000e+00> : vector<64xf32>
    %46 = vector.multi_reduction <add>, %45, %cst_34 [0] : vector<32x64xf32> to vector<64xf32>
    %47 = vector.shape_cast %46 : vector<64xf32> to vector<1x64xf32>
    %cst_35 = arith.constant 3.125000e-02 : f32
    %48 = vector.broadcast %cst_35 : f32 to vector<1x64xf32>
    %49 = arith.mulf %47, %48 : vector<1x64xf32>
    %50 = vector.extract_strided_slice %49 {offsets = [0, 0], sizes = [1, 32], strides = [1, 1]} : vector<1x64xf32> to vector<1x32xf32>
    %51 = vector.extract_strided_slice %49 {offsets = [0, 32], sizes = [1, 32], strides = [1, 1]} : vector<1x64xf32> to vector<1x32xf32>
    %52 = arith.mulf %50, %50 : vector<1x32xf32>
    %53 = arith.subf %51, %52 : vector<1x32xf32>
    %54 = vector.broadcast %50 : vector<1x32xf32> to vector<32x32xf32>
    %55 = arith.subf %41, %54 : vector<32x32xf32>
    %cst_36 = arith.constant 9.99999974E-6 : f32
    %56 = vector.broadcast %cst_36 : f32 to vector<1x32xf32>
    %57 = arith.addf %53, %56 : vector<1x32xf32>
    %58 = math.rsqrt %57 : vector<1x32xf32>
    %59 = vector.broadcast %58 : vector<1x32xf32> to vector<32x32xf32>
    %60 = arith.mulf %55, %59 : vector<32x32xf32>
    %61 = vector.broadcast %42 : vector<1x32xf32> to vector<32x32xf32>
    %62 = arith.mulf %60, %61 : vector<32x32xf32>
    %63 = vector.broadcast %43 : vector<1x32xf32> to vector<32x32xf32>
    %64 = arith.addf %62, %63 : vector<32x32xf32>
    %cst_37 = arith.constant 0.000000e+00 : f32
    %65 = vector.broadcast %cst_37 : f32 to vector<32x32xf32>
    %66 = arith.maximumf %64, %65 : vector<32x32xf32>
    %c0_38 = arith.constant 0 : index
    %c0_39 = arith.constant 0 : index
    %c0_40 = arith.constant 0 : index
    %67 = vector.load %arg5[%c0_38, %c0_39, %c0_40] : memref<24x32x32xbf16, #tpu.memory_space<vmem>>, vector<1x32x32xbf16>
    %68 = vector.shape_cast %67 : vector<1x32x32xbf16> to vector<32x32xbf16>
    %c1_41 = arith.constant 1 : index
    %c0_42 = arith.constant 0 : index
    %c0_43 = arith.constant 0 : index
    %69 = vector.load %arg5[%c1_41, %c0_42, %c0_43] : memref<24x32x32xbf16, #tpu.memory_space<vmem>>, vector<1x32x32xbf16>
    %70 = vector.shape_cast %69 : vector<1x32x32xbf16> to vector<32x32xbf16>
    %c0_44 = arith.constant 0 : index
    %c0_45 = arith.constant 0 : index
    %c0_46 = arith.constant 0 : index
    %71 = vector.load %arg6[%c0_44, %c0_45, %c0_46] : memref<12x1x32xf32, #tpu.memory_space<vmem>>, vector<1x1x32xf32>
    %72 = vector.shape_cast %71 : vector<1x1x32xf32> to vector<1x32xf32>
    %73 = arith.truncf %66 : vector<32x32xf32> to vector<32x32xbf16>
    %cst_47 = arith.constant dense<0.000000e+00> : vector<32x32xf32>
    %74 = tpu.matmul %73, %68, %cst_47 {dimension_numbers = #tpu.dot_dimension_numbers<[1], [0], [0], [1], [0, 0, 1, 1], [], []>} : vector<32x32xbf16>, vector<32x32xbf16>, vector<32x32xf32> -> vector<32x32xf32>
    %cst_48 = arith.constant dense<0.000000e+00> : vector<32x32xf32>
    %75 = tpu.matmul %73, %70, %cst_48 {dimension_numbers = #tpu.dot_dimension_numbers<[1], [0], [0], [1], [0, 0, 1, 1], [], []>} : vector<32x32xbf16>, vector<32x32xbf16>, vector<32x32xf32> -> vector<32x32xf32>
    %76 = arith.truncf %75 : vector<32x32xf32> to vector<32x32xbf16>
    %cst_49 = arith.constant dense<0.000000e+00> : vector<32x32xf32>
    %77 = tpu.matmul %1, %76, %cst_49 {dimension_numbers = #tpu.dot_dimension_numbers<[1], [0], [0], [1], [0, 0, 1, 1], [], []>} : vector<32x32xbf16>, vector<32x32xbf16>, vector<32x32xf32> -> vector<32x32xf32>
    %78 = vector.broadcast %0 : vector<32x1xf32> to vector<32x32xf32>
    %79 = arith.mulf %78, %74 : vector<32x32xf32>
    %80 = arith.addf %79, %77 : vector<32x32xf32>
    %81 = vector.broadcast %72 : vector<1x32xf32> to vector<32x32xf32>
    %82 = arith.addf %80, %81 : vector<32x32xf32>
    %c0_50 = arith.constant 0 : index
    %c0_51 = arith.constant 0 : index
    %c0_52 = arith.constant 0 : index
    %83 = vector.load %arg7[%c0_50, %c0_51, %c0_52] : memref<12x1x32xf32, #tpu.memory_space<vmem>>, vector<1x1x32xf32>
    %84 = vector.shape_cast %83 : vector<1x1x32xf32> to vector<1x32xf32>
    %c0_53 = arith.constant 0 : index
    %c0_54 = arith.constant 0 : index
    %c0_55 = arith.constant 0 : index
    %85 = vector.load %arg8[%c0_53, %c0_54, %c0_55] : memref<12x1x32xf32, #tpu.memory_space<vmem>>, vector<1x1x32xf32>
    %86 = vector.shape_cast %85 : vector<1x1x32xf32> to vector<1x32xf32>
    %87 = arith.mulf %82, %82 : vector<32x32xf32>
    %88 = tpu.concatenate %82, %87 in 1 : vector<32x32xf32>, vector<32x32xf32> -> vector<32x64xf32>
    %cst_56 = arith.constant dense<0.000000e+00> : vector<64xf32>
    %89 = vector.multi_reduction <add>, %88, %cst_56 [0] : vector<32x64xf32> to vector<64xf32>
    %90 = vector.shape_cast %89 : vector<64xf32> to vector<1x64xf32>
    %cst_57 = arith.constant 3.125000e-02 : f32
    %91 = vector.broadcast %cst_57 : f32 to vector<1x64xf32>
    %92 = arith.mulf %90, %91 : vector<1x64xf32>
    %93 = vector.extract_strided_slice %92 {offsets = [0, 0], sizes = [1, 32], strides = [1, 1]} : vector<1x64xf32> to vector<1x32xf32>
    %94 = vector.extract_strided_slice %92 {offsets = [0, 32], sizes = [1, 32], strides = [1, 1]} : vector<1x64xf32> to vector<1x32xf32>
    %95 = arith.mulf %93, %93 : vector<1x32xf32>
    %96 = arith.subf %94, %95 : vector<1x32xf32>
    %97 = vector.broadcast %93 : vector<1x32xf32> to vector<32x32xf32>
    %98 = arith.subf %82, %97 : vector<32x32xf32>
    %cst_58 = arith.constant 9.99999974E-6 : f32
    %99 = vector.broadcast %cst_58 : f32 to vector<1x32xf32>
    %100 = arith.addf %96, %99 : vector<1x32xf32>
    %101 = math.rsqrt %100 : vector<1x32xf32>
    %102 = vector.broadcast %101 : vector<1x32xf32> to vector<32x32xf32>
    %103 = arith.mulf %98, %102 : vector<32x32xf32>
    %104 = vector.broadcast %84 : vector<1x32xf32> to vector<32x32xf32>
    %105 = arith.mulf %103, %104 : vector<32x32xf32>
    %106 = vector.broadcast %86 : vector<1x32xf32> to vector<32x32xf32>
    %107 = arith.addf %105, %106 : vector<32x32xf32>
    %cst_59 = arith.constant 0.000000e+00 : f32
    %108 = vector.broadcast %cst_59 : f32 to vector<32x32xf32>
    %109 = arith.maximumf %107, %108 : vector<32x32xf32>
    %c2_60 = arith.constant 2 : index
    %c0_61 = arith.constant 0 : index
    %c0_62 = arith.constant 0 : index
    %110 = vector.load %arg5[%c2_60, %c0_61, %c0_62] : memref<24x32x32xbf16, #tpu.memory_space<vmem>>, vector<1x32x32xbf16>
    %111 = vector.shape_cast %110 : vector<1x32x32xbf16> to vector<32x32xbf16>
    %c3_63 = arith.constant 3 : index
    %c0_64 = arith.constant 0 : index
    %c0_65 = arith.constant 0 : index
    %112 = vector.load %arg5[%c3_63, %c0_64, %c0_65] : memref<24x32x32xbf16, #tpu.memory_space<vmem>>, vector<1x32x32xbf16>
    %113 = vector.shape_cast %112 : vector<1x32x32xbf16> to vector<32x32xbf16>
    %c1_66 = arith.constant 1 : index
    %c0_67 = arith.constant 0 : index
    %c0_68 = arith.constant 0 : index
    %114 = vector.load %arg6[%c1_66, %c0_67, %c0_68] : memref<12x1x32xf32, #tpu.memory_space<vmem>>, vector<1x1x32xf32>
    %115 = vector.shape_cast %114 : vector<1x1x32xf32> to vector<1x32xf32>
    %116 = arith.truncf %109 : vector<32x32xf32> to vector<32x32xbf16>
    %cst_69 = arith.constant dense<0.000000e+00> : vector<32x32xf32>
    %117 = tpu.matmul %116, %111, %cst_69 {dimension_numbers = #tpu.dot_dimension_numbers<[1], [0], [0], [1], [0, 0, 1, 1], [], []>} : vector<32x32xbf16>, vector<32x32xbf16>, vector<32x32xf32> -> vector<32x32xf32>
    %cst_70 = arith.constant dense<0.000000e+00> : vector<32x32xf32>
    %118 = tpu.matmul %116, %113, %cst_70 {dimension_numbers = #tpu.dot_dimension_numbers<[1], [0], [0], [1], [0, 0, 1, 1], [], []>} : vector<32x32xbf16>, vector<32x32xbf16>, vector<32x32xf32> -> vector<32x32xf32>
    %119 = arith.truncf %118 : vector<32x32xf32> to vector<32x32xbf16>
    %cst_71 = arith.constant dense<0.000000e+00> : vector<32x32xf32>
    %120 = tpu.matmul %1, %119, %cst_71 {dimension_numbers = #tpu.dot_dimension_numbers<[1], [0], [0], [1], [0, 0, 1, 1], [], []>} : vector<32x32xbf16>, vector<32x32xbf16>, vector<32x32xf32> -> vector<32x32xf32>
    %121 = vector.broadcast %0 : vector<32x1xf32> to vector<32x32xf32>
    %122 = arith.mulf %121, %117 : vector<32x32xf32>
    %123 = arith.addf %122, %120 : vector<32x32xf32>
    %124 = vector.broadcast %115 : vector<1x32xf32> to vector<32x32xf32>
    %125 = arith.addf %123, %124 : vector<32x32xf32>
    %c1_72 = arith.constant 1 : index
    %c0_73 = arith.constant 0 : index
    %c0_74 = arith.constant 0 : index
    %126 = vector.load %arg7[%c1_72, %c0_73, %c0_74] : memref<12x1x32xf32, #tpu.memory_space<vmem>>, vector<1x1x32xf32>
    %127 = vector.shape_cast %126 : vector<1x1x32xf32> to vector<1x32xf32>
    %c1_75 = arith.constant 1 : index
    %c0_76 = arith.constant 0 : index
    %c0_77 = arith.constant 0 : index
    %128 = vector.load %arg8[%c1_75, %c0_76, %c0_77] : memref<12x1x32xf32, #tpu.memory_space<vmem>>, vector<1x1x32xf32>
    %129 = vector.shape_cast %128 : vector<1x1x32xf32> to vector<1x32xf32>
    %130 = arith.mulf %125, %125 : vector<32x32xf32>
    %131 = tpu.concatenate %125, %130 in 1 : vector<32x32xf32>, vector<32x32xf32> -> vector<32x64xf32>
    %cst_78 = arith.constant dense<0.000000e+00> : vector<64xf32>
    %132 = vector.multi_reduction <add>, %131, %cst_78 [0] : vector<32x64xf32> to vector<64xf32>
    %133 = vector.shape_cast %132 : vector<64xf32> to vector<1x64xf32>
    %cst_79 = arith.constant 3.125000e-02 : f32
    %134 = vector.broadcast %cst_79 : f32 to vector<1x64xf32>
    %135 = arith.mulf %133, %134 : vector<1x64xf32>
    %136 = vector.extract_strided_slice %135 {offsets = [0, 0], sizes = [1, 32], strides = [1, 1]} : vector<1x64xf32> to vector<1x32xf32>
    %137 = vector.extract_strided_slice %135 {offsets = [0, 32], sizes = [1, 32], strides = [1, 1]} : vector<1x64xf32> to vector<1x32xf32>
    %138 = arith.mulf %136, %136 : vector<1x32xf32>
    %139 = arith.subf %137, %138 : vector<1x32xf32>
    %140 = vector.broadcast %136 : vector<1x32xf32> to vector<32x32xf32>
    %141 = arith.subf %125, %140 : vector<32x32xf32>
    %cst_80 = arith.constant 9.99999974E-6 : f32
    %142 = vector.broadcast %cst_80 : f32 to vector<1x32xf32>
    %143 = arith.addf %139, %142 : vector<1x32xf32>
    %144 = math.rsqrt %143 : vector<1x32xf32>
    %145 = vector.broadcast %144 : vector<1x32xf32> to vector<32x32xf32>
    %146 = arith.mulf %141, %145 : vector<32x32xf32>
    %147 = vector.broadcast %127 : vector<1x32xf32> to vector<32x32xf32>
    %148 = arith.mulf %146, %147 : vector<32x32xf32>
    %149 = vector.broadcast %129 : vector<1x32xf32> to vector<32x32xf32>
    %150 = arith.addf %148, %149 : vector<32x32xf32>
    %cst_81 = arith.constant 0.000000e+00 : f32
    %151 = vector.broadcast %cst_81 : f32 to vector<32x32xf32>
    %152 = arith.maximumf %150, %151 : vector<32x32xf32>
    %153 = arith.addf %66, %152 : vector<32x32xf32>
    %c4 = arith.constant 4 : index
    %c0_82 = arith.constant 0 : index
    %c0_83 = arith.constant 0 : index
    %154 = vector.load %arg5[%c4, %c0_82, %c0_83] : memref<24x32x32xbf16, #tpu.memory_space<vmem>>, vector<1x32x32xbf16>
    %155 = vector.shape_cast %154 : vector<1x32x32xbf16> to vector<32x32xbf16>
    %c5 = arith.constant 5 : index
    %c0_84 = arith.constant 0 : index
    %c0_85 = arith.constant 0 : index
    %156 = vector.load %arg5[%c5, %c0_84, %c0_85] : memref<24x32x32xbf16, #tpu.memory_space<vmem>>, vector<1x32x32xbf16>
    %157 = vector.shape_cast %156 : vector<1x32x32xbf16> to vector<32x32xbf16>
    %c2_86 = arith.constant 2 : index
    %c0_87 = arith.constant 0 : index
    %c0_88 = arith.constant 0 : index
    %158 = vector.load %arg6[%c2_86, %c0_87, %c0_88] : memref<12x1x32xf32, #tpu.memory_space<vmem>>, vector<1x1x32xf32>
    %159 = vector.shape_cast %158 : vector<1x1x32xf32> to vector<1x32xf32>
    %160 = arith.truncf %153 : vector<32x32xf32> to vector<32x32xbf16>
    %cst_89 = arith.constant dense<0.000000e+00> : vector<32x32xf32>
    %161 = tpu.matmul %160, %155, %cst_89 {dimension_numbers = #tpu.dot_dimension_numbers<[1], [0], [0], [1], [0, 0, 1, 1], [], []>} : vector<32x32xbf16>, vector<32x32xbf16>, vector<32x32xf32> -> vector<32x32xf32>
    %cst_90 = arith.constant dense<0.000000e+00> : vector<32x32xf32>
    %162 = tpu.matmul %160, %157, %cst_90 {dimension_numbers = #tpu.dot_dimension_numbers<[1], [0], [0], [1], [0, 0, 1, 1], [], []>} : vector<32x32xbf16>, vector<32x32xbf16>, vector<32x32xf32> -> vector<32x32xf32>
    %163 = arith.truncf %162 : vector<32x32xf32> to vector<32x32xbf16>
    %cst_91 = arith.constant dense<0.000000e+00> : vector<32x32xf32>
    %164 = tpu.matmul %3, %163, %cst_91 {dimension_numbers = #tpu.dot_dimension_numbers<[1], [0], [0], [1], [0, 0, 1, 1], [], []>} : vector<32x32xbf16>, vector<32x32xbf16>, vector<32x32xf32> -> vector<32x32xf32>
    %165 = vector.broadcast %2 : vector<32x1xf32> to vector<32x32xf32>
    %166 = arith.mulf %165, %161 : vector<32x32xf32>
    %167 = arith.addf %166, %164 : vector<32x32xf32>
    %168 = vector.broadcast %159 : vector<1x32xf32> to vector<32x32xf32>
    %169 = arith.addf %167, %168 : vector<32x32xf32>
    %c2_92 = arith.constant 2 : index
    %c0_93 = arith.constant 0 : index
    %c0_94 = arith.constant 0 : index
    %170 = vector.load %arg7[%c2_92, %c0_93, %c0_94] : memref<12x1x32xf32, #tpu.memory_space<vmem>>, vector<1x1x32xf32>
    %171 = vector.shape_cast %170 : vector<1x1x32xf32> to vector<1x32xf32>
    %c2_95 = arith.constant 2 : index
    %c0_96 = arith.constant 0 : index
    %c0_97 = arith.constant 0 : index
    %172 = vector.load %arg8[%c2_95, %c0_96, %c0_97] : memref<12x1x32xf32, #tpu.memory_space<vmem>>, vector<1x1x32xf32>
    %173 = vector.shape_cast %172 : vector<1x1x32xf32> to vector<1x32xf32>
    %174 = arith.mulf %169, %169 : vector<32x32xf32>
    %175 = tpu.concatenate %169, %174 in 1 : vector<32x32xf32>, vector<32x32xf32> -> vector<32x64xf32>
    %cst_98 = arith.constant dense<0.000000e+00> : vector<64xf32>
    %176 = vector.multi_reduction <add>, %175, %cst_98 [0] : vector<32x64xf32> to vector<64xf32>
    %177 = vector.shape_cast %176 : vector<64xf32> to vector<1x64xf32>
    %cst_99 = arith.constant 3.125000e-02 : f32
    %178 = vector.broadcast %cst_99 : f32 to vector<1x64xf32>
    %179 = arith.mulf %177, %178 : vector<1x64xf32>
    %180 = vector.extract_strided_slice %179 {offsets = [0, 0], sizes = [1, 32], strides = [1, 1]} : vector<1x64xf32> to vector<1x32xf32>
    %181 = vector.extract_strided_slice %179 {offsets = [0, 32], sizes = [1, 32], strides = [1, 1]} : vector<1x64xf32> to vector<1x32xf32>
    %182 = arith.mulf %180, %180 : vector<1x32xf32>
    %183 = arith.subf %181, %182 : vector<1x32xf32>
    %184 = vector.broadcast %180 : vector<1x32xf32> to vector<32x32xf32>
    %185 = arith.subf %169, %184 : vector<32x32xf32>
    %cst_100 = arith.constant 9.99999974E-6 : f32
    %186 = vector.broadcast %cst_100 : f32 to vector<1x32xf32>
    %187 = arith.addf %183, %186 : vector<1x32xf32>
    %188 = math.rsqrt %187 : vector<1x32xf32>
    %189 = vector.broadcast %188 : vector<1x32xf32> to vector<32x32xf32>
    %190 = arith.mulf %185, %189 : vector<32x32xf32>
    %191 = vector.broadcast %171 : vector<1x32xf32> to vector<32x32xf32>
    %192 = arith.mulf %190, %191 : vector<32x32xf32>
    %193 = vector.broadcast %173 : vector<1x32xf32> to vector<32x32xf32>
    %194 = arith.addf %192, %193 : vector<32x32xf32>
    %cst_101 = arith.constant 0.000000e+00 : f32
    %195 = vector.broadcast %cst_101 : f32 to vector<32x32xf32>
    %196 = arith.maximumf %194, %195 : vector<32x32xf32>
    %c6 = arith.constant 6 : index
    %c0_102 = arith.constant 0 : index
    %c0_103 = arith.constant 0 : index
    %197 = vector.load %arg5[%c6, %c0_102, %c0_103] : memref<24x32x32xbf16, #tpu.memory_space<vmem>>, vector<1x32x32xbf16>
    %198 = vector.shape_cast %197 : vector<1x32x32xbf16> to vector<32x32xbf16>
    %c7 = arith.constant 7 : index
    %c0_104 = arith.constant 0 : index
    %c0_105 = arith.constant 0 : index
    %199 = vector.load %arg5[%c7, %c0_104, %c0_105] : memref<24x32x32xbf16, #tpu.memory_space<vmem>>, vector<1x32x32xbf16>
    %200 = vector.shape_cast %199 : vector<1x32x32xbf16> to vector<32x32xbf16>
    %c3_106 = arith.constant 3 : index
    %c0_107 = arith.constant 0 : index
    %c0_108 = arith.constant 0 : index
    %201 = vector.load %arg6[%c3_106, %c0_107, %c0_108] : memref<12x1x32xf32, #tpu.memory_space<vmem>>, vector<1x1x32xf32>
    %202 = vector.shape_cast %201 : vector<1x1x32xf32> to vector<1x32xf32>
    %203 = arith.truncf %196 : vector<32x32xf32> to vector<32x32xbf16>
    %cst_109 = arith.constant dense<0.000000e+00> : vector<32x32xf32>
    %204 = tpu.matmul %203, %198, %cst_109 {dimension_numbers = #tpu.dot_dimension_numbers<[1], [0], [0], [1], [0, 0, 1, 1], [], []>} : vector<32x32xbf16>, vector<32x32xbf16>, vector<32x32xf32> -> vector<32x32xf32>
    %cst_110 = arith.constant dense<0.000000e+00> : vector<32x32xf32>
    %205 = tpu.matmul %203, %200, %cst_110 {dimension_numbers = #tpu.dot_dimension_numbers<[1], [0], [0], [1], [0, 0, 1, 1], [], []>} : vector<32x32xbf16>, vector<32x32xbf16>, vector<32x32xf32> -> vector<32x32xf32>
    %206 = arith.truncf %205 : vector<32x32xf32> to vector<32x32xbf16>
    %cst_111 = arith.constant dense<0.000000e+00> : vector<32x32xf32>
    %207 = tpu.matmul %1, %206, %cst_111 {dimension_numbers = #tpu.dot_dimension_numbers<[1], [0], [0], [1], [0, 0, 1, 1], [], []>} : vector<32x32xbf16>, vector<32x32xbf16>, vector<32x32xf32> -> vector<32x32xf32>
    %208 = vector.broadcast %0 : vector<32x1xf32> to vector<32x32xf32>
    %209 = arith.mulf %208, %204 : vector<32x32xf32>
    %210 = arith.addf %209, %207 : vector<32x32xf32>
    %211 = vector.broadcast %202 : vector<1x32xf32> to vector<32x32xf32>
    %212 = arith.addf %210, %211 : vector<32x32xf32>
    %c3_112 = arith.constant 3 : index
    %c0_113 = arith.constant 0 : index
    %c0_114 = arith.constant 0 : index
    %213 = vector.load %arg7[%c3_112, %c0_113, %c0_114] : memref<12x1x32xf32, #tpu.memory_space<vmem>>, vector<1x1x32xf32>
    %214 = vector.shape_cast %213 : vector<1x1x32xf32> to vector<1x32xf32>
    %c3_115 = arith.constant 3 : index
    %c0_116 = arith.constant 0 : index
    %c0_117 = arith.constant 0 : index
    %215 = vector.load %arg8[%c3_115, %c0_116, %c0_117] : memref<12x1x32xf32, #tpu.memory_space<vmem>>, vector<1x1x32xf32>
    %216 = vector.shape_cast %215 : vector<1x1x32xf32> to vector<1x32xf32>
    %217 = arith.mulf %212, %212 : vector<32x32xf32>
    %218 = tpu.concatenate %212, %217 in 1 : vector<32x32xf32>, vector<32x32xf32> -> vector<32x64xf32>
    %cst_118 = arith.constant dense<0.000000e+00> : vector<64xf32>
    %219 = vector.multi_reduction <add>, %218, %cst_118 [0] : vector<32x64xf32> to vector<64xf32>
    %220 = vector.shape_cast %219 : vector<64xf32> to vector<1x64xf32>
    %cst_119 = arith.constant 3.125000e-02 : f32
    %221 = vector.broadcast %cst_119 : f32 to vector<1x64xf32>
    %222 = arith.mulf %220, %221 : vector<1x64xf32>
    %223 = vector.extract_strided_slice %222 {offsets = [0, 0], sizes = [1, 32], strides = [1, 1]} : vector<1x64xf32> to vector<1x32xf32>
    %224 = vector.extract_strided_slice %222 {offsets = [0, 32], sizes = [1, 32], strides = [1, 1]} : vector<1x64xf32> to vector<1x32xf32>
    %225 = arith.mulf %223, %223 : vector<1x32xf32>
    %226 = arith.subf %224, %225 : vector<1x32xf32>
    %227 = vector.broadcast %223 : vector<1x32xf32> to vector<32x32xf32>
    %228 = arith.subf %212, %227 : vector<32x32xf32>
    %cst_120 = arith.constant 9.99999974E-6 : f32
    %229 = vector.broadcast %cst_120 : f32 to vector<1x32xf32>
    %230 = arith.addf %226, %229 : vector<1x32xf32>
    %231 = math.rsqrt %230 : vector<1x32xf32>
    %232 = vector.broadcast %231 : vector<1x32xf32> to vector<32x32xf32>
    %233 = arith.mulf %228, %232 : vector<32x32xf32>
    %234 = vector.broadcast %214 : vector<1x32xf32> to vector<32x32xf32>
    %235 = arith.mulf %233, %234 : vector<32x32xf32>
    %236 = vector.broadcast %216 : vector<1x32xf32> to vector<32x32xf32>
    %237 = arith.addf %235, %236 : vector<32x32xf32>
    %cst_121 = arith.constant 0.000000e+00 : f32
    %238 = vector.broadcast %cst_121 : f32 to vector<32x32xf32>
    %239 = arith.maximumf %237, %238 : vector<32x32xf32>
    %c8 = arith.constant 8 : index
    %c0_122 = arith.constant 0 : index
    %c0_123 = arith.constant 0 : index
    %240 = vector.load %arg5[%c8, %c0_122, %c0_123] : memref<24x32x32xbf16, #tpu.memory_space<vmem>>, vector<1x32x32xbf16>
    %241 = vector.shape_cast %240 : vector<1x32x32xbf16> to vector<32x32xbf16>
    %c9 = arith.constant 9 : index
    %c0_124 = arith.constant 0 : index
    %c0_125 = arith.constant 0 : index
    %242 = vector.load %arg5[%c9, %c0_124, %c0_125] : memref<24x32x32xbf16, #tpu.memory_space<vmem>>, vector<1x32x32xbf16>
    %243 = vector.shape_cast %242 : vector<1x32x32xbf16> to vector<32x32xbf16>
    %c4_126 = arith.constant 4 : index
    %c0_127 = arith.constant 0 : index
    %c0_128 = arith.constant 0 : index
    %244 = vector.load %arg6[%c4_126, %c0_127, %c0_128] : memref<12x1x32xf32, #tpu.memory_space<vmem>>, vector<1x1x32xf32>
    %245 = vector.shape_cast %244 : vector<1x1x32xf32> to vector<1x32xf32>
    %246 = arith.truncf %239 : vector<32x32xf32> to vector<32x32xbf16>
    %cst_129 = arith.constant dense<0.000000e+00> : vector<32x32xf32>
    %247 = tpu.matmul %246, %241, %cst_129 {dimension_numbers = #tpu.dot_dimension_numbers<[1], [0], [0], [1], [0, 0, 1, 1], [], []>} : vector<32x32xbf16>, vector<32x32xbf16>, vector<32x32xf32> -> vector<32x32xf32>
    %cst_130 = arith.constant dense<0.000000e+00> : vector<32x32xf32>
    %248 = tpu.matmul %246, %243, %cst_130 {dimension_numbers = #tpu.dot_dimension_numbers<[1], [0], [0], [1], [0, 0, 1, 1], [], []>} : vector<32x32xbf16>, vector<32x32xbf16>, vector<32x32xf32> -> vector<32x32xf32>
    %249 = arith.truncf %248 : vector<32x32xf32> to vector<32x32xbf16>
    %cst_131 = arith.constant dense<0.000000e+00> : vector<32x32xf32>
    %250 = tpu.matmul %1, %249, %cst_131 {dimension_numbers = #tpu.dot_dimension_numbers<[1], [0], [0], [1], [0, 0, 1, 1], [], []>} : vector<32x32xbf16>, vector<32x32xbf16>, vector<32x32xf32> -> vector<32x32xf32>
    %251 = vector.broadcast %0 : vector<32x1xf32> to vector<32x32xf32>
    %252 = arith.mulf %251, %247 : vector<32x32xf32>
    %253 = arith.addf %252, %250 : vector<32x32xf32>
    %254 = vector.broadcast %245 : vector<1x32xf32> to vector<32x32xf32>
    %255 = arith.addf %253, %254 : vector<32x32xf32>
    %c4_132 = arith.constant 4 : index
    %c0_133 = arith.constant 0 : index
    %c0_134 = arith.constant 0 : index
    %256 = vector.load %arg7[%c4_132, %c0_133, %c0_134] : memref<12x1x32xf32, #tpu.memory_space<vmem>>, vector<1x1x32xf32>
    %257 = vector.shape_cast %256 : vector<1x1x32xf32> to vector<1x32xf32>
    %c4_135 = arith.constant 4 : index
    %c0_136 = arith.constant 0 : index
    %c0_137 = arith.constant 0 : index
    %258 = vector.load %arg8[%c4_135, %c0_136, %c0_137] : memref<12x1x32xf32, #tpu.memory_space<vmem>>, vector<1x1x32xf32>
    %259 = vector.shape_cast %258 : vector<1x1x32xf32> to vector<1x32xf32>
    %260 = arith.mulf %255, %255 : vector<32x32xf32>
    %261 = tpu.concatenate %255, %260 in 1 : vector<32x32xf32>, vector<32x32xf32> -> vector<32x64xf32>
    %cst_138 = arith.constant dense<0.000000e+00> : vector<64xf32>
    %262 = vector.multi_reduction <add>, %261, %cst_138 [0] : vector<32x64xf32> to vector<64xf32>
    %263 = vector.shape_cast %262 : vector<64xf32> to vector<1x64xf32>
    %cst_139 = arith.constant 3.125000e-02 : f32
    %264 = vector.broadcast %cst_139 : f32 to vector<1x64xf32>
    %265 = arith.mulf %263, %264 : vector<1x64xf32>
    %266 = vector.extract_strided_slice %265 {offsets = [0, 0], sizes = [1, 32], strides = [1, 1]} : vector<1x64xf32> to vector<1x32xf32>
    %267 = vector.extract_strided_slice %265 {offsets = [0, 32], sizes = [1, 32], strides = [1, 1]} : vector<1x64xf32> to vector<1x32xf32>
    %268 = arith.mulf %266, %266 : vector<1x32xf32>
    %269 = arith.subf %267, %268 : vector<1x32xf32>
    %270 = vector.broadcast %266 : vector<1x32xf32> to vector<32x32xf32>
    %271 = arith.subf %255, %270 : vector<32x32xf32>
    %cst_140 = arith.constant 9.99999974E-6 : f32
    %272 = vector.broadcast %cst_140 : f32 to vector<1x32xf32>
    %273 = arith.addf %269, %272 : vector<1x32xf32>
    %274 = math.rsqrt %273 : vector<1x32xf32>
    %275 = vector.broadcast %274 : vector<1x32xf32> to vector<32x32xf32>
    %276 = arith.mulf %271, %275 : vector<32x32xf32>
    %277 = vector.broadcast %257 : vector<1x32xf32> to vector<32x32xf32>
    %278 = arith.mulf %276, %277 : vector<32x32xf32>
    %279 = vector.broadcast %259 : vector<1x32xf32> to vector<32x32xf32>
    %280 = arith.addf %278, %279 : vector<32x32xf32>
    %cst_141 = arith.constant 0.000000e+00 : f32
    %281 = vector.broadcast %cst_141 : f32 to vector<32x32xf32>
    %282 = arith.maximumf %280, %281 : vector<32x32xf32>
    %283 = arith.addf %196, %282 : vector<32x32xf32>
    %c10 = arith.constant 10 : index
    %c0_142 = arith.constant 0 : index
    %c0_143 = arith.constant 0 : index
    %284 = vector.load %arg5[%c10, %c0_142, %c0_143] : memref<24x32x32xbf16, #tpu.memory_space<vmem>>, vector<1x32x32xbf16>
    %285 = vector.shape_cast %284 : vector<1x32x32xbf16> to vector<32x32xbf16>
    %c11 = arith.constant 11 : index
    %c0_144 = arith.constant 0 : index
    %c0_145 = arith.constant 0 : index
    %286 = vector.load %arg5[%c11, %c0_144, %c0_145] : memref<24x32x32xbf16, #tpu.memory_space<vmem>>, vector<1x32x32xbf16>
    %287 = vector.shape_cast %286 : vector<1x32x32xbf16> to vector<32x32xbf16>
    %c5_146 = arith.constant 5 : index
    %c0_147 = arith.constant 0 : index
    %c0_148 = arith.constant 0 : index
    %288 = vector.load %arg6[%c5_146, %c0_147, %c0_148] : memref<12x1x32xf32, #tpu.memory_space<vmem>>, vector<1x1x32xf32>
    %289 = vector.shape_cast %288 : vector<1x1x32xf32> to vector<1x32xf32>
    %290 = arith.truncf %283 : vector<32x32xf32> to vector<32x32xbf16>
    %cst_149 = arith.constant dense<0.000000e+00> : vector<32x32xf32>
    %291 = tpu.matmul %290, %285, %cst_149 {dimension_numbers = #tpu.dot_dimension_numbers<[1], [0], [0], [1], [0, 0, 1, 1], [], []>} : vector<32x32xbf16>, vector<32x32xbf16>, vector<32x32xf32> -> vector<32x32xf32>
    %cst_150 = arith.constant dense<0.000000e+00> : vector<32x32xf32>
    %292 = tpu.matmul %290, %287, %cst_150 {dimension_numbers = #tpu.dot_dimension_numbers<[1], [0], [0], [1], [0, 0, 1, 1], [], []>} : vector<32x32xbf16>, vector<32x32xbf16>, vector<32x32xf32> -> vector<32x32xf32>
    %293 = arith.truncf %292 : vector<32x32xf32> to vector<32x32xbf16>
    %cst_151 = arith.constant dense<0.000000e+00> : vector<32x32xf32>
    %294 = tpu.matmul %3, %293, %cst_151 {dimension_numbers = #tpu.dot_dimension_numbers<[1], [0], [0], [1], [0, 0, 1, 1], [], []>} : vector<32x32xbf16>, vector<32x32xbf16>, vector<32x32xf32> -> vector<32x32xf32>
    %295 = vector.broadcast %2 : vector<32x1xf32> to vector<32x32xf32>
    %296 = arith.mulf %295, %291 : vector<32x32xf32>
    %297 = arith.addf %296, %294 : vector<32x32xf32>
    %298 = vector.broadcast %289 : vector<1x32xf32> to vector<32x32xf32>
    %299 = arith.addf %297, %298 : vector<32x32xf32>
    %c5_152 = arith.constant 5 : index
    %c0_153 = arith.constant 0 : index
    %c0_154 = arith.constant 0 : index
    %300 = vector.load %arg7[%c5_152, %c0_153, %c0_154] : memref<12x1x32xf32, #tpu.memory_space<vmem>>, vector<1x1x32xf32>
    %301 = vector.shape_cast %300 : vector<1x1x32xf32> to vector<1x32xf32>
    %c5_155 = arith.constant 5 : index
    %c0_156 = arith.constant 0 : index
    %c0_157 = arith.constant 0 : index
    %302 = vector.load %arg8[%c5_155, %c0_156, %c0_157] : memref<12x1x32xf32, #tpu.memory_space<vmem>>, vector<1x1x32xf32>
    %303 = vector.shape_cast %302 : vector<1x1x32xf32> to vector<1x32xf32>
    %304 = arith.mulf %299, %299 : vector<32x32xf32>
    %305 = tpu.concatenate %299, %304 in 1 : vector<32x32xf32>, vector<32x32xf32> -> vector<32x64xf32>
    %cst_158 = arith.constant dense<0.000000e+00> : vector<64xf32>
    %306 = vector.multi_reduction <add>, %305, %cst_158 [0] : vector<32x64xf32> to vector<64xf32>
    %307 = vector.shape_cast %306 : vector<64xf32> to vector<1x64xf32>
    %cst_159 = arith.constant 3.125000e-02 : f32
    %308 = vector.broadcast %cst_159 : f32 to vector<1x64xf32>
    %309 = arith.mulf %307, %308 : vector<1x64xf32>
    %310 = vector.extract_strided_slice %309 {offsets = [0, 0], sizes = [1, 32], strides = [1, 1]} : vector<1x64xf32> to vector<1x32xf32>
    %311 = vector.extract_strided_slice %309 {offsets = [0, 32], sizes = [1, 32], strides = [1, 1]} : vector<1x64xf32> to vector<1x32xf32>
    %312 = arith.mulf %310, %310 : vector<1x32xf32>
    %313 = arith.subf %311, %312 : vector<1x32xf32>
    %314 = vector.broadcast %310 : vector<1x32xf32> to vector<32x32xf32>
    %315 = arith.subf %299, %314 : vector<32x32xf32>
    %cst_160 = arith.constant 9.99999974E-6 : f32
    %316 = vector.broadcast %cst_160 : f32 to vector<1x32xf32>
    %317 = arith.addf %313, %316 : vector<1x32xf32>
    %318 = math.rsqrt %317 : vector<1x32xf32>
    %319 = vector.broadcast %318 : vector<1x32xf32> to vector<32x32xf32>
    %320 = arith.mulf %315, %319 : vector<32x32xf32>
    %321 = vector.broadcast %301 : vector<1x32xf32> to vector<32x32xf32>
    %322 = arith.mulf %320, %321 : vector<32x32xf32>
    %323 = vector.broadcast %303 : vector<1x32xf32> to vector<32x32xf32>
    %324 = arith.addf %322, %323 : vector<32x32xf32>
    %cst_161 = arith.constant 0.000000e+00 : f32
    %325 = vector.broadcast %cst_161 : f32 to vector<32x32xf32>
    %326 = arith.maximumf %324, %325 : vector<32x32xf32>
    %c12 = arith.constant 12 : index
    %c0_162 = arith.constant 0 : index
    %c0_163 = arith.constant 0 : index
    %327 = vector.load %arg5[%c12, %c0_162, %c0_163] : memref<24x32x32xbf16, #tpu.memory_space<vmem>>, vector<1x32x32xbf16>
    %328 = vector.shape_cast %327 : vector<1x32x32xbf16> to vector<32x32xbf16>
    %c13 = arith.constant 13 : index
    %c0_164 = arith.constant 0 : index
    %c0_165 = arith.constant 0 : index
    %329 = vector.load %arg5[%c13, %c0_164, %c0_165] : memref<24x32x32xbf16, #tpu.memory_space<vmem>>, vector<1x32x32xbf16>
    %330 = vector.shape_cast %329 : vector<1x32x32xbf16> to vector<32x32xbf16>
    %c6_166 = arith.constant 6 : index
    %c0_167 = arith.constant 0 : index
    %c0_168 = arith.constant 0 : index
    %331 = vector.load %arg6[%c6_166, %c0_167, %c0_168] : memref<12x1x32xf32, #tpu.memory_space<vmem>>, vector<1x1x32xf32>
    %332 = vector.shape_cast %331 : vector<1x1x32xf32> to vector<1x32xf32>
    %333 = arith.truncf %326 : vector<32x32xf32> to vector<32x32xbf16>
    %cst_169 = arith.constant dense<0.000000e+00> : vector<32x32xf32>
    %334 = tpu.matmul %333, %328, %cst_169 {dimension_numbers = #tpu.dot_dimension_numbers<[1], [0], [0], [1], [0, 0, 1, 1], [], []>} : vector<32x32xbf16>, vector<32x32xbf16>, vector<32x32xf32> -> vector<32x32xf32>
    %cst_170 = arith.constant dense<0.000000e+00> : vector<32x32xf32>
    %335 = tpu.matmul %333, %330, %cst_170 {dimension_numbers = #tpu.dot_dimension_numbers<[1], [0], [0], [1], [0, 0, 1, 1], [], []>} : vector<32x32xbf16>, vector<32x32xbf16>, vector<32x32xf32> -> vector<32x32xf32>
    %336 = arith.truncf %335 : vector<32x32xf32> to vector<32x32xbf16>
    %cst_171 = arith.constant dense<0.000000e+00> : vector<32x32xf32>
    %337 = tpu.matmul %1, %336, %cst_171 {dimension_numbers = #tpu.dot_dimension_numbers<[1], [0], [0], [1], [0, 0, 1, 1], [], []>} : vector<32x32xbf16>, vector<32x32xbf16>, vector<32x32xf32> -> vector<32x32xf32>
    %338 = vector.broadcast %0 : vector<32x1xf32> to vector<32x32xf32>
    %339 = arith.mulf %338, %334 : vector<32x32xf32>
    %340 = arith.addf %339, %337 : vector<32x32xf32>
    %341 = vector.broadcast %332 : vector<1x32xf32> to vector<32x32xf32>
    %342 = arith.addf %340, %341 : vector<32x32xf32>
    %c6_172 = arith.constant 6 : index
    %c0_173 = arith.constant 0 : index
    %c0_174 = arith.constant 0 : index
    %343 = vector.load %arg7[%c6_172, %c0_173, %c0_174] : memref<12x1x32xf32, #tpu.memory_space<vmem>>, vector<1x1x32xf32>
    %344 = vector.shape_cast %343 : vector<1x1x32xf32> to vector<1x32xf32>
    %c6_175 = arith.constant 6 : index
    %c0_176 = arith.constant 0 : index
    %c0_177 = arith.constant 0 : index
    %345 = vector.load %arg8[%c6_175, %c0_176, %c0_177] : memref<12x1x32xf32, #tpu.memory_space<vmem>>, vector<1x1x32xf32>
    %346 = vector.shape_cast %345 : vector<1x1x32xf32> to vector<1x32xf32>
    %347 = arith.mulf %342, %342 : vector<32x32xf32>
    %348 = tpu.concatenate %342, %347 in 1 : vector<32x32xf32>, vector<32x32xf32> -> vector<32x64xf32>
    %cst_178 = arith.constant dense<0.000000e+00> : vector<64xf32>
    %349 = vector.multi_reduction <add>, %348, %cst_178 [0] : vector<32x64xf32> to vector<64xf32>
    %350 = vector.shape_cast %349 : vector<64xf32> to vector<1x64xf32>
    %cst_179 = arith.constant 3.125000e-02 : f32
    %351 = vector.broadcast %cst_179 : f32 to vector<1x64xf32>
    %352 = arith.mulf %350, %351 : vector<1x64xf32>
    %353 = vector.extract_strided_slice %352 {offsets = [0, 0], sizes = [1, 32], strides = [1, 1]} : vector<1x64xf32> to vector<1x32xf32>
    %354 = vector.extract_strided_slice %352 {offsets = [0, 32], sizes = [1, 32], strides = [1, 1]} : vector<1x64xf32> to vector<1x32xf32>
    %355 = arith.mulf %353, %353 : vector<1x32xf32>
    %356 = arith.subf %354, %355 : vector<1x32xf32>
    %357 = vector.broadcast %353 : vector<1x32xf32> to vector<32x32xf32>
    %358 = arith.subf %342, %357 : vector<32x32xf32>
    %cst_180 = arith.constant 9.99999974E-6 : f32
    %359 = vector.broadcast %cst_180 : f32 to vector<1x32xf32>
    %360 = arith.addf %356, %359 : vector<1x32xf32>
    %361 = math.rsqrt %360 : vector<1x32xf32>
    %362 = vector.broadcast %361 : vector<1x32xf32> to vector<32x32xf32>
    %363 = arith.mulf %358, %362 : vector<32x32xf32>
    %364 = vector.broadcast %344 : vector<1x32xf32> to vector<32x32xf32>
    %365 = arith.mulf %363, %364 : vector<32x32xf32>
    %366 = vector.broadcast %346 : vector<1x32xf32> to vector<32x32xf32>
    %367 = arith.addf %365, %366 : vector<32x32xf32>
    %cst_181 = arith.constant 0.000000e+00 : f32
    %368 = vector.broadcast %cst_181 : f32 to vector<32x32xf32>
    %369 = arith.maximumf %367, %368 : vector<32x32xf32>
    %c14 = arith.constant 14 : index
    %c0_182 = arith.constant 0 : index
    %c0_183 = arith.constant 0 : index
    %370 = vector.load %arg5[%c14, %c0_182, %c0_183] : memref<24x32x32xbf16, #tpu.memory_space<vmem>>, vector<1x32x32xbf16>
    %371 = vector.shape_cast %370 : vector<1x32x32xbf16> to vector<32x32xbf16>
    %c15 = arith.constant 15 : index
    %c0_184 = arith.constant 0 : index
    %c0_185 = arith.constant 0 : index
    %372 = vector.load %arg5[%c15, %c0_184, %c0_185] : memref<24x32x32xbf16, #tpu.memory_space<vmem>>, vector<1x32x32xbf16>
    %373 = vector.shape_cast %372 : vector<1x32x32xbf16> to vector<32x32xbf16>
    %c7_186 = arith.constant 7 : index
    %c0_187 = arith.constant 0 : index
    %c0_188 = arith.constant 0 : index
    %374 = vector.load %arg6[%c7_186, %c0_187, %c0_188] : memref<12x1x32xf32, #tpu.memory_space<vmem>>, vector<1x1x32xf32>
    %375 = vector.shape_cast %374 : vector<1x1x32xf32> to vector<1x32xf32>
    %376 = arith.truncf %369 : vector<32x32xf32> to vector<32x32xbf16>
    %cst_189 = arith.constant dense<0.000000e+00> : vector<32x32xf32>
    %377 = tpu.matmul %376, %371, %cst_189 {dimension_numbers = #tpu.dot_dimension_numbers<[1], [0], [0], [1], [0, 0, 1, 1], [], []>} : vector<32x32xbf16>, vector<32x32xbf16>, vector<32x32xf32> -> vector<32x32xf32>
    %cst_190 = arith.constant dense<0.000000e+00> : vector<32x32xf32>
    %378 = tpu.matmul %376, %373, %cst_190 {dimension_numbers = #tpu.dot_dimension_numbers<[1], [0], [0], [1], [0, 0, 1, 1], [], []>} : vector<32x32xbf16>, vector<32x32xbf16>, vector<32x32xf32> -> vector<32x32xf32>
    %379 = arith.truncf %378 : vector<32x32xf32> to vector<32x32xbf16>
    %cst_191 = arith.constant dense<0.000000e+00> : vector<32x32xf32>
    %380 = tpu.matmul %1, %379, %cst_191 {dimension_numbers = #tpu.dot_dimension_numbers<[1], [0], [0], [1], [0, 0, 1, 1], [], []>} : vector<32x32xbf16>, vector<32x32xbf16>, vector<32x32xf32> -> vector<32x32xf32>
    %381 = vector.broadcast %0 : vector<32x1xf32> to vector<32x32xf32>
    %382 = arith.mulf %381, %377 : vector<32x32xf32>
    %383 = arith.addf %382, %380 : vector<32x32xf32>
    %384 = vector.broadcast %375 : vector<1x32xf32> to vector<32x32xf32>
    %385 = arith.addf %383, %384 : vector<32x32xf32>
    %c7_192 = arith.constant 7 : index
    %c0_193 = arith.constant 0 : index
    %c0_194 = arith.constant 0 : index
    %386 = vector.load %arg7[%c7_192, %c0_193, %c0_194] : memref<12x1x32xf32, #tpu.memory_space<vmem>>, vector<1x1x32xf32>
    %387 = vector.shape_cast %386 : vector<1x1x32xf32> to vector<1x32xf32>
    %c7_195 = arith.constant 7 : index
    %c0_196 = arith.constant 0 : index
    %c0_197 = arith.constant 0 : index
    %388 = vector.load %arg8[%c7_195, %c0_196, %c0_197] : memref<12x1x32xf32, #tpu.memory_space<vmem>>, vector<1x1x32xf32>
    %389 = vector.shape_cast %388 : vector<1x1x32xf32> to vector<1x32xf32>
    %390 = arith.mulf %385, %385 : vector<32x32xf32>
    %391 = tpu.concatenate %385, %390 in 1 : vector<32x32xf32>, vector<32x32xf32> -> vector<32x64xf32>
    %cst_198 = arith.constant dense<0.000000e+00> : vector<64xf32>
    %392 = vector.multi_reduction <add>, %391, %cst_198 [0] : vector<32x64xf32> to vector<64xf32>
    %393 = vector.shape_cast %392 : vector<64xf32> to vector<1x64xf32>
    %cst_199 = arith.constant 3.125000e-02 : f32
    %394 = vector.broadcast %cst_199 : f32 to vector<1x64xf32>
    %395 = arith.mulf %393, %394 : vector<1x64xf32>
    %396 = vector.extract_strided_slice %395 {offsets = [0, 0], sizes = [1, 32], strides = [1, 1]} : vector<1x64xf32> to vector<1x32xf32>
    %397 = vector.extract_strided_slice %395 {offsets = [0, 32], sizes = [1, 32], strides = [1, 1]} : vector<1x64xf32> to vector<1x32xf32>
    %398 = arith.mulf %396, %396 : vector<1x32xf32>
    %399 = arith.subf %397, %398 : vector<1x32xf32>
    %400 = vector.broadcast %396 : vector<1x32xf32> to vector<32x32xf32>
    %401 = arith.subf %385, %400 : vector<32x32xf32>
    %cst_200 = arith.constant 9.99999974E-6 : f32
    %402 = vector.broadcast %cst_200 : f32 to vector<1x32xf32>
    %403 = arith.addf %399, %402 : vector<1x32xf32>
    %404 = math.rsqrt %403 : vector<1x32xf32>
    %405 = vector.broadcast %404 : vector<1x32xf32> to vector<32x32xf32>
    %406 = arith.mulf %401, %405 : vector<32x32xf32>
    %407 = vector.broadcast %387 : vector<1x32xf32> to vector<32x32xf32>
    %408 = arith.mulf %406, %407 : vector<32x32xf32>
    %409 = vector.broadcast %389 : vector<1x32xf32> to vector<32x32xf32>
    %410 = arith.addf %408, %409 : vector<32x32xf32>
    %cst_201 = arith.constant 0.000000e+00 : f32
    %411 = vector.broadcast %cst_201 : f32 to vector<32x32xf32>
    %412 = arith.maximumf %410, %411 : vector<32x32xf32>
    %413 = arith.addf %326, %412 : vector<32x32xf32>
    %c16 = arith.constant 16 : index
    %c0_202 = arith.constant 0 : index
    %c0_203 = arith.constant 0 : index
    %414 = vector.load %arg5[%c16, %c0_202, %c0_203] : memref<24x32x32xbf16, #tpu.memory_space<vmem>>, vector<1x32x32xbf16>
    %415 = vector.shape_cast %414 : vector<1x32x32xbf16> to vector<32x32xbf16>
    %c17 = arith.constant 17 : index
    %c0_204 = arith.constant 0 : index
    %c0_205 = arith.constant 0 : index
    %416 = vector.load %arg5[%c17, %c0_204, %c0_205] : memref<24x32x32xbf16, #tpu.memory_space<vmem>>, vector<1x32x32xbf16>
    %417 = vector.shape_cast %416 : vector<1x32x32xbf16> to vector<32x32xbf16>
    %c8_206 = arith.constant 8 : index
    %c0_207 = arith.constant 0 : index
    %c0_208 = arith.constant 0 : index
    %418 = vector.load %arg6[%c8_206, %c0_207, %c0_208] : memref<12x1x32xf32, #tpu.memory_space<vmem>>, vector<1x1x32xf32>
    %419 = vector.shape_cast %418 : vector<1x1x32xf32> to vector<1x32xf32>
    %420 = arith.truncf %413 : vector<32x32xf32> to vector<32x32xbf16>
    %cst_209 = arith.constant dense<0.000000e+00> : vector<32x32xf32>
    %421 = tpu.matmul %420, %415, %cst_209 {dimension_numbers = #tpu.dot_dimension_numbers<[1], [0], [0], [1], [0, 0, 1, 1], [], []>} : vector<32x32xbf16>, vector<32x32xbf16>, vector<32x32xf32> -> vector<32x32xf32>
    %cst_210 = arith.constant dense<0.000000e+00> : vector<32x32xf32>
    %422 = tpu.matmul %420, %417, %cst_210 {dimension_numbers = #tpu.dot_dimension_numbers<[1], [0], [0], [1], [0, 0, 1, 1], [], []>} : vector<32x32xbf16>, vector<32x32xbf16>, vector<32x32xf32> -> vector<32x32xf32>
    %423 = arith.truncf %422 : vector<32x32xf32> to vector<32x32xbf16>
    %cst_211 = arith.constant dense<0.000000e+00> : vector<32x32xf32>
    %424 = tpu.matmul %3, %423, %cst_211 {dimension_numbers = #tpu.dot_dimension_numbers<[1], [0], [0], [1], [0, 0, 1, 1], [], []>} : vector<32x32xbf16>, vector<32x32xbf16>, vector<32x32xf32> -> vector<32x32xf32>
    %425 = vector.broadcast %2 : vector<32x1xf32> to vector<32x32xf32>
    %426 = arith.mulf %425, %421 : vector<32x32xf32>
    %427 = arith.addf %426, %424 : vector<32x32xf32>
    %428 = vector.broadcast %419 : vector<1x32xf32> to vector<32x32xf32>
    %429 = arith.addf %427, %428 : vector<32x32xf32>
    %c8_212 = arith.constant 8 : index
    %c0_213 = arith.constant 0 : index
    %c0_214 = arith.constant 0 : index
    %430 = vector.load %arg7[%c8_212, %c0_213, %c0_214] : memref<12x1x32xf32, #tpu.memory_space<vmem>>, vector<1x1x32xf32>
    %431 = vector.shape_cast %430 : vector<1x1x32xf32> to vector<1x32xf32>
    %c8_215 = arith.constant 8 : index
    %c0_216 = arith.constant 0 : index
    %c0_217 = arith.constant 0 : index
    %432 = vector.load %arg8[%c8_215, %c0_216, %c0_217] : memref<12x1x32xf32, #tpu.memory_space<vmem>>, vector<1x1x32xf32>
    %433 = vector.shape_cast %432 : vector<1x1x32xf32> to vector<1x32xf32>
    %434 = arith.mulf %429, %429 : vector<32x32xf32>
    %435 = tpu.concatenate %429, %434 in 1 : vector<32x32xf32>, vector<32x32xf32> -> vector<32x64xf32>
    %cst_218 = arith.constant dense<0.000000e+00> : vector<64xf32>
    %436 = vector.multi_reduction <add>, %435, %cst_218 [0] : vector<32x64xf32> to vector<64xf32>
    %437 = vector.shape_cast %436 : vector<64xf32> to vector<1x64xf32>
    %cst_219 = arith.constant 3.125000e-02 : f32
    %438 = vector.broadcast %cst_219 : f32 to vector<1x64xf32>
    %439 = arith.mulf %437, %438 : vector<1x64xf32>
    %440 = vector.extract_strided_slice %439 {offsets = [0, 0], sizes = [1, 32], strides = [1, 1]} : vector<1x64xf32> to vector<1x32xf32>
    %441 = vector.extract_strided_slice %439 {offsets = [0, 32], sizes = [1, 32], strides = [1, 1]} : vector<1x64xf32> to vector<1x32xf32>
    %442 = arith.mulf %440, %440 : vector<1x32xf32>
    %443 = arith.subf %441, %442 : vector<1x32xf32>
    %444 = vector.broadcast %440 : vector<1x32xf32> to vector<32x32xf32>
    %445 = arith.subf %429, %444 : vector<32x32xf32>
    %cst_220 = arith.constant 9.99999974E-6 : f32
    %446 = vector.broadcast %cst_220 : f32 to vector<1x32xf32>
    %447 = arith.addf %443, %446 : vector<1x32xf32>
    %448 = math.rsqrt %447 : vector<1x32xf32>
    %449 = vector.broadcast %448 : vector<1x32xf32> to vector<32x32xf32>
    %450 = arith.mulf %445, %449 : vector<32x32xf32>
    %451 = vector.broadcast %431 : vector<1x32xf32> to vector<32x32xf32>
    %452 = arith.mulf %450, %451 : vector<32x32xf32>
    %453 = vector.broadcast %433 : vector<1x32xf32> to vector<32x32xf32>
    %454 = arith.addf %452, %453 : vector<32x32xf32>
    %cst_221 = arith.constant 0.000000e+00 : f32
    %455 = vector.broadcast %cst_221 : f32 to vector<32x32xf32>
    %456 = arith.maximumf %454, %455 : vector<32x32xf32>
    %c18 = arith.constant 18 : index
    %c0_222 = arith.constant 0 : index
    %c0_223 = arith.constant 0 : index
    %457 = vector.load %arg5[%c18, %c0_222, %c0_223] : memref<24x32x32xbf16, #tpu.memory_space<vmem>>, vector<1x32x32xbf16>
    %458 = vector.shape_cast %457 : vector<1x32x32xbf16> to vector<32x32xbf16>
    %c19 = arith.constant 19 : index
    %c0_224 = arith.constant 0 : index
    %c0_225 = arith.constant 0 : index
    %459 = vector.load %arg5[%c19, %c0_224, %c0_225] : memref<24x32x32xbf16, #tpu.memory_space<vmem>>, vector<1x32x32xbf16>
    %460 = vector.shape_cast %459 : vector<1x32x32xbf16> to vector<32x32xbf16>
    %c9_226 = arith.constant 9 : index
    %c0_227 = arith.constant 0 : index
    %c0_228 = arith.constant 0 : index
    %461 = vector.load %arg6[%c9_226, %c0_227, %c0_228] : memref<12x1x32xf32, #tpu.memory_space<vmem>>, vector<1x1x32xf32>
    %462 = vector.shape_cast %461 : vector<1x1x32xf32> to vector<1x32xf32>
    %463 = arith.truncf %456 : vector<32x32xf32> to vector<32x32xbf16>
    %cst_229 = arith.constant dense<0.000000e+00> : vector<32x32xf32>
    %464 = tpu.matmul %463, %458, %cst_229 {dimension_numbers = #tpu.dot_dimension_numbers<[1], [0], [0], [1], [0, 0, 1, 1], [], []>} : vector<32x32xbf16>, vector<32x32xbf16>, vector<32x32xf32> -> vector<32x32xf32>
    %cst_230 = arith.constant dense<0.000000e+00> : vector<32x32xf32>
    %465 = tpu.matmul %463, %460, %cst_230 {dimension_numbers = #tpu.dot_dimension_numbers<[1], [0], [0], [1], [0, 0, 1, 1], [], []>} : vector<32x32xbf16>, vector<32x32xbf16>, vector<32x32xf32> -> vector<32x32xf32>
    %466 = arith.truncf %465 : vector<32x32xf32> to vector<32x32xbf16>
    %cst_231 = arith.constant dense<0.000000e+00> : vector<32x32xf32>
    %467 = tpu.matmul %1, %466, %cst_231 {dimension_numbers = #tpu.dot_dimension_numbers<[1], [0], [0], [1], [0, 0, 1, 1], [], []>} : vector<32x32xbf16>, vector<32x32xbf16>, vector<32x32xf32> -> vector<32x32xf32>
    %468 = vector.broadcast %0 : vector<32x1xf32> to vector<32x32xf32>
    %469 = arith.mulf %468, %464 : vector<32x32xf32>
    %470 = arith.addf %469, %467 : vector<32x32xf32>
    %471 = vector.broadcast %462 : vector<1x32xf32> to vector<32x32xf32>
    %472 = arith.addf %470, %471 : vector<32x32xf32>
    %c9_232 = arith.constant 9 : index
    %c0_233 = arith.constant 0 : index
    %c0_234 = arith.constant 0 : index
    %473 = vector.load %arg7[%c9_232, %c0_233, %c0_234] : memref<12x1x32xf32, #tpu.memory_space<vmem>>, vector<1x1x32xf32>
    %474 = vector.shape_cast %473 : vector<1x1x32xf32> to vector<1x32xf32>
    %c9_235 = arith.constant 9 : index
    %c0_236 = arith.constant 0 : index
    %c0_237 = arith.constant 0 : index
    %475 = vector.load %arg8[%c9_235, %c0_236, %c0_237] : memref<12x1x32xf32, #tpu.memory_space<vmem>>, vector<1x1x32xf32>
    %476 = vector.shape_cast %475 : vector<1x1x32xf32> to vector<1x32xf32>
    %477 = arith.mulf %472, %472 : vector<32x32xf32>
    %478 = tpu.concatenate %472, %477 in 1 : vector<32x32xf32>, vector<32x32xf32> -> vector<32x64xf32>
    %cst_238 = arith.constant dense<0.000000e+00> : vector<64xf32>
    %479 = vector.multi_reduction <add>, %478, %cst_238 [0] : vector<32x64xf32> to vector<64xf32>
    %480 = vector.shape_cast %479 : vector<64xf32> to vector<1x64xf32>
    %cst_239 = arith.constant 3.125000e-02 : f32
    %481 = vector.broadcast %cst_239 : f32 to vector<1x64xf32>
    %482 = arith.mulf %480, %481 : vector<1x64xf32>
    %483 = vector.extract_strided_slice %482 {offsets = [0, 0], sizes = [1, 32], strides = [1, 1]} : vector<1x64xf32> to vector<1x32xf32>
    %484 = vector.extract_strided_slice %482 {offsets = [0, 32], sizes = [1, 32], strides = [1, 1]} : vector<1x64xf32> to vector<1x32xf32>
    %485 = arith.mulf %483, %483 : vector<1x32xf32>
    %486 = arith.subf %484, %485 : vector<1x32xf32>
    %487 = vector.broadcast %483 : vector<1x32xf32> to vector<32x32xf32>
    %488 = arith.subf %472, %487 : vector<32x32xf32>
    %cst_240 = arith.constant 9.99999974E-6 : f32
    %489 = vector.broadcast %cst_240 : f32 to vector<1x32xf32>
    %490 = arith.addf %486, %489 : vector<1x32xf32>
    %491 = math.rsqrt %490 : vector<1x32xf32>
    %492 = vector.broadcast %491 : vector<1x32xf32> to vector<32x32xf32>
    %493 = arith.mulf %488, %492 : vector<32x32xf32>
    %494 = vector.broadcast %474 : vector<1x32xf32> to vector<32x32xf32>
    %495 = arith.mulf %493, %494 : vector<32x32xf32>
    %496 = vector.broadcast %476 : vector<1x32xf32> to vector<32x32xf32>
    %497 = arith.addf %495, %496 : vector<32x32xf32>
    %cst_241 = arith.constant 0.000000e+00 : f32
    %498 = vector.broadcast %cst_241 : f32 to vector<32x32xf32>
    %499 = arith.maximumf %497, %498 : vector<32x32xf32>
    %c20 = arith.constant 20 : index
    %c0_242 = arith.constant 0 : index
    %c0_243 = arith.constant 0 : index
    %500 = vector.load %arg5[%c20, %c0_242, %c0_243] : memref<24x32x32xbf16, #tpu.memory_space<vmem>>, vector<1x32x32xbf16>
    %501 = vector.shape_cast %500 : vector<1x32x32xbf16> to vector<32x32xbf16>
    %c21 = arith.constant 21 : index
    %c0_244 = arith.constant 0 : index
    %c0_245 = arith.constant 0 : index
    %502 = vector.load %arg5[%c21, %c0_244, %c0_245] : memref<24x32x32xbf16, #tpu.memory_space<vmem>>, vector<1x32x32xbf16>
    %503 = vector.shape_cast %502 : vector<1x32x32xbf16> to vector<32x32xbf16>
    %c10_246 = arith.constant 10 : index
    %c0_247 = arith.constant 0 : index
    %c0_248 = arith.constant 0 : index
    %504 = vector.load %arg6[%c10_246, %c0_247, %c0_248] : memref<12x1x32xf32, #tpu.memory_space<vmem>>, vector<1x1x32xf32>
    %505 = vector.shape_cast %504 : vector<1x1x32xf32> to vector<1x32xf32>
    %506 = arith.truncf %499 : vector<32x32xf32> to vector<32x32xbf16>
    %cst_249 = arith.constant dense<0.000000e+00> : vector<32x32xf32>
    %507 = tpu.matmul %506, %501, %cst_249 {dimension_numbers = #tpu.dot_dimension_numbers<[1], [0], [0], [1], [0, 0, 1, 1], [], []>} : vector<32x32xbf16>, vector<32x32xbf16>, vector<32x32xf32> -> vector<32x32xf32>
    %cst_250 = arith.constant dense<0.000000e+00> : vector<32x32xf32>
    %508 = tpu.matmul %506, %503, %cst_250 {dimension_numbers = #tpu.dot_dimension_numbers<[1], [0], [0], [1], [0, 0, 1, 1], [], []>} : vector<32x32xbf16>, vector<32x32xbf16>, vector<32x32xf32> -> vector<32x32xf32>
    %509 = arith.truncf %508 : vector<32x32xf32> to vector<32x32xbf16>
    %cst_251 = arith.constant dense<0.000000e+00> : vector<32x32xf32>
    %510 = tpu.matmul %1, %509, %cst_251 {dimension_numbers = #tpu.dot_dimension_numbers<[1], [0], [0], [1], [0, 0, 1, 1], [], []>} : vector<32x32xbf16>, vector<32x32xbf16>, vector<32x32xf32> -> vector<32x32xf32>
    %511 = vector.broadcast %0 : vector<32x1xf32> to vector<32x32xf32>
    %512 = arith.mulf %511, %507 : vector<32x32xf32>
    %513 = arith.addf %512, %510 : vector<32x32xf32>
    %514 = vector.broadcast %505 : vector<1x32xf32> to vector<32x32xf32>
    %515 = arith.addf %513, %514 : vector<32x32xf32>
    %c10_252 = arith.constant 10 : index
    %c0_253 = arith.constant 0 : index
    %c0_254 = arith.constant 0 : index
    %516 = vector.load %arg7[%c10_252, %c0_253, %c0_254] : memref<12x1x32xf32, #tpu.memory_space<vmem>>, vector<1x1x32xf32>
    %517 = vector.shape_cast %516 : vector<1x1x32xf32> to vector<1x32xf32>
    %c10_255 = arith.constant 10 : index
    %c0_256 = arith.constant 0 : index
    %c0_257 = arith.constant 0 : index
    %518 = vector.load %arg8[%c10_255, %c0_256, %c0_257] : memref<12x1x32xf32, #tpu.memory_space<vmem>>, vector<1x1x32xf32>
    %519 = vector.shape_cast %518 : vector<1x1x32xf32> to vector<1x32xf32>
    %520 = arith.mulf %515, %515 : vector<32x32xf32>
    %521 = tpu.concatenate %515, %520 in 1 : vector<32x32xf32>, vector<32x32xf32> -> vector<32x64xf32>
    %cst_258 = arith.constant dense<0.000000e+00> : vector<64xf32>
    %522 = vector.multi_reduction <add>, %521, %cst_258 [0] : vector<32x64xf32> to vector<64xf32>
    %523 = vector.shape_cast %522 : vector<64xf32> to vector<1x64xf32>
    %cst_259 = arith.constant 3.125000e-02 : f32
    %524 = vector.broadcast %cst_259 : f32 to vector<1x64xf32>
    %525 = arith.mulf %523, %524 : vector<1x64xf32>
    %526 = vector.extract_strided_slice %525 {offsets = [0, 0], sizes = [1, 32], strides = [1, 1]} : vector<1x64xf32> to vector<1x32xf32>
    %527 = vector.extract_strided_slice %525 {offsets = [0, 32], sizes = [1, 32], strides = [1, 1]} : vector<1x64xf32> to vector<1x32xf32>
    %528 = arith.mulf %526, %526 : vector<1x32xf32>
    %529 = arith.subf %527, %528 : vector<1x32xf32>
    %530 = vector.broadcast %526 : vector<1x32xf32> to vector<32x32xf32>
    %531 = arith.subf %515, %530 : vector<32x32xf32>
    %cst_260 = arith.constant 9.99999974E-6 : f32
    %532 = vector.broadcast %cst_260 : f32 to vector<1x32xf32>
    %533 = arith.addf %529, %532 : vector<1x32xf32>
    %534 = math.rsqrt %533 : vector<1x32xf32>
    %535 = vector.broadcast %534 : vector<1x32xf32> to vector<32x32xf32>
    %536 = arith.mulf %531, %535 : vector<32x32xf32>
    %537 = vector.broadcast %517 : vector<1x32xf32> to vector<32x32xf32>
    %538 = arith.mulf %536, %537 : vector<32x32xf32>
    %539 = vector.broadcast %519 : vector<1x32xf32> to vector<32x32xf32>
    %540 = arith.addf %538, %539 : vector<32x32xf32>
    %cst_261 = arith.constant 0.000000e+00 : f32
    %541 = vector.broadcast %cst_261 : f32 to vector<32x32xf32>
    %542 = arith.maximumf %540, %541 : vector<32x32xf32>
    %543 = arith.addf %456, %542 : vector<32x32xf32>
    %c22 = arith.constant 22 : index
    %c0_262 = arith.constant 0 : index
    %c0_263 = arith.constant 0 : index
    %544 = vector.load %arg5[%c22, %c0_262, %c0_263] : memref<24x32x32xbf16, #tpu.memory_space<vmem>>, vector<1x32x32xbf16>
    %545 = vector.shape_cast %544 : vector<1x32x32xbf16> to vector<32x32xbf16>
    %c23 = arith.constant 23 : index
    %c0_264 = arith.constant 0 : index
    %c0_265 = arith.constant 0 : index
    %546 = vector.load %arg5[%c23, %c0_264, %c0_265] : memref<24x32x32xbf16, #tpu.memory_space<vmem>>, vector<1x32x32xbf16>
    %547 = vector.shape_cast %546 : vector<1x32x32xbf16> to vector<32x32xbf16>
    %c11_266 = arith.constant 11 : index
    %c0_267 = arith.constant 0 : index
    %c0_268 = arith.constant 0 : index
    %548 = vector.load %arg6[%c11_266, %c0_267, %c0_268] : memref<12x1x32xf32, #tpu.memory_space<vmem>>, vector<1x1x32xf32>
    %549 = vector.shape_cast %548 : vector<1x1x32xf32> to vector<1x32xf32>
    %550 = arith.truncf %543 : vector<32x32xf32> to vector<32x32xbf16>
    %cst_269 = arith.constant dense<0.000000e+00> : vector<32x32xf32>
    %551 = tpu.matmul %550, %545, %cst_269 {dimension_numbers = #tpu.dot_dimension_numbers<[1], [0], [0], [1], [0, 0, 1, 1], [], []>} : vector<32x32xbf16>, vector<32x32xbf16>, vector<32x32xf32> -> vector<32x32xf32>
    %cst_270 = arith.constant dense<0.000000e+00> : vector<32x32xf32>
    %552 = tpu.matmul %550, %547, %cst_270 {dimension_numbers = #tpu.dot_dimension_numbers<[1], [0], [0], [1], [0, 0, 1, 1], [], []>} : vector<32x32xbf16>, vector<32x32xbf16>, vector<32x32xf32> -> vector<32x32xf32>
    %553 = arith.truncf %552 : vector<32x32xf32> to vector<32x32xbf16>
    %cst_271 = arith.constant dense<0.000000e+00> : vector<32x32xf32>
    %554 = tpu.matmul %3, %553, %cst_271 {dimension_numbers = #tpu.dot_dimension_numbers<[1], [0], [0], [1], [0, 0, 1, 1], [], []>} : vector<32x32xbf16>, vector<32x32xbf16>, vector<32x32xf32> -> vector<32x32xf32>
    %555 = vector.broadcast %2 : vector<32x1xf32> to vector<32x32xf32>
    %556 = arith.mulf %555, %551 : vector<32x32xf32>
    %557 = arith.addf %556, %554 : vector<32x32xf32>
    %558 = vector.broadcast %549 : vector<1x32xf32> to vector<32x32xf32>
    %559 = arith.addf %557, %558 : vector<32x32xf32>
    %c11_272 = arith.constant 11 : index
    %c0_273 = arith.constant 0 : index
    %c0_274 = arith.constant 0 : index
    %560 = vector.load %arg7[%c11_272, %c0_273, %c0_274] : memref<12x1x32xf32, #tpu.memory_space<vmem>>, vector<1x1x32xf32>
    %561 = vector.shape_cast %560 : vector<1x1x32xf32> to vector<1x32xf32>
    %c11_275 = arith.constant 11 : index
    %c0_276 = arith.constant 0 : index
    %c0_277 = arith.constant 0 : index
    %562 = vector.load %arg8[%c11_275, %c0_276, %c0_277] : memref<12x1x32xf32, #tpu.memory_space<vmem>>, vector<1x1x32xf32>
    %563 = vector.shape_cast %562 : vector<1x1x32xf32> to vector<1x32xf32>
    %564 = arith.mulf %559, %559 : vector<32x32xf32>
    %565 = tpu.concatenate %559, %564 in 1 : vector<32x32xf32>, vector<32x32xf32> -> vector<32x64xf32>
    %cst_278 = arith.constant dense<0.000000e+00> : vector<64xf32>
    %566 = vector.multi_reduction <add>, %565, %cst_278 [0] : vector<32x64xf32> to vector<64xf32>
    %567 = vector.shape_cast %566 : vector<64xf32> to vector<1x64xf32>
    %cst_279 = arith.constant 3.125000e-02 : f32
    %568 = vector.broadcast %cst_279 : f32 to vector<1x64xf32>
    %569 = arith.mulf %567, %568 : vector<1x64xf32>
    %570 = vector.extract_strided_slice %569 {offsets = [0, 0], sizes = [1, 32], strides = [1, 1]} : vector<1x64xf32> to vector<1x32xf32>
    %571 = vector.extract_strided_slice %569 {offsets = [0, 32], sizes = [1, 32], strides = [1, 1]} : vector<1x64xf32> to vector<1x32xf32>
    %572 = arith.mulf %570, %570 : vector<1x32xf32>
    %573 = arith.subf %571, %572 : vector<1x32xf32>
    %574 = vector.broadcast %570 : vector<1x32xf32> to vector<32x32xf32>
    %575 = arith.subf %559, %574 : vector<32x32xf32>
    %cst_280 = arith.constant 9.99999974E-6 : f32
    %576 = vector.broadcast %cst_280 : f32 to vector<1x32xf32>
    %577 = arith.addf %573, %576 : vector<1x32xf32>
    %578 = math.rsqrt %577 : vector<1x32xf32>
    %579 = vector.broadcast %578 : vector<1x32xf32> to vector<32x32xf32>
    %580 = arith.mulf %575, %579 : vector<32x32xf32>
    %581 = vector.broadcast %561 : vector<1x32xf32> to vector<32x32xf32>
    %582 = arith.mulf %580, %581 : vector<32x32xf32>
    %583 = vector.broadcast %563 : vector<1x32xf32> to vector<32x32xf32>
    %584 = arith.addf %582, %583 : vector<32x32xf32>
    %cst_281 = arith.constant 0.000000e+00 : f32
    %585 = vector.broadcast %cst_281 : f32 to vector<32x32xf32>
    %586 = arith.maximumf %584, %585 : vector<32x32xf32>
    %c0_282 = arith.constant 0 : index
    %c0_283 = arith.constant 0 : index
    %c0_284 = arith.constant 0 : index
    %587 = vector.load %arg9[%c0_282, %c0_283, %c0_284] : memref<2x32x128xbf16, #tpu.memory_space<vmem>>, vector<1x32x128xbf16>
    %588 = vector.shape_cast %587 : vector<1x32x128xbf16> to vector<32x128xbf16>
    %c1_285 = arith.constant 1 : index
    %c0_286 = arith.constant 0 : index
    %c0_287 = arith.constant 0 : index
    %589 = vector.load %arg9[%c1_285, %c0_286, %c0_287] : memref<2x32x128xbf16, #tpu.memory_space<vmem>>, vector<1x32x128xbf16>
    %590 = vector.shape_cast %589 : vector<1x32x128xbf16> to vector<32x128xbf16>
    %c0_288 = arith.constant 0 : index
    %c0_289 = arith.constant 0 : index
    %591 = vector.load %arg10[%c0_288, %c0_289] : memref<1x128xf32, #tpu.memory_space<vmem>>, vector<1x128xf32>
    %592 = arith.truncf %586 : vector<32x32xf32> to vector<32x32xbf16>
    %cst_290 = arith.constant dense<0.000000e+00> : vector<32x128xf32>
    %593 = tpu.matmul %592, %588, %cst_290 {dimension_numbers = #tpu.dot_dimension_numbers<[1], [0], [0], [1], [0, 0, 1, 1], [], []>} : vector<32x32xbf16>, vector<32x128xbf16>, vector<32x128xf32> -> vector<32x128xf32>
    %cst_291 = arith.constant dense<0.000000e+00> : vector<32x128xf32>
    %594 = tpu.matmul %592, %590, %cst_291 {dimension_numbers = #tpu.dot_dimension_numbers<[1], [0], [0], [1], [0, 0, 1, 1], [], []>} : vector<32x32xbf16>, vector<32x128xbf16>, vector<32x128xf32> -> vector<32x128xf32>
    %595 = arith.truncf %594 : vector<32x128xf32> to vector<32x128xbf16>
    %cst_292 = arith.constant dense<0.000000e+00> : vector<32x128xf32>
    %596 = tpu.matmul %1, %595, %cst_292 {dimension_numbers = #tpu.dot_dimension_numbers<[1], [0], [0], [1], [0, 0, 1, 1], [], []>} : vector<32x32xbf16>, vector<32x128xbf16>, vector<32x128xf32> -> vector<32x128xf32>
    %597 = vector.broadcast %0 : vector<32x1xf32> to vector<32x128xf32>
    %598 = arith.mulf %597, %593 : vector<32x128xf32>
    %599 = arith.addf %598, %596 : vector<32x128xf32>
    %600 = vector.broadcast %591 : vector<1x128xf32> to vector<32x128xf32>
    %601 = arith.addf %599, %600 : vector<32x128xf32>
    %c0_293 = arith.constant 0 : index
    %c0_294 = arith.constant 0 : index
    %602 = vector.load %arg15[%c0_293, %c0_294] : memref<32x128xf32, #tpu.memory_space<vmem>>, vector<32x128xf32>
    tpu.vector_store %arg15[%c0_293, %c0_294], %601 {strides = array<i32>} : memref<32x128xf32, #tpu.memory_space<vmem>>, vector<32x128xf32>,
    return
  }
}

</mosaic_0001>

<llo_original>
// kernel: tile.13
$region0: #{tile.13}
  #allocation0 [shape = 's32[1]{0}', space=sflag, size = 0x4, scoped, tag = 'scoped memory for tile.13']
  %s0 = inlined_call_operand.vmem [shape: f32[16], index: 0, kind: input, shape index: {}]
  %s1 = inlined_call_operand.vmem [shape: f32[2,16], index: 1, kind: output, shape index: {}]
  // Predicated region
  $region2: #{tile.13} parent=0 // pred_check
    _
  $region3: #{tile.13} parent=0 // pred_check_branch
    %3 = sbr.rel (0) target = $region5
  $region4: #{tile.13} parent=0 // pred_region
    _
  $region5: #{tile.13} parent=0 // pred_fallthru
    _
  %v4 = vld [vmem:[%s0] ss:$0 sm:$0xff]
  %5 = vst [vmem:[%s1] sm:$0x3] %v4

// kernel: tile.1
$region0: #{tile.1}
  %s0 = inlined_call_operand.vmem [shape: f32[2,16], index: 0, kind: input, shape index: {}]
  %s1 = inlined_call_operand.vmem [shape: f32[32,1], index: 1, kind: output, shape index: {}]
  $region1: #{tile.1} parent=0
    #allocation0 [shape = 'u8[4096]{0}', space=vmem, size = 0x1000, scoped, tag = 'scoped mem for input reshape']
    %s3 = sshllo.u32 0, 2
    %v4 = vld [vmem:[%s0] sm:%s3]
    %5 = vst [vmem:[#allocation0] sm:%s3] %v4
    %v6 = vld [vmem:[#allocation0] sm:$0x3]
    %vm7 = vcmask 7168
    %8 = vst.msk [vmem:[%s1] ss:$16 sm:$0x3] %vm7, %v6
    %v9 = vld [vmem:[#allocation0] sm:$0x3]
    %10 = vrot.lane.b32.xlu0 %v9, 127
    %v11 = vpop.permute.xlu0 %10
    %vm12 = vcmask 7168
    %s13 = scalar_lea.vmem %s1, 1
    %14 = vst.msk [vmem:[%s13] ss:$16 sm:$0x3] %vm12, %v11
    %v15 = vld [vmem:[#allocation0] sm:$0x3]
    %16 = vrot.lane.b32.xlu0 %v15, 126
    %v17 = vpop.permute.xlu0 %16
    %vm18 = vcmask 7168
    %s19 = scalar_lea.vmem %s1, 2
    %20 = vst.msk [vmem:[%s19] ss:$16 sm:$0x3] %vm18, %v17
    %v21 = vld [vmem:[#allocation0] sm:$0x3]
    %22 = vrot.lane.b32.xlu0 %v21, 125
    %v23 = vpop.permute.xlu0 %22
    %vm24 = vcmask 7168
    %s25 = scalar_lea.vmem %s1, 3
    %26 = vst.msk [vmem:[%s25] ss:$16 sm:$0x3] %vm24, %v23
    %v27 = vld [vmem:[#allocation0] sm:$0x3]
    %28 = vrot.lane.b32.xlu0 %v27, 124
    %v29 = vpop.permute.xlu0 %28
    %vm30 = vcmask 7168
    %s31 = scalar_lea.vmem %s1, 4
    %32 = vst.msk [vmem:[%s31] ss:$16 sm:$0x3] %vm30, %v29
    %v33 = vld [vmem:[#allocation0] sm:$0x3]
    %34 = vrot.lane.b32.xlu0 %v33, 123
    %v35 = vpop.permute.xlu0 %34
    %vm36 = vcmask 7168
    %s37 = scalar_lea.vmem %s1, 5
    %38 = vst.msk [vmem:[%s37] ss:$16 sm:$0x3] %vm36, %v35
    %v39 = vld [vmem:[#allocation0] sm:$0x3]
    %40 = vrot.lane.b32.xlu0 %v39, 122
    %v41 = vpop.permute.xlu0 %40
    %vm42 = vcmask 7168
    %s43 = scalar_lea.vmem %s1, 6
    %44 = vst.msk [vmem:[%s43] ss:$16 sm:$0x3] %vm42, %v41
    %v45 = vld [vmem:[#allocation0] sm:$0x3]
    %46 = vrot.lane.b32.xlu0 %v45, 121
    %v47 = vpop.permute.xlu0 %46
    %vm48 = vcmask 7168
    %s49 = scalar_lea.vmem %s1, 7
    %50 = vst.msk [vmem:[%s49] ss:$16 sm:$0x3] %vm48, %v47
    %v51 = vld [vmem:[#allocation0] sm:$0x3]
    %52 = vrot.lane.b32.xlu0 %v51, 120
    %v53 = vpop.permute.xlu0 %52
    %vm54 = vcmask 7168
    %s55 = scalar_lea.vmem %s1, 8
    %56 = vst.msk [vmem:[%s55] ss:$16 sm:$0x3] %vm54, %v53
    %v57 = vld [vmem:[#allocation0] sm:$0x3]
    %58 = vrot.lane.b32.xlu0 %v57, 119
    %v59 = vpop.permute.xlu0 %58
    %vm60 = vcmask 7168
    %s61 = scalar_lea.vmem %s1, 9
    %62 = vst.msk [vmem:[%s61] ss:$16 sm:$0x3] %vm60, %v59
    %v63 = vld [vmem:[#allocation0] sm:$0x3]
    %64 = vrot.lane.b32.xlu0 %v63, 118
    %v65 = vpop.permute.xlu0 %64
    %vm66 = vcmask 7168
    %s67 = scalar_lea.vmem %s1, 10
    %68 = vst.msk [vmem:[%s67] ss:$16 sm:$0x3] %vm66, %v65
    %v69 = vld [vmem:[#allocation0] sm:$0x3]
    %70 = vrot.lane.b32.xlu0 %v69, 117
    %v71 = vpop.permute.xlu0 %70
    %vm72 = vcmask 7168
    %s73 = scalar_lea.vmem %s1, 11
    %74 = vst.msk [vmem:[%s73] ss:$16 sm:$0x3] %vm72, %v71
    %v75 = vld [vmem:[#allocation0] sm:$0x3]
    %76 = vrot.lane.b32.xlu0 %v75, 116
    %v77 = vpop.permute.xlu0 %76
    %vm78 = vcmask 7168
    %s79 = scalar_lea.vmem %s1, 12
    %80 = vst.msk [vmem:[%s79] ss:$16 sm:$0x3] %vm78, %v77
    %v81 = vld [vmem:[#allocation0] sm:$0x3]
    %82 = vrot.lane.b32.xlu0 %v81, 115
    %v83 = vpop.permute.xlu0 %82
    %vm84 = vcmask 7168
    %s85 = scalar_lea.vmem %s1, 13
    %86 = vst.msk [vmem:[%s85] ss:$16 sm:$0x3] %vm84, %v83
    %v87 = vld [vmem:[#allocation0] sm:$0x3]
    %88 = vrot.lane.b32.xlu0 %v87, 114
    %v89 = vpop.permute.xlu0 %88
    %vm90 = vcmask 7168
    %s91 = scalar_lea.vmem %s1, 14
    %92 = vst.msk [vmem:[%s91] ss:$16 sm:$0x3] %vm90, %v89
    %v93 = vld [vmem:[#allocation0] sm:$0x3]
    %94 = vrot.lane.b32.xlu0 %v93, 113
    %v95 = vpop.permute.xlu0 %94
    %vm96 = vcmask 7168
    %s97 = scalar_lea.vmem %s1, 15
    %98 = vst.msk [vmem:[%s97] ss:$16 sm:$0x3] %vm96, %v95

// kernel: semgcn7_forward.1
$region0: #{semgcn7_forward.1}
  #allocation0 [shape = 'u32[]', space=smem, size = 0x4, offset = 0x4, fixed_abs, tag = 'smem constant byte address 0x4 - core index']
  #allocation1 [shape = 'u32[144,128]{1,0:T(1,128)}', space=vmem, size = 0x12000, scoped, tag = 'internal scratch']
  %s0 = inlined_call_operand.vmem [shape: f32[2,32,1], index: 0, kind: input, shape index: {}]
  %s1 = inlined_call_operand.vmem [shape: f32[4,1,32], index: 1, kind: input, shape index: {}]
  %s2 = inlined_call_operand.vmem [shape: f32[1,32], index: 2, kind: input, shape index: {}]
  %s3 = inlined_call_operand.vmem [shape: f32[1,32], index: 3, kind: input, shape index: {}]
  %s4 = inlined_call_operand.vmem [shape: f32[1,32], index: 4, kind: input, shape index: {}]
  %s5 = inlined_call_operand.vmem [shape: bf16[24,32,32], index: 5, kind: input, shape index: {}]
  %s6 = inlined_call_operand.vmem [shape: f32[12,1,32], index: 6, kind: input, shape index: {}]
  %s7 = inlined_call_operand.vmem [shape: f32[12,1,32], index: 7, kind: input, shape index: {}]
  %s8 = inlined_call_operand.vmem [shape: f32[12,1,32], index: 8, kind: input, shape index: {}]
  %s9 = inlined_call_operand.vmem [shape: bf16[2,32,128], index: 9, kind: input, shape index: {}]
  %s10 = inlined_call_operand.vmem [shape: f32[1,128], index: 10, kind: input, shape index: {}]
  %s11 = inlined_call_operand.vmem [shape: f32[32,1], index: 11, kind: input, shape index: {}]
  %s12 = inlined_call_operand.vmem [shape: bf16[32,32], index: 12, kind: input, shape index: {}]
  %s13 = inlined_call_operand.vmem [shape: f32[32,1], index: 13, kind: input, shape index: {}]
  %s14 = inlined_call_operand.vmem [shape: bf16[32,32], index: 14, kind: input, shape index: {}]
  %s15 = inlined_call_operand.vmem [shape: f32[32,128], index: 15, kind: output, shape index: {}]
  %s16 = sld [smem:[#allocation0]]
  $region70: #{semgcn7_forward.1} parent=0
    _
  %s18 = ssub.s32 1, %s16
  %s19 = scalar_select 0, %s18, %s16
  // Predicated region
  $region2: #{semgcn7_forward.1} parent=0 // pred_check
    _
  $region3: #{semgcn7_forward.1} parent=0 // pred_check_branch
    %21 = sbr.rel (0) target = $region5
  $region4: #{semgcn7_forward.1} parent=0 // pred_region
    _
  $region5: #{semgcn7_forward.1} parent=0 // pred_fallthru
    _
  // Predicated region
  $region6: #{semgcn7_forward.1} parent=0 // pred_check
    _
  $region7: #{semgcn7_forward.1} parent=0 // pred_check_branch
    %23 = sbr.rel (0) target = $region9
  $region8: #{semgcn7_forward.1} parent=0 // pred_region
    _
  $region9: #{semgcn7_forward.1} parent=0 // pred_fallthru
    _
  // Predicated region
  $region10: #{semgcn7_forward.1} parent=0 // pred_check
    _
  $region11: #{semgcn7_forward.1} parent=0 // pred_check_branch
    %25 = sbr.rel (0) target = $region13
  $region12: #{semgcn7_forward.1} parent=0 // pred_region
    _
  $region13: #{semgcn7_forward.1} parent=0 // pred_fallthru
    _
  // Predicated region
  $region14: #{semgcn7_forward.1} parent=0 // pred_check
    _
  $region15: #{semgcn7_forward.1} parent=0 // pred_check_branch
    %27 = sbr.rel (0) target = $region17
  $region16: #{semgcn7_forward.1} parent=0 // pred_region
    _
  $region17: #{semgcn7_forward.1} parent=0 // pred_fallthru
    _
  // Predicated region
  $region18: #{semgcn7_forward.1} parent=0 // pred_check
    _
  $region19: #{semgcn7_forward.1} parent=0 // pred_check_branch
    %29 = sbr.rel (0) target = $region21
  $region20: #{semgcn7_forward.1} parent=0 // pred_region
    _
  $region21: #{semgcn7_forward.1} parent=0 // pred_fallthru
    _
  // Predicated region
  $region22: #{semgcn7_forward.1} parent=0 // pred_check
    _
  $region23: #{semgcn7_forward.1} parent=0 // pred_check_branch
    %31 = sbr.rel (0) target = $region25
  $region24: #{semgcn7_forward.1} parent=0 // pred_region
    _
  $region25: #{semgcn7_forward.1} parent=0 // pred_fallthru
    _
  // Predicated region
  $region26: #{semgcn7_forward.1} parent=0 // pred_check
    _
  $region27: #{semgcn7_forward.1} parent=0 // pred_check_branch
    %33 = sbr.rel (0) target = $region29
  $region28: #{semgcn7_forward.1} parent=0 // pred_region
    _
  $region29: #{semgcn7_forward.1} parent=0 // pred_fallthru
    _
  // Predicated region
  $region30: #{semgcn7_forward.1} parent=0 // pred_check
    _
  $region31: #{semgcn7_forward.1} parent=0 // pred_check_branch
    %35 = sbr.rel (0) target = $region33
  $region32: #{semgcn7_forward.1} parent=0 // pred_region
    _
  $region33: #{semgcn7_forward.1} parent=0 // pred_fallthru
    _
  // Predicated region
  $region34: #{semgcn7_forward.1} parent=0 // pred_check
    _
  $region35: #{semgcn7_forward.1} parent=0 // pred_check_branch
    %37 = sbr.rel (0) target = $region37
  $region36: #{semgcn7_forward.1} parent=0 // pred_region
    _
  $region37: #{semgcn7_forward.1} parent=0 // pred_fallthru
    _
  // Predicated region
  $region38: #{semgcn7_forward.1} parent=0 // pred_check
    _
  $region39: #{semgcn7_forward.1} parent=0 // pred_check_branch
    %39 = sbr.rel (0) target = $region41
  $region40: #{semgcn7_forward.1} parent=0 // pred_region
    _
  $region41: #{semgcn7_forward.1} parent=0 // pred_fallthru
    _
  // Predicated region
  $region42: #{semgcn7_forward.1} parent=0 // pred_check
    _
  $region43: #{semgcn7_forward.1} parent=0 // pred_check_branch
    %41 = sbr.rel (0) target = $region45
  $region44: #{semgcn7_forward.1} parent=0 // pred_region
    _
  $region45: #{semgcn7_forward.1} parent=0 // pred_fallthru
    _
  // Predicated region
  $region46: #{semgcn7_forward.1} parent=0 // pred_check
    _
  $region47: #{semgcn7_forward.1} parent=0 // pred_check_branch
    %43 = sbr.rel (0) target = $region49
  $region48: #{semgcn7_forward.1} parent=0 // pred_region
    _
  $region49: #{semgcn7_forward.1} parent=0 // pred_fallthru
    _
  // Predicated region
  $region50: #{semgcn7_forward.1} parent=0 // pred_check
    _
  $region51: #{semgcn7_forward.1} parent=0 // pred_check_branch
    %45 = sbr.rel (0) target = $region53
  $region52: #{semgcn7_forward.1} parent=0 // pred_region
    _
  $region53: #{semgcn7_forward.1} parent=0 // pred_fallthru
    _
  // Predicated region
  $region54: #{semgcn7_forward.1} parent=0 // pred_check
    _
  $region55: #{semgcn7_forward.1} parent=0 // pred_check_branch
    %47 = sbr.rel (0) target = $region57
  $region56: #{semgcn7_forward.1} parent=0 // pred_region
    _
  $region57: #{semgcn7_forward.1} parent=0 // pred_fallthru
    _
  // Predicated region
  $region58: #{semgcn7_forward.1} parent=0 // pred_check
    _
  $region59: #{semgcn7_forward.1} parent=0 // pred_check_branch
    %49 = sbr.rel (0) target = $region61
  $region60: #{semgcn7_forward.1} parent=0 // pred_region
    _
  $region61: #{semgcn7_forward.1} parent=0 // pred_fallthru
    _
  %v51 = vld [vmem:[%s11] sm:$0xff]
  %v52 = vld [vmem:[%s11 + $0x8] sm:$0xff]
  %v53 = vld [vmem:[%s11 + $0x10] sm:$0xff]
  %v54 = vld [vmem:[%s11 + $0x18] sm:$0xff]
  %v55 = vld [vmem:[%s12] sm:$0xf]
  %v56 = vld [vmem:[%s12 + $0x4] sm:$0xf]
  %v57 = vld [vmem:[%s12 + $0x8] sm:$0xf]
  %v58 = vld [vmem:[%s12 + $0xc] sm:$0xf]
  %v59 = vld [vmem:[%s13] sm:$0xff]
  %v60 = vld [vmem:[%s13 + $0x8] sm:$0xff]
  %v61 = vld [vmem:[%s13 + $0x10] sm:$0xff]
  %v62 = vld [vmem:[%s13 + $0x18] sm:$0xff]
  %v63 = vld [vmem:[%s14] sm:$0xf]
  %v64 = vld [vmem:[%s14 + $0x4] sm:$0xf]
  %v65 = vld [vmem:[%s14 + $0x8] sm:$0xf]
  %v66 = vld [vmem:[%s14 + $0xc] sm:$0xf]
  %v67 = vld [vmem:[%s0] sm:$0xff]
  %v68 = vld [vmem:[%s0 + $0x8] sm:$0xff]
  %v69 = vld [vmem:[%s0 + $0x10] sm:$0xff]
  %v70 = vld [vmem:[%s0 + $0x18] sm:$0xff]
  %v71 = vld [vmem:[%s1] sm:$0x1]
  %73 = vset.pattern.permute.xlu0 0
  %74 = vperm.xlu0 %73, %v67
  %v75 = vpop.permute.xlu0 %74
  %78 = vset.pattern.permute.xlu0 0
  %79 = vperm.xlu0 %78, %v68
  %v80 = vpop.permute.xlu0 %79
  %83 = vset.pattern.permute.xlu0 0
  %84 = vperm.xlu0 %83, %v69
  %v85 = vpop.permute.xlu0 %84
  %88 = vset.pattern.permute.xlu0 0
  %89 = vperm.xlu0 %88, %v70
  %v90 = vpop.permute.xlu0 %89
  %v93 = vlaneseq
  %v94 = vshrl.u32 %v93, 7
  %v95 = vsub.s32 0, %v94
  %v96 = vrot.slane %v71, %v95
  %v98 = vmul.f32 %v75, %v96
  %v99 = vmul.f32 %v80, %v96
  %v100 = vmul.f32 %v85, %v96
  %v101 = vmul.f32 %v90, %v96
  %s102 = scalar_lea.vmem %s0, 32
  %v103 = vld [vmem:[%s102] sm:$0xff]
  %v104 = vld [vmem:[%s102 + $0x8] sm:$0xff]
  %v105 = vld [vmem:[%s102 + $0x10] sm:$0xff]
  %v106 = vld [vmem:[%s102 + $0x18] sm:$0xff]
  %s107 = scalar_lea.vmem %s1, 1
  %v108 = vld [vmem:[%s107] sm:$0x1]
  %110 = vset.pattern.permute.xlu0 0
  %111 = vperm.xlu0 %110, %v103
  %v112 = vpop.permute.xlu0 %111
  %115 = vset.pattern.permute.xlu0 0
  %116 = vperm.xlu0 %115, %v104
  %v117 = vpop.permute.xlu0 %116
  %120 = vset.pattern.permute.xlu0 0
  %121 = vperm.xlu0 %120, %v105
  %v122 = vpop.permute.xlu0 %121
  %125 = vset.pattern.permute.xlu0 0
  %126 = vperm.xlu0 %125, %v106
  %v127 = vpop.permute.xlu0 %126
  %v130 = vlaneseq
  %v131 = vshrl.u32 %v130, 7
  %v132 = vsub.s32 0, %v131
  %v133 = vrot.slane %v108, %v132
  %v135 = vmul.f32 %v112, %v133
  %v136 = vmul.f32 %v117, %v133
  %v137 = vmul.f32 %v122, %v133
  %v138 = vmul.f32 %v127, %v133
  %v139 = vadd.f32 %v98, %v135
  %v140 = vadd.f32 %v99, %v136
  %v141 = vadd.f32 %v100, %v137
  %v142 = vadd.f32 %v101, %v138
  %s143 = scalar_lea.vmem %s1, 2
  %v144 = vld [vmem:[%s143] sm:$0x1]
  %v146 = vlaneseq
  %v147 = vshrl.u32 %v146, 7
  %v148 = vsub.s32 0, %v147
  %v149 = vrot.slane %v144, %v148
  %v151 = vmul.f32 %v75, %v149
  %v152 = vmul.f32 %v80, %v149
  %v153 = vmul.f32 %v85, %v149
  %v154 = vmul.f32 %v90, %v149
  %s155 = scalar_lea.vmem %s1, 3
  %v156 = vld [vmem:[%s155] sm:$0x1]
  %v158 = vlaneseq
  %v159 = vshrl.u32 %v158, 7
  %v160 = vsub.s32 0, %v159
  %v161 = vrot.slane %v156, %v160
  %v163 = vmul.f32 %v112, %v161
  %v164 = vmul.f32 %v117, %v161
  %v165 = vmul.f32 %v122, %v161
  %v166 = vmul.f32 %v127, %v161
  %v167 = vadd.f32 %v151, %v163
  %v168 = vadd.f32 %v152, %v164
  %v169 = vadd.f32 %v153, %v165
  %v170 = vadd.f32 %v154, %v166
  %v171 = vld [vmem:[%s2] sm:$0x1]
  %v172 = vpack.c.bf16 %v168, %v167
  %v173 = vpack.c.bf16 %v170, %v169
  %v178 = vunpack.c.l.b16 %v55
  %v179 = vunpack.c.l.b16 %v56
  %v180 = vunpack.c.l.b16 %v57
  %v181 = vunpack.c.l.b16 %v58
  %v182 = vpack.c.b16 %v179, %v178
  %v183 = vpack.c.b16 %v181, %v180
  %vm184 = vcmask 261120
  %v186 = vsel %vm184, %v182, 0
  %v189 = vsel %vm184, %v183, 0
  %191 = vmatprep.subr.bf16.mxu0 0
  %192 = vmatpush1.bf16.msra.mxu0 %v172
  %193 = vmatprep.subr.bf16.mxu0 0
  %194 = vmatpush1.bf16.msra.mxu0 %v173
  %195 = vmatprep.subr.bf16.mxu0 0
  %196 = vmatpush1.bf16.msra.mxu0 0
  %197 = vmatprep.subr.bf16.mxu0 0
  %198 = vmatpush1.bf16.msra.mxu0 0
  %199 = vmatprep.subr.bf16.mxu0 0
  %200 = vmatpush1.bf16.msra.mxu0 0
  %201 = vmatprep.subr.bf16.mxu0 0
  %202 = vmatpush1.bf16.msra.mxu0 0
  %203 = vmatprep.subr.bf16.mxu0 0
  %204 = vmatpush1.bf16.msra.mxu0 0
  %205 = vmatprep.subr.bf16.mxu0 0
  %206 = vmatpush1.bf16.msra.mxu0 0
  %207 = vmatprep.subr.bf16.mxu0 0
  %208 = vmatpush1.bf16.msra.mxu0 0
  %209 = vmatprep.subr.bf16.mxu0 0
  %210 = vmatpush1.bf16.msra.mxu0 0
  %211 = vmatprep.subr.bf16.mxu0 0
  %212 = vmatpush1.bf16.msra.mxu0 0
  %213 = vmatprep.subr.bf16.mxu0 0
  %214 = vmatpush1.bf16.msra.mxu0 0
  %215 = vmatprep.subr.bf16.mxu0 0
  %216 = vmatpush1.bf16.msra.mxu0 0
  %217 = vmatprep.subr.bf16.mxu0 0
  %218 = vmatpush1.bf16.msra.mxu0 0
  %219 = vmatprep.subr.bf16.mxu0 0
  %220 = vmatpush1.bf16.msra.mxu0 0
  %221 = vmatprep.subr.bf16.mxu0 0
  %222 = vmatpush1.bf16.msra.mxu0 0
  %223 = vmatprep.mubr.bf16.mxu0 0
  %224 = vmatmul.mubr.bf16.gmra.mrb[0].mxu0 %v186
  %v225 = vpop.f32.mrb[0].mxu0
  %v226 = vadd.f32 0.0, %v225
  %v227 = vpop.f32.mrb[0].mxu0
  %v228 = vpop.f32.mrb[0].mxu0
  %v229 = vadd.f32 0.0, %v228
  %v230 = vpop.f32.mrb[0].mxu0
  %231 = vmatprep.mubr.bf16.mxu0 0
  %232 = vmatmul.mubr.bf16.gmra.mrb[0].mxu0 %v189
  %v233 = vpop.f32.mrb[0].mxu0
  %v234 = vadd.f32 0.0, %v233
  %v235 = vpop.f32.mrb[0].mxu0
  %v236 = vpop.f32.mrb[0].mxu0
  %v237 = vadd.f32 0.0, %v236
  %v238 = vpop.f32.mrb[0].mxu0
  %239 = vdwg.mxu0
  %241 = vset.pattern.permute.xlu0 0
  %242 = vperm.xlu0 %241, %v51
  %v243 = vpop.permute.xlu0 %242
  %246 = vset.pattern.permute.xlu0 0
  %247 = vperm.xlu0 %246, %v52
  %v248 = vpop.permute.xlu0 %247
  %251 = vset.pattern.permute.xlu0 0
  %252 = vperm.xlu0 %251, %v53
  %v253 = vpop.permute.xlu0 %252
  %256 = vset.pattern.permute.xlu0 0
  %257 = vperm.xlu0 %256, %v54
  %v258 = vpop.permute.xlu0 %257
  %v260 = vmul.f32 %v243, %v139
  %v261 = vmul.f32 %v248, %v140
  %v262 = vmul.f32 %v253, %v141
  %v263 = vmul.f32 %v258, %v142
  %v264 = vadd.f32 %v260, %v226
  %v265 = vadd.f32 %v261, %v229
  %v266 = vadd.f32 %v262, %v234
  %v267 = vadd.f32 %v263, %v237
  %v269 = vlaneseq
  %v270 = vshrl.u32 %v269, 7
  %v271 = vsub.s32 0, %v270
  %v272 = vrot.slane %v171, %v271
  %v274 = vadd.f32 %v264, %v272
  %v275 = vadd.f32 %v265, %v272
  %v276 = vadd.f32 %v266, %v272
  %v277 = vadd.f32 %v267, %v272
  %v278 = vld [vmem:[%s3] sm:$0x1]
  %v279 = vld [vmem:[%s4] sm:$0x1]
  %v280 = vmul.f32 %v274, %v274
  %v281 = vmul.f32 %v275, %v275
  %v282 = vmul.f32 %v276, %v276
  %v283 = vmul.f32 %v277, %v277
  %288 = vrot.lane.b32.xlu0 %v280, 32
  %v289 = vpop.permute.xlu0 %288
  %290 = vrot.lane.b32.xlu0 %v281, 32
  %v291 = vpop.permute.xlu0 %290
  %292 = vrot.lane.b32.xlu0 %v282, 32
  %v293 = vpop.permute.xlu0 %292
  %294 = vrot.lane.b32.xlu0 %v283, 32
  %v295 = vpop.permute.xlu0 %294
  %v300 = vsel %vm184, %v274, %v289
  %v301 = vsel %vm184, %v275, %v291
  %v302 = vsel %vm184, %v276, %v293
  %v303 = vsel %vm184, %v277, %v295
  %vm304 = vcmask 523264
  %v305 = vsel %vm304, %v300, 0.0
  %v306 = vsel %vm304, %v301, 0.0
  %v307 = vadd.f32 %v305, %v306
  %v308 = vsel %vm304, %v302, 0.0
  %v309 = vadd.f32 %v307, %v308
  %v310 = vsel %vm304, %v303, 0.0
  %v311 = vadd.f32 %v309, %v310
  %v312 = vrot.slane %v311, 4
  %v313 = vadd.f32 %v311, %v312
  %v314 = vrot.slane %v313, 2
  %v315 = vadd.f32 %v313, %v314
  %v316 = vrot.slane %v315, 1
  %v317 = vadd.f32 %v315, %v316
  %v318 = vmul.f32 %v317, 0.03125
  %v319 = vmul.f32 %v318, %v318
  %321 = vrot.lane.b32.xlu0 %v319, 32
  %v322 = vpop.permute.xlu0 %321
  %v324 = vsub.f32 %v318, %v322
  %v325 = vsub.f32 %v274, %v318
  %v326 = vsub.f32 %v275, %v318
  %v327 = vsub.f32 %v276, %v318
  %v328 = vsub.f32 %v277, %v318
  %v329 = vadd.f32 %v324, 1e-05
  %v330 = vrsqrt.pop %v329
  %v331 = vlaneseq
  %v332 = vshrl.u32 %v331, 7
  %v333 = vsub.s32 0, %v332
  %v334 = vrot.slane %v330, %v333
  %336 = vrot.lane.b32.xlu0 %v334, 96
  %v337 = vpop.permute.xlu0 %336
  %v339 = vmul.f32 %v325, %v337
  %v340 = vmul.f32 %v326, %v337
  %v341 = vmul.f32 %v327, %v337
  %v342 = vmul.f32 %v328, %v337
  %v344 = vlaneseq
  %v345 = vshrl.u32 %v344, 7
  %v346 = vsub.s32 0, %v345
  %v347 = vrot.slane %v278, %v346
  %v349 = vmul.f32 %v339, %v347
  %v350 = vmul.f32 %v340, %v347
  %v351 = vmul.f32 %v341, %v347
  %v352 = vmul.f32 %v342, %v347
  %v354 = vlaneseq
  %v355 = vshrl.u32 %v354, 7
  %v356 = vsub.s32 0, %v355
  %v357 = vrot.slane %v279, %v356
  %v359 = vadd.f32 %v349, %v357
  %v360 = vadd.f32 %v350, %v357
  %v361 = vadd.f32 %v351, %v357
  %v362 = vadd.f32 %v352, %v357
  %v363 = vmax.f32 %v359, 0.0
  %v364 = vmax.f32 %v360, 0.0
  %v365 = vmax.f32 %v361, 0.0
  %v366 = vmax.f32 %v362, 0.0
  %v367 = vld [vmem:[%s5] sm:$0xf]
  %v368 = vld [vmem:[%s5 + $0x4] sm:$0xf]
  %v369 = vld [vmem:[%s5 + $0x8] sm:$0xf]
  %v370 = vld [vmem:[%s5 + $0xc] sm:$0xf]
  %s371 = scalar_lea.vmem %s5, 16
  %v372 = vld [vmem:[%s371] sm:$0xf]
  %v373 = vld [vmem:[%s371 + $0x4] sm:$0xf]
  %v374 = vld [vmem:[%s371 + $0x8] sm:$0xf]
  %v375 = vld [vmem:[%s371 + $0xc] sm:$0xf]
  %v376 = vld [vmem:[%s6] sm:$0x1]
  %v377 = vpack.c.bf16 %v364, %v363
  %v378 = vpack.c.bf16 %v366, %v365
  %v383 = vunpack.c.l.b16 %v367
  %v384 = vunpack.c.l.b16 %v368
  %v385 = vunpack.c.l.b16 %v369
  %v386 = vunpack.c.l.b16 %v370
  %v387 = vpack.c.b16 %v384, %v383
  %v388 = vpack.c.b16 %v386, %v385
  %v392 = vsel %vm184, %v377, 0
  %v395 = vsel %vm184, %v378, 0
  %397 = vmatprep.subr.bf16.mxu0 0
  %398 = vmatpush1.bf16.msra.mxu0 %v387
  %399 = vmatprep.subr.bf16.mxu0 0
  %400 = vmatpush1.bf16.msra.mxu0 %v388
  %401 = vmatprep.subr.bf16.mxu0 0
  %402 = vmatpush1.bf16.msra.mxu0 0
  %403 = vmatprep.subr.bf16.mxu0 0
  %404 = vmatpush1.bf16.msra.mxu0 0
  %405 = vmatprep.subr.bf16.mxu0 0
  %406 = vmatpush1.bf16.msra.mxu0 0
  %407 = vmatprep.subr.bf16.mxu0 0
  %408 = vmatpush1.bf16.msra.mxu0 0
  %409 = vmatprep.subr.bf16.mxu0 0
  %410 = vmatpush1.bf16.msra.mxu0 0
  %411 = vmatprep.subr.bf16.mxu0 0
  %412 = vmatpush1.bf16.msra.mxu0 0
  %413 = vmatprep.subr.bf16.mxu0 0
  %414 = vmatpush1.bf16.msra.mxu0 0
  %415 = vmatprep.subr.bf16.mxu0 0
  %416 = vmatpush1.bf16.msra.mxu0 0
  %417 = vmatprep.subr.bf16.mxu0 0
  %418 = vmatpush1.bf16.msra.mxu0 0
  %419 = vmatprep.subr.bf16.mxu0 0
  %420 = vmatpush1.bf16.msra.mxu0 0
  %421 = vmatprep.subr.bf16.mxu0 0
  %422 = vmatpush1.bf16.msra.mxu0 0
  %423 = vmatprep.subr.bf16.mxu0 0
  %424 = vmatpush1.bf16.msra.mxu0 0
  %425 = vmatprep.subr.bf16.mxu0 0
  %426 = vmatpush1.bf16.msra.mxu0 0
  %427 = vmatprep.subr.bf16.mxu0 0
  %428 = vmatpush1.bf16.msra.mxu0 0
  %429 = vmatprep.mubr.bf16.mxu0 0
  %430 = vmatmul.mubr.bf16.gmra.mrb[0].mxu0 %v392
  %v431 = vpop.f32.mrb[0].mxu0
  %v432 = vadd.f32 0.0, %v431
  %v433 = vpop.f32.mrb[0].mxu0
  %v434 = vpop.f32.mrb[0].mxu0
  %v435 = vadd.f32 0.0, %v434
  %v436 = vpop.f32.mrb[0].mxu0
  %437 = vmatprep.mubr.bf16.mxu0 0
  %438 = vmatmul.mubr.bf16.gmra.mrb[0].mxu0 %v395
  %v439 = vpop.f32.mrb[0].mxu0
  %v440 = vadd.f32 0.0, %v439
  %v441 = vpop.f32.mrb[0].mxu0
  %v442 = vpop.f32.mrb[0].mxu0
  %v443 = vadd.f32 0.0, %v442
  %v444 = vpop.f32.mrb[0].mxu0
  %445 = vdwg.mxu0
  %v450 = vunpack.c.l.b16 %v372
  %v451 = vunpack.c.l.b16 %v373
  %v452 = vunpack.c.l.b16 %v374
  %v453 = vunpack.c.l.b16 %v375
  %v454 = vpack.c.b16 %v451, %v450
  %v455 = vpack.c.b16 %v453, %v452
  %458 = vmatprep.subr.bf16.mxu0 0
  %459 = vmatpush1.bf16.msra.mxu0 %v454
  %460 = vmatprep.subr.bf16.mxu0 0
  %461 = vmatpush1.bf16.msra.mxu0 %v455
  %462 = vmatprep.subr.bf16.mxu0 0
  %463 = vmatpush1.bf16.msra.mxu0 0
  %464 = vmatprep.subr.bf16.mxu0 0
  %465 = vmatpush1.bf16.msra.mxu0 0
  %466 = vmatprep.subr.bf16.mxu0 0
  %467 = vmatpush1.bf16.msra.mxu0 0
  %468 = vmatprep.subr.bf16.mxu0 0
  %469 = vmatpush1.bf16.msra.mxu0 0
  %470 = vmatprep.subr.bf16.mxu0 0
  %471 = vmatpush1.bf16.msra.mxu0 0
  %472 = vmatprep.subr.bf16.mxu0 0
  %473 = vmatpush1.bf16.msra.mxu0 0
  %474 = vmatprep.subr.bf16.mxu0 0
  %475 = vmatpush1.bf16.msra.mxu0 0
  %476 = vmatprep.subr.bf16.mxu0 0
  %477 = vmatpush1.bf16.msra.mxu0 0
  %478 = vmatprep.subr.bf16.mxu0 0
  %479 = vmatpush1.bf16.msra.mxu0 0
  %480 = vmatprep.subr.bf16.mxu0 0
  %481 = vmatpush1.bf16.msra.mxu0 0
  %482 = vmatprep.subr.bf16.mxu0 0
  %483 = vmatpush1.bf16.msra.mxu0 0
  %484 = vmatprep.subr.bf16.mxu0 0
  %485 = vmatpush1.bf16.msra.mxu0 0
  %486 = vmatprep.subr.bf16.mxu0 0
  %487 = vmatpush1.bf16.msra.mxu0 0
  %488 = vmatprep.subr.bf16.mxu0 0
  %489 = vmatpush1.bf16.msra.mxu0 0
  %490 = vmatprep.mubr.bf16.mxu0 0
  %491 = vmatmul.mubr.bf16.gmra.mrb[0].mxu0 %v392
  %v492 = vpop.f32.mrb[0].mxu0
  %v493 = vadd.f32 0.0, %v492
  %v494 = vpop.f32.mrb[0].mxu0
  %v495 = vpop.f32.mrb[0].mxu0
  %v496 = vadd.f32 0.0, %v495
  %v497 = vpop.f32.mrb[0].mxu0
  %498 = vmatprep.mubr.bf16.mxu0 0
  %499 = vmatmul.mubr.bf16.gmra.mrb[0].mxu0 %v395
  %v500 = vpop.f32.mrb[0].mxu0
  %v501 = vadd.f32 0.0, %v500
  %v502 = vpop.f32.mrb[0].mxu0
  %v503 = vpop.f32.mrb[0].mxu0
  %v504 = vadd.f32 0.0, %v503
  %v505 = vpop.f32.mrb[0].mxu0
  %506 = vdwg.mxu0
  %v507 = vpack.c.bf16 %v496, %v493
  %v508 = vpack.c.bf16 %v504, %v501
  %509 = vmatprep.subr.bf16.mxu0 0
  %510 = vmatpush1.bf16.msra.mxu0 %v507
  %511 = vmatprep.subr.bf16.mxu0 0
  %512 = vmatpush1.bf16.msra.mxu0 %v508
  %513 = vmatprep.subr.bf16.mxu0 0
  %514 = vmatpush1.bf16.msra.mxu0 0
  %515 = vmatprep.subr.bf16.mxu0 0
  %516 = vmatpush1.bf16.msra.mxu0 0
  %517 = vmatprep.subr.bf16.mxu0 0
  %518 = vmatpush1.bf16.msra.mxu0 0
  %519 = vmatprep.subr.bf16.mxu0 0
  %520 = vmatpush1.bf16.msra.mxu0 0
  %521 = vmatprep.subr.bf16.mxu0 0
  %522 = vmatpush1.bf16.msra.mxu0 0
  %523 = vmatprep.subr.bf16.mxu0 0
  %524 = vmatpush1.bf16.msra.mxu0 0
  %525 = vmatprep.subr.bf16.mxu0 0
  %526 = vmatpush1.bf16.msra.mxu0 0
  %527 = vmatprep.subr.bf16.mxu0 0
  %528 = vmatpush1.bf16.msra.mxu0 0
  %529 = vmatprep.subr.bf16.mxu0 0
  %530 = vmatpush1.bf16.msra.mxu0 0
  %531 = vmatprep.subr.bf16.mxu0 0
  %532 = vmatpush1.bf16.msra.mxu0 0
  %533 = vmatprep.subr.bf16.mxu0 0
  %534 = vmatpush1.bf16.msra.mxu0 0
  %535 = vmatprep.subr.bf16.mxu0 0
  %536 = vmatpush1.bf16.msra.mxu0 0
  %537 = vmatprep.subr.bf16.mxu0 0
  %538 = vmatpush1.bf16.msra.mxu0 0
  %539 = vmatprep.subr.bf16.mxu0 0
  %540 = vmatpush1.bf16.msra.mxu0 0
  %541 = vmatprep.mubr.bf16.mxu0 0
  %542 = vmatmul.mubr.bf16.gmra.mrb[0].mxu0 %v186
  %v543 = vpop.f32.mrb[0].mxu0
  %v544 = vadd.f32 0.0, %v543
  %v545 = vpop.f32.mrb[0].mxu0
  %v546 = vpop.f32.mrb[0].mxu0
  %v547 = vadd.f32 0.0, %v546
  %v548 = vpop.f32.mrb[0].mxu0
  %549 = vmatprep.mubr.bf16.mxu0 0
  %550 = vmatmul.mubr.bf16.gmra.mrb[0].mxu0 %v189
  %v551 = vpop.f32.mrb[0].mxu0
  %v552 = vadd.f32 0.0, %v551
  %v553 = vpop.f32.mrb[0].mxu0
  %v554 = vpop.f32.mrb[0].mxu0
  %v555 = vadd.f32 0.0, %v554
  %v556 = vpop.f32.mrb[0].mxu0
  %557 = vdwg.mxu0
  %v558 = vmul.f32 %v243, %v432
  %v559 = vmul.f32 %v248, %v435
  %v560 = vmul.f32 %v253, %v440
  %v561 = vmul.f32 %v258, %v443
  %v562 = vadd.f32 %v558, %v544
  %v563 = vadd.f32 %v559, %v547
  %v564 = vadd.f32 %v560, %v552
  %v565 = vadd.f32 %v561, %v555
  %v567 = vlaneseq
  %v568 = vshrl.u32 %v567, 7
  %v569 = vsub.s32 0, %v568
  %v570 = vrot.slane %v376, %v569
  %v572 = vadd.f32 %v562, %v570
  %v573 = vadd.f32 %v563, %v570
  %v574 = vadd.f32 %v564, %v570
  %v575 = vadd.f32 %v565, %v570
  %v576 = vld [vmem:[%s7] sm:$0x1]
  %v577 = vld [vmem:[%s8] sm:$0x1]
  %v578 = vmul.f32 %v572, %v572
  %v579 = vmul.f32 %v573, %v573
  %v580 = vmul.f32 %v574, %v574
  %v581 = vmul.f32 %v575, %v575
  %586 = vrot.lane.b32.xlu0 %v578, 32
  %v587 = vpop.permute.xlu0 %586
  %588 = vrot.lane.b32.xlu0 %v579, 32
  %v589 = vpop.permute.xlu0 %588
  %590 = vrot.lane.b32.xlu0 %v580, 32
  %v591 = vpop.permute.xlu0 %590
  %592 = vrot.lane.b32.xlu0 %v581, 32
  %v593 = vpop.permute.xlu0 %592
  %v598 = vsel %vm184, %v572, %v587
  %v599 = vsel %vm184, %v573, %v589
  %v600 = vsel %vm184, %v574, %v591
  %v601 = vsel %vm184, %v575, %v593
  %v602 = vsel %vm304, %v598, 0.0
  %v603 = vsel %vm304, %v599, 0.0
  %v604 = vadd.f32 %v602, %v603
  %v605 = vsel %vm304, %v600, 0.0
  %v606 = vadd.f32 %v604, %v605
  %v607 = vsel %vm304, %v601, 0.0
  %v608 = vadd.f32 %v606, %v607
  %v609 = vrot.slane %v608, 4
  %v610 = vadd.f32 %v608, %v609
  %v611 = vrot.slane %v610, 2
  %v612 = vadd.f32 %v610, %v611
  %v613 = vrot.slane %v612, 1
  %v614 = vadd.f32 %v612, %v613
  %v615 = vmul.f32 %v614, 0.03125
  %v616 = vmul.f32 %v615, %v615
  %618 = vrot.lane.b32.xlu0 %v616, 32
  %v619 = vpop.permute.xlu0 %618
  %v621 = vsub.f32 %v615, %v619
  %v622 = vsub.f32 %v572, %v615
  %v623 = vsub.f32 %v573, %v615
  %v624 = vsub.f32 %v574, %v615
  %v625 = vsub.f32 %v575, %v615
  %v626 = vadd.f32 %v621, 1e-05
  %v627 = vrsqrt.pop %v626
  %v628 = vlaneseq
  %v629 = vshrl.u32 %v628, 7
  %v630 = vsub.s32 0, %v629
  %v631 = vrot.slane %v627, %v630
  %633 = vrot.lane.b32.xlu0 %v631, 96
  %v634 = vpop.permute.xlu0 %633
  %v636 = vmul.f32 %v622, %v634
  %v637 = vmul.f32 %v623, %v634
  %v638 = vmul.f32 %v624, %v634
  %v639 = vmul.f32 %v625, %v634
  %v641 = vlaneseq
  %v642 = vshrl.u32 %v641, 7
  %v643 = vsub.s32 0, %v642
  %v644 = vrot.slane %v576, %v643
  %v646 = vmul.f32 %v636, %v644
  %v647 = vmul.f32 %v637, %v644
  %v648 = vmul.f32 %v638, %v644
  %v649 = vmul.f32 %v639, %v644
  %v651 = vlaneseq
  %v652 = vshrl.u32 %v651, 7
  %v653 = vsub.s32 0, %v652
  %v654 = vrot.slane %v577, %v653
  %v656 = vadd.f32 %v646, %v654
  %v657 = vadd.f32 %v647, %v654
  %v658 = vadd.f32 %v648, %v654
  %v659 = vadd.f32 %v649, %v654
  %v660 = vmax.f32 %v656, 0.0
  %v661 = vmax.f32 %v657, 0.0
  %v662 = vmax.f32 %v658, 0.0
  %v663 = vmax.f32 %v659, 0.0
  %s664 = scalar_lea.vmem %s5, 32
  %v665 = vld [vmem:[%s664] sm:$0xf]
  %v666 = vld [vmem:[%s664 + $0x4] sm:$0xf]
  %v667 = vld [vmem:[%s664 + $0x8] sm:$0xf]
  %v668 = vld [vmem:[%s664 + $0xc] sm:$0xf]
  %s669 = scalar_lea.vmem %s5, 48
  %v670 = vld [vmem:[%s669] sm:$0xf]
  %v671 = vld [vmem:[%s669 + $0x4] sm:$0xf]
  %v672 = vld [vmem:[%s669 + $0x8] sm:$0xf]
  %v673 = vld [vmem:[%s669 + $0xc] sm:$0xf]
  %s674 = scalar_lea.vmem %s6, 1
  %v675 = vld [vmem:[%s674] sm:$0x1]
  %v676 = vpack.c.bf16 %v661, %v660
  %v677 = vpack.c.bf16 %v663, %v662
  %v682 = vunpack.c.l.b16 %v665
  %v683 = vunpack.c.l.b16 %v666
  %v684 = vunpack.c.l.b16 %v667
  %v685 = vunpack.c.l.b16 %v668
  %v686 = vpack.c.b16 %v683, %v682
  %v687 = vpack.c.b16 %v685, %v684
  %v691 = vsel %vm184, %v676, 0
  %v694 = vsel %vm184, %v677, 0
  %696 = vmatprep.subr.bf16.mxu0 0
  %697 = vmatpush1.bf16.msra.mxu0 %v686
  %698 = vmatprep.subr.bf16.mxu0 0
  %699 = vmatpush1.bf16.msra.mxu0 %v687
  %700 = vmatprep.subr.bf16.mxu0 0
  %701 = vmatpush1.bf16.msra.mxu0 0
  %702 = vmatprep.subr.bf16.mxu0 0
  %703 = vmatpush1.bf16.msra.mxu0 0
  %704 = vmatprep.subr.bf16.mxu0 0
  %705 = vmatpush1.bf16.msra.mxu0 0
  %706 = vmatprep.subr.bf16.mxu0 0
  %707 = vmatpush1.bf16.msra.mxu0 0
  %708 = vmatprep.subr.bf16.mxu0 0
  %709 = vmatpush1.bf16.msra.mxu0 0
  %710 = vmatprep.subr.bf16.mxu0 0
  %711 = vmatpush1.bf16.msra.mxu0 0
  %712 = vmatprep.subr.bf16.mxu0 0
  %713 = vmatpush1.bf16.msra.mxu0 0
  %714 = vmatprep.subr.bf16.mxu0 0
  %715 = vmatpush1.bf16.msra.mxu0 0
  %716 = vmatprep.subr.bf16.mxu0 0
  %717 = vmatpush1.bf16.msra.mxu0 0
  %718 = vmatprep.subr.bf16.mxu0 0
  %719 = vmatpush1.bf16.msra.mxu0 0
  %720 = vmatprep.subr.bf16.mxu0 0
  %721 = vmatpush1.bf16.msra.mxu0 0
  %722 = vmatprep.subr.bf16.mxu0 0
  %723 = vmatpush1.bf16.msra.mxu0 0
  %724 = vmatprep.subr.bf16.mxu0 0
  %725 = vmatpush1.bf16.msra.mxu0 0
  %726 = vmatprep.subr.bf16.mxu0 0
  %727 = vmatpush1.bf16.msra.mxu0 0
  %728 = vmatprep.mubr.bf16.mxu0 0
  %729 = vmatmul.mubr.bf16.gmra.mrb[0].mxu0 %v691
  %v730 = vpop.f32.mrb[0].mxu0
  %v731 = vadd.f32 0.0, %v730
  %v732 = vpop.f32.mrb[0].mxu0
  %v733 = vpop.f32.mrb[0].mxu0
  %v734 = vadd.f32 0.0, %v733
  %v735 = vpop.f32.mrb[0].mxu0
  %736 = vmatprep.mubr.bf16.mxu0 0
  %737 = vmatmul.mubr.bf16.gmra.mrb[0].mxu0 %v694
  %v738 = vpop.f32.mrb[0].mxu0
  %v739 = vadd.f32 0.0, %v738
  %v740 = vpop.f32.mrb[0].mxu0
  %v741 = vpop.f32.mrb[0].mxu0
  %v742 = vadd.f32 0.0, %v741
  %v743 = vpop.f32.mrb[0].mxu0
  %744 = vdwg.mxu0
  %v749 = vunpack.c.l.b16 %v670
  %v750 = vunpack.c.l.b16 %v671
  %v751 = vunpack.c.l.b16 %v672
  %v752 = vunpack.c.l.b16 %v673
  %v753 = vpack.c.b16 %v750, %v749
  %v754 = vpack.c.b16 %v752, %v751
  %757 = vmatprep.subr.bf16.mxu0 0
  %758 = vmatpush1.bf16.msra.mxu0 %v753
  %759 = vmatprep.subr.bf16.mxu0 0
  %760 = vmatpush1.bf16.msra.mxu0 %v754
  %761 = vmatprep.subr.bf16.mxu0 0
  %762 = vmatpush1.bf16.msra.mxu0 0
  %763 = vmatprep.subr.bf16.mxu0 0
  %764 = vmatpush1.bf16.msra.mxu0 0
  %765 = vmatprep.subr.bf16.mxu0 0
  %766 = vmatpush1.bf16.msra.mxu0 0
  %767 = vmatprep.subr.bf16.mxu0 0
  %768 = vmatpush1.bf16.msra.mxu0 0
  %769 = vmatprep.subr.bf16.mxu0 0
  %770 = vmatpush1.bf16.msra.mxu0 0
  %771 = vmatprep.subr.bf16.mxu0 0
  %772 = vmatpush1.bf16.msra.mxu0 0
  %773 = vmatprep.subr.bf16.mxu0 0
  %774 = vmatpush1.bf16.msra.mxu0 0
  %775 = vmatprep.subr.bf16.mxu0 0
  %776 = vmatpush1.bf16.msra.mxu0 0
  %777 = vmatprep.subr.bf16.mxu0 0
  %778 = vmatpush1.bf16.msra.mxu0 0
  %779 = vmatprep.subr.bf16.mxu0 0
  %780 = vmatpush1.bf16.msra.mxu0 0
  %781 = vmatprep.subr.bf16.mxu0 0
  %782 = vmatpush1.bf16.msra.mxu0 0
  %783 = vmatprep.subr.bf16.mxu0 0
  %784 = vmatpush1.bf16.msra.mxu0 0
  %785 = vmatprep.subr.bf16.mxu0 0
  %786 = vmatpush1.bf16.msra.mxu0 0
  %787 = vmatprep.subr.bf16.mxu0 0
  %788 = vmatpush1.bf16.msra.mxu0 0
  %789 = vmatprep.mubr.bf16.mxu0 0
  %790 = vmatmul.mubr.bf16.gmra.mrb[0].mxu0 %v691
  %v791 = vpop.f32.mrb[0].mxu0
  %v792 = vadd.f32 0.0, %v791
  %v793 = vpop.f32.mrb[0].mxu0
  %v794 = vpop.f32.mrb[0].mxu0
  %v795 = vadd.f32 0.0, %v794
  %v796 = vpop.f32.mrb[0].mxu0
  %797 = vmatprep.mubr.bf16.mxu0 0
  %798 = vmatmul.mubr.bf16.gmra.mrb[0].mxu0 %v694
  %v799 = vpop.f32.mrb[0].mxu0
  %v800 = vadd.f32 0.0, %v799
  %v801 = vpop.f32.mrb[0].mxu0
  %v802 = vpop.f32.mrb[0].mxu0
  %v803 = vadd.f32 0.0, %v802
  %v804 = vpop.f32.mrb[0].mxu0
  %805 = vdwg.mxu0
  %v806 = vpack.c.bf16 %v795, %v792
  %v807 = vpack.c.bf16 %v803, %v800
  %808 = vmatprep.subr.bf16.mxu0 0
  %809 = vmatpush1.bf16.msra.mxu0 %v806
  %810 = vmatprep.subr.bf16.mxu0 0
  %811 = vmatpush1.bf16.msra.mxu0 %v807
  %812 = vmatprep.subr.bf16.mxu0 0
  %813 = vmatpush1.bf16.msra.mxu0 0
  %814 = vmatprep.subr.bf16.mxu0 0
  %815 = vmatpush1.bf16.msra.mxu0 0
  %816 = vmatprep.subr.bf16.mxu0 0
  %817 = vmatpush1.bf16.msra.mxu0 0
  %818 = vmatprep.subr.bf16.mxu0 0
  %819 = vmatpush1.bf16.msra.mxu0 0
  %820 = vmatprep.subr.bf16.mxu0 0
  %821 = vmatpush1.bf16.msra.mxu0 0
  %822 = vmatprep.subr.bf16.mxu0 0
  %823 = vmatpush1.bf16.msra.mxu0 0
  %824 = vmatprep.subr.bf16.mxu0 0
  %825 = vmatpush1.bf16.msra.mxu0 0
  %826 = vmatprep.subr.bf16.mxu0 0
  %827 = vmatpush1.bf16.msra.mxu0 0
  %828 = vmatprep.subr.bf16.mxu0 0
  %829 = vmatpush1.bf16.msra.mxu0 0
  %830 = vmatprep.subr.bf16.mxu0 0
  %831 = vmatpush1.bf16.msra.mxu0 0
  %832 = vmatprep.subr.bf16.mxu0 0
  %833 = vmatpush1.bf16.msra.mxu0 0
  %834 = vmatprep.subr.bf16.mxu0 0
  %835 = vmatpush1.bf16.msra.mxu0 0
  %836 = vmatprep.subr.bf16.mxu0 0
  %837 = vmatpush1.bf16.msra.mxu0 0
  %838 = vmatprep.subr.bf16.mxu0 0
  %839 = vmatpush1.bf16.msra.mxu0 0
  %840 = vmatprep.mubr.bf16.mxu0 0
  %841 = vmatmul.mubr.bf16.gmra.mrb[0].mxu0 %v186
  %v842 = vpop.f32.mrb[0].mxu0
  %v843 = vadd.f32 0.0, %v842
  %v844 = vpop.f32.mrb[0].mxu0
  %v845 = vpop.f32.mrb[0].mxu0
  %v846 = vadd.f32 0.0, %v845
  %v847 = vpop.f32.mrb[0].mxu0
  %848 = vmatprep.mubr.bf16.mxu0 0
  %849 = vmatmul.mubr.bf16.gmra.mrb[0].mxu0 %v189
  %v850 = vpop.f32.mrb[0].mxu0
  %v851 = vadd.f32 0.0, %v850
  %v852 = vpop.f32.mrb[0].mxu0
  %v853 = vpop.f32.mrb[0].mxu0
  %v854 = vadd.f32 0.0, %v853
  %v855 = vpop.f32.mrb[0].mxu0
  %856 = vdwg.mxu0
  %v857 = vmul.f32 %v243, %v731
  %v858 = vmul.f32 %v248, %v734
  %v859 = vmul.f32 %v253, %v739
  %v860 = vmul.f32 %v258, %v742
  %v861 = vadd.f32 %v857, %v843
  %v862 = vadd.f32 %v858, %v846
  %v863 = vadd.f32 %v859, %v851
  %v864 = vadd.f32 %v860, %v854
  %v866 = vlaneseq
  %v867 = vshrl.u32 %v866, 7
  %v868 = vsub.s32 0, %v867
  %v869 = vrot.slane %v675, %v868
  %v871 = vadd.f32 %v861, %v869
  %v872 = vadd.f32 %v862, %v869
  %v873 = vadd.f32 %v863, %v869
  %v874 = vadd.f32 %v864, %v869
  %s875 = scalar_lea.vmem %s7, 1
  %v876 = vld [vmem:[%s875] sm:$0x1]
  %s877 = scalar_lea.vmem %s8, 1
  %v878 = vld [vmem:[%s877] sm:$0x1]
  %v879 = vmul.f32 %v871, %v871
  %v880 = vmul.f32 %v872, %v872
  %v881 = vmul.f32 %v873, %v873
  %v882 = vmul.f32 %v874, %v874
  %887 = vrot.lane.b32.xlu0 %v879, 32
  %v888 = vpop.permute.xlu0 %887
  %889 = vrot.lane.b32.xlu0 %v880, 32
  %v890 = vpop.permute.xlu0 %889
  %891 = vrot.lane.b32.xlu0 %v881, 32
  %v892 = vpop.permute.xlu0 %891
  %893 = vrot.lane.b32.xlu0 %v882, 32
  %v894 = vpop.permute.xlu0 %893
  %v899 = vsel %vm184, %v871, %v888
  %v900 = vsel %vm184, %v872, %v890
  %v901 = vsel %vm184, %v873, %v892
  %v902 = vsel %vm184, %v874, %v894
  %v903 = vsel %vm304, %v899, 0.0
  %v904 = vsel %vm304, %v900, 0.0
  %v905 = vadd.f32 %v903, %v904
  %v906 = vsel %vm304, %v901, 0.0
  %v907 = vadd.f32 %v905, %v906
  %v908 = vsel %vm304, %v902, 0.0
  %v909 = vadd.f32 %v907, %v908
  %v910 = vrot.slane %v909, 4
  %v911 = vadd.f32 %v909, %v910
  %v912 = vrot.slane %v911, 2
  %v913 = vadd.f32 %v911, %v912
  %v914 = vrot.slane %v913, 1
  %v915 = vadd.f32 %v913, %v914
  %v916 = vmul.f32 %v915, 0.03125
  %v917 = vmul.f32 %v916, %v916
  %919 = vrot.lane.b32.xlu0 %v917, 32
  %v920 = vpop.permute.xlu0 %919
  %v922 = vsub.f32 %v916, %v920
  %v923 = vsub.f32 %v871, %v916
  %v924 = vsub.f32 %v872, %v916
  %v925 = vsub.f32 %v873, %v916
  %v926 = vsub.f32 %v874, %v916
  %v927 = vadd.f32 %v922, 1e-05
  %v928 = vrsqrt.pop %v927
  %v929 = vlaneseq
  %v930 = vshrl.u32 %v929, 7
  %v931 = vsub.s32 0, %v930
  %v932 = vrot.slane %v928, %v931
  %934 = vrot.lane.b32.xlu0 %v932, 96
  %v935 = vpop.permute.xlu0 %934
  %v937 = vmul.f32 %v923, %v935
  %v938 = vmul.f32 %v924, %v935
  %v939 = vmul.f32 %v925, %v935
  %v940 = vmul.f32 %v926, %v935
  %v942 = vlaneseq
  %v943 = vshrl.u32 %v942, 7
  %v944 = vsub.s32 0, %v943
  %v945 = vrot.slane %v876, %v944
  %v947 = vmul.f32 %v937, %v945
  %v948 = vmul.f32 %v938, %v945
  %v949 = vmul.f32 %v939, %v945
  %v950 = vmul.f32 %v940, %v945
  %v952 = vlaneseq
  %v953 = vshrl.u32 %v952, 7
  %v954 = vsub.s32 0, %v953
  %v955 = vrot.slane %v878, %v954
  %v957 = vadd.f32 %v947, %v955
  %v958 = vadd.f32 %v948, %v955
  %v959 = vadd.f32 %v949, %v955
  %v960 = vadd.f32 %v950, %v955
  %v961 = vmax.f32 %v957, 0.0
  %v962 = vmax.f32 %v958, 0.0
  %v963 = vmax.f32 %v959, 0.0
  %v964 = vmax.f32 %v960, 0.0
  %v965 = vadd.f32 %v363, %v961
  %v966 = vadd.f32 %v364, %v962
  %v967 = vadd.f32 %v365, %v963
  %v968 = vadd.f32 %v366, %v964
  %s969 = scalar_lea.vmem %s5, 64
  %v970 = vld [vmem:[%s969] sm:$0xf]
  %v971 = vld [vmem:[%s969 + $0x4] sm:$0xf]
  %v972 = vld [vmem:[%s969 + $0x8] sm:$0xf]
  %v973 = vld [vmem:[%s969 + $0xc] sm:$0xf]
  %s974 = scalar_lea.vmem %s5, 80
  %v975 = vld [vmem:[%s974] sm:$0xf]
  %v976 = vld [vmem:[%s974 + $0x4] sm:$0xf]
  %v977 = vld [vmem:[%s974 + $0x8] sm:$0xf]
  %v978 = vld [vmem:[%s974 + $0xc] sm:$0xf]
  %s979 = scalar_lea.vmem %s6, 2
  %v980 = vld [vmem:[%s979] sm:$0x1]
  %v981 = vpack.c.bf16 %v966, %v965
  %v982 = vpack.c.bf16 %v968, %v967
  %v987 = vunpack.c.l.b16 %v970
  %v988 = vunpack.c.l.b16 %v971
  %v989 = vunpack.c.l.b16 %v972
  %v990 = vunpack.c.l.b16 %v973
  %v991 = vpack.c.b16 %v988, %v987
  %v992 = vpack.c.b16 %v990, %v989
  %v996 = vsel %vm184, %v981, 0
  %v999 = vsel %vm184, %v982, 0
  %1001 = vmatprep.subr.bf16.mxu0 0
  %1002 = vmatpush1.bf16.msra.mxu0 %v991
  %1003 = vmatprep.subr.bf16.mxu0 0
  %1004 = vmatpush1.bf16.msra.mxu0 %v992
  %1005 = vmatprep.subr.bf16.mxu0 0
  %1006 = vmatpush1.bf16.msra.mxu0 0
  %1007 = vmatprep.subr.bf16.mxu0 0
  %1008 = vmatpush1.bf16.msra.mxu0 0
  %1009 = vmatprep.subr.bf16.mxu0 0
  %1010 = vmatpush1.bf16.msra.mxu0 0
  %1011 = vmatprep.subr.bf16.mxu0 0
  %1012 = vmatpush1.bf16.msra.mxu0 0
  %1013 = vmatprep.subr.bf16.mxu0 0
  %1014 = vmatpush1.bf16.msra.mxu0 0
  %1015 = vmatprep.subr.bf16.mxu0 0
  %1016 = vmatpush1.bf16.msra.mxu0 0
  %1017 = vmatprep.subr.bf16.mxu0 0
  %1018 = vmatpush1.bf16.msra.mxu0 0
  %1019 = vmatprep.subr.bf16.mxu0 0
  %1020 = vmatpush1.bf16.msra.mxu0 0
  %1021 = vmatprep.subr.bf16.mxu0 0
  %1022 = vmatpush1.bf16.msra.mxu0 0
  %1023 = vmatprep.subr.bf16.mxu0 0
  %1024 = vmatpush1.bf16.msra.mxu0 0
  %1025 = vmatprep.subr.bf16.mxu0 0
  %1026 = vmatpush1.bf16.msra.mxu0 0
  %1027 = vmatprep.subr.bf16.mxu0 0
  %1028 = vmatpush1.bf16.msra.mxu0 0
  %1029 = vmatprep.subr.bf16.mxu0 0
  %1030 = vmatpush1.bf16.msra.mxu0 0
  %1031 = vmatprep.subr.bf16.mxu0 0
  %1032 = vmatpush1.bf16.msra.mxu0 0
  %1033 = vmatprep.mubr.bf16.mxu0 0
  %1034 = vmatmul.mubr.bf16.gmra.mrb[0].mxu0 %v996
  %v1035 = vpop.f32.mrb[0].mxu0
  %v1036 = vadd.f32 0.0, %v1035
  %v1037 = vpop.f32.mrb[0].mxu0
  %v1038 = vpop.f32.mrb[0].mxu0
  %v1039 = vadd.f32 0.0, %v1038
  %v1040 = vpop.f32.mrb[0].mxu0
  %1041 = vmatprep.mubr.bf16.mxu0 0
  %1042 = vmatmul.mubr.bf16.gmra.mrb[0].mxu0 %v999
  %v1043 = vpop.f32.mrb[0].mxu0
  %v1044 = vadd.f32 0.0, %v1043
  %v1045 = vpop.f32.mrb[0].mxu0
  %v1046 = vpop.f32.mrb[0].mxu0
  %v1047 = vadd.f32 0.0, %v1046
  %v1048 = vpop.f32.mrb[0].mxu0
  %1049 = vdwg.mxu0
  %v1054 = vunpack.c.l.b16 %v975
  %v1055 = vunpack.c.l.b16 %v976
  %v1056 = vunpack.c.l.b16 %v977
  %v1057 = vunpack.c.l.b16 %v978
  %v1058 = vpack.c.b16 %v1055, %v1054
  %v1059 = vpack.c.b16 %v1057, %v1056
  %1062 = vmatprep.subr.bf16.mxu0 0
  %1063 = vmatpush1.bf16.msra.mxu0 %v1058
  %1064 = vmatprep.subr.bf16.mxu0 0
  %1065 = vmatpush1.bf16.msra.mxu0 %v1059
  %1066 = vmatprep.subr.bf16.mxu0 0
  %1067 = vmatpush1.bf16.msra.mxu0 0
  %1068 = vmatprep.subr.bf16.mxu0 0
  %1069 = vmatpush1.bf16.msra.mxu0 0
  %1070 = vmatprep.subr.bf16.mxu0 0
  %1071 = vmatpush1.bf16.msra.mxu0 0
  %1072 = vmatprep.subr.bf16.mxu0 0
  %1073 = vmatpush1.bf16.msra.mxu0 0
  %1074 = vmatprep.subr.bf16.mxu0 0
  %1075 = vmatpush1.bf16.msra.mxu0 0
  %1076 = vmatprep.subr.bf16.mxu0 0
  %1077 = vmatpush1.bf16.msra.mxu0 0
  %1078 = vmatprep.subr.bf16.mxu0 0
  %1079 = vmatpush1.bf16.msra.mxu0 0
  %1080 = vmatprep.subr.bf16.mxu0 0
  %1081 = vmatpush1.bf16.msra.mxu0 0
  %1082 = vmatprep.subr.bf16.mxu0 0
  %1083 = vmatpush1.bf16.msra.mxu0 0
  %1084 = vmatprep.subr.bf16.mxu0 0
  %1085 = vmatpush1.bf16.msra.mxu0 0
  %1086 = vmatprep.subr.bf16.mxu0 0
  %1087 = vmatpush1.bf16.msra.mxu0 0
  %1088 = vmatprep.subr.bf16.mxu0 0
  %1089 = vmatpush1.bf16.msra.mxu0 0
  %1090 = vmatprep.subr.bf16.mxu0 0
  %1091 = vmatpush1.bf16.msra.mxu0 0
  %1092 = vmatprep.subr.bf16.mxu0 0
  %1093 = vmatpush1.bf16.msra.mxu0 0
  %1094 = vmatprep.mubr.bf16.mxu0 0
  %1095 = vmatmul.mubr.bf16.gmra.mrb[0].mxu0 %v996
  %v1096 = vpop.f32.mrb[0].mxu0
  %v1097 = vadd.f32 0.0, %v1096
  %v1098 = vpop.f32.mrb[0].mxu0
  %v1099 = vpop.f32.mrb[0].mxu0
  %v1100 = vadd.f32 0.0, %v1099
  %v1101 = vpop.f32.mrb[0].mxu0
  %1102 = vmatprep.mubr.bf16.mxu0 0
  %1103 = vmatmul.mubr.bf16.gmra.mrb[0].mxu0 %v999
  %v1104 = vpop.f32.mrb[0].mxu0
  %v1105 = vadd.f32 0.0, %v1104
  %v1106 = vpop.f32.mrb[0].mxu0
  %v1107 = vpop.f32.mrb[0].mxu0
  %v1108 = vadd.f32 0.0, %v1107
  %v1109 = vpop.f32.mrb[0].mxu0
  %1110 = vdwg.mxu0
  %v1111 = vpack.c.bf16 %v1100, %v1097
  %v1112 = vpack.c.bf16 %v1108, %v1105
  %v1117 = vunpack.c.l.b16 %v63
  %v1118 = vunpack.c.l.b16 %v64
  %v1119 = vunpack.c.l.b16 %v65
  %v1120 = vunpack.c.l.b16 %v66
  %v1121 = vpack.c.b16 %v1118, %v1117
  %v1122 = vpack.c.b16 %v1120, %v1119
  %v1124 = vsel %vm184, %v1121, 0
  %v1127 = vsel %vm184, %v1122, 0
  %1129 = vmatprep.subr.bf16.mxu0 0
  %1130 = vmatpush1.bf16.msra.mxu0 %v1111
  %1131 = vmatprep.subr.bf16.mxu0 0
  %1132 = vmatpush1.bf16.msra.mxu0 %v1112
  %1133 = vmatprep.subr.bf16.mxu0 0
  %1134 = vmatpush1.bf16.msra.mxu0 0
  %1135 = vmatprep.subr.bf16.mxu0 0
  %1136 = vmatpush1.bf16.msra.mxu0 0
  %1137 = vmatprep.subr.bf16.mxu0 0
  %1138 = vmatpush1.bf16.msra.mxu0 0
  %1139 = vmatprep.subr.bf16.mxu0 0
  %1140 = vmatpush1.bf16.msra.mxu0 0
  %1141 = vmatprep.subr.bf16.mxu0 0
  %1142 = vmatpush1.bf16.msra.mxu0 0
  %1143 = vmatprep.subr.bf16.mxu0 0
  %1144 = vmatpush1.bf16.msra.mxu0 0
  %1145 = vmatprep.subr.bf16.mxu0 0
  %1146 = vmatpush1.bf16.msra.mxu0 0
  %1147 = vmatprep.subr.bf16.mxu0 0
  %1148 = vmatpush1.bf16.msra.mxu0 0
  %1149 = vmatprep.subr.bf16.mxu0 0
  %1150 = vmatpush1.bf16.msra.mxu0 0
  %1151 = vmatprep.subr.bf16.mxu0 0
  %1152 = vmatpush1.bf16.msra.mxu0 0
  %1153 = vmatprep.subr.bf16.mxu0 0
  %1154 = vmatpush1.bf16.msra.mxu0 0
  %1155 = vmatprep.subr.bf16.mxu0 0
  %1156 = vmatpush1.bf16.msra.mxu0 0
  %1157 = vmatprep.subr.bf16.mxu0 0
  %1158 = vmatpush1.bf16.msra.mxu0 0
  %1159 = vmatprep.subr.bf16.mxu0 0
  %1160 = vmatpush1.bf16.msra.mxu0 0
  %1161 = vmatprep.mubr.bf16.mxu0 0
  %1162 = vmatmul.mubr.bf16.gmra.mrb[0].mxu0 %v1124
  %v1163 = vpop.f32.mrb[0].mxu0
  %v1164 = vadd.f32 0.0, %v1163
  %v1165 = vpop.f32.mrb[0].mxu0
  %v1166 = vpop.f32.mrb[0].mxu0
  %v1167 = vadd.f32 0.0, %v1166
  %v1168 = vpop.f32.mrb[0].mxu0
  %1169 = vmatprep.mubr.bf16.mxu0 0
  %1170 = vmatmul.mubr.bf16.gmra.mrb[0].mxu0 %v1127
  %v1171 = vpop.f32.mrb[0].mxu0
  %v1172 = vadd.f32 0.0, %v1171
  %v1173 = vpop.f32.mrb[0].mxu0
  %v1174 = vpop.f32.mrb[0].mxu0
  %v1175 = vadd.f32 0.0, %v1174
  %v1176 = vpop.f32.mrb[0].mxu0
  %1177 = vdwg.mxu0
  %1179 = vset.pattern.permute.xlu0 0
  %1180 = vperm.xlu0 %1179, %v59
  %v1181 = vpop.permute.xlu0 %1180
  %1184 = vset.pattern.permute.xlu0 0
  %1185 = vperm.xlu0 %1184, %v60
  %v1186 = vpop.permute.xlu0 %1185
  %1189 = vset.pattern.permute.xlu0 0
  %1190 = vperm.xlu0 %1189, %v61
  %v1191 = vpop.permute.xlu0 %1190
  %1194 = vset.pattern.permute.xlu0 0
  %1195 = vperm.xlu0 %1194, %v62
  %v1196 = vpop.permute.xlu0 %1195
  %v1198 = vmul.f32 %v1181, %v1036
  %v1199 = vmul.f32 %v1186, %v1039
  %v1200 = vmul.f32 %v1191, %v1044
  %v1201 = vmul.f32 %v1196, %v1047
  %v1202 = vadd.f32 %v1198, %v1164
  %v1203 = vadd.f32 %v1199, %v1167
  %v1204 = vadd.f32 %v1200, %v1172
  %v1205 = vadd.f32 %v1201, %v1175
  %v1207 = vlaneseq
  %v1208 = vshrl.u32 %v1207, 7
  %v1209 = vsub.s32 0, %v1208
  %v1210 = vrot.slane %v980, %v1209
  %v1212 = vadd.f32 %v1202, %v1210
  %v1213 = vadd.f32 %v1203, %v1210
  %v1214 = vadd.f32 %v1204, %v1210
  %v1215 = vadd.f32 %v1205, %v1210
  %s1216 = scalar_lea.vmem %s7, 2
  %v1217 = vld [vmem:[%s1216] sm:$0x1]
  %s1218 = scalar_lea.vmem %s8, 2
  %v1219 = vld [vmem:[%s1218] sm:$0x1]
  %v1220 = vmul.f32 %v1212, %v1212
  %v1221 = vmul.f32 %v1213, %v1213
  %v1222 = vmul.f32 %v1214, %v1214
  %v1223 = vmul.f32 %v1215, %v1215
  %1228 = vrot.lane.b32.xlu0 %v1220, 32
  %v1229 = vpop.permute.xlu0 %1228
  %1230 = vrot.lane.b32.xlu0 %v1221, 32
  %v1231 = vpop.permute.xlu0 %1230
  %1232 = vrot.lane.b32.xlu0 %v1222, 32
  %v1233 = vpop.permute.xlu0 %1232
  %1234 = vrot.lane.b32.xlu0 %v1223, 32
  %v1235 = vpop.permute.xlu0 %1234
  %v1240 = vsel %vm184, %v1212, %v1229
  %v1241 = vsel %vm184, %v1213, %v1231
  %v1242 = vsel %vm184, %v1214, %v1233
  %v1243 = vsel %vm184, %v1215, %v1235
  %v1244 = vsel %vm304, %v1240, 0.0
  %v1245 = vsel %vm304, %v1241, 0.0
  %v1246 = vadd.f32 %v1244, %v1245
  %v1247 = vsel %vm304, %v1242, 0.0
  %v1248 = vadd.f32 %v1246, %v1247
  %v1249 = vsel %vm304, %v1243, 0.0
  %v1250 = vadd.f32 %v1248, %v1249
  %v1251 = vrot.slane %v1250, 4
  %v1252 = vadd.f32 %v1250, %v1251
  %v1253 = vrot.slane %v1252, 2
  %v1254 = vadd.f32 %v1252, %v1253
  %v1255 = vrot.slane %v1254, 1
  %v1256 = vadd.f32 %v1254, %v1255
  %v1257 = vmul.f32 %v1256, 0.03125
  %v1258 = vmul.f32 %v1257, %v1257
  %1260 = vrot.lane.b32.xlu0 %v1258, 32
  %v1261 = vpop.permute.xlu0 %1260
  %v1263 = vsub.f32 %v1257, %v1261
  %v1264 = vsub.f32 %v1212, %v1257
  %v1265 = vsub.f32 %v1213, %v1257
  %v1266 = vsub.f32 %v1214, %v1257
  %v1267 = vsub.f32 %v1215, %v1257
  %v1268 = vadd.f32 %v1263, 1e-05
  %v1269 = vrsqrt.pop %v1268
  %v1270 = vlaneseq
  %v1271 = vshrl.u32 %v1270, 7
  %v1272 = vsub.s32 0, %v1271
  %v1273 = vrot.slane %v1269, %v1272
  %1275 = vrot.lane.b32.xlu0 %v1273, 96
  %v1276 = vpop.permute.xlu0 %1275
  %v1278 = vmul.f32 %v1264, %v1276
  %v1279 = vmul.f32 %v1265, %v1276
  %v1280 = vmul.f32 %v1266, %v1276
  %v1281 = vmul.f32 %v1267, %v1276
  %v1283 = vlaneseq
  %v1284 = vshrl.u32 %v1283, 7
  %v1285 = vsub.s32 0, %v1284
  %v1286 = vrot.slane %v1217, %v1285
  %v1288 = vmul.f32 %v1278, %v1286
  %v1289 = vmul.f32 %v1279, %v1286
  %v1290 = vmul.f32 %v1280, %v1286
  %v1291 = vmul.f32 %v1281, %v1286
  %v1293 = vlaneseq
  %v1294 = vshrl.u32 %v1293, 7
  %v1295 = vsub.s32 0, %v1294
  %v1296 = vrot.slane %v1219, %v1295
  %v1298 = vadd.f32 %v1288, %v1296
  %v1299 = vadd.f32 %v1289, %v1296
  %v1300 = vadd.f32 %v1290, %v1296
  %v1301 = vadd.f32 %v1291, %v1296
  %v1302 = vmax.f32 %v1298, 0.0
  %v1303 = vmax.f32 %v1299, 0.0
  %v1304 = vmax.f32 %v1300, 0.0
  %v1305 = vmax.f32 %v1301, 0.0
  %s1306 = scalar_lea.vmem %s5, 96
  %v1307 = vld [vmem:[%s1306] sm:$0xf]
  %v1308 = vld [vmem:[%s1306 + $0x4] sm:$0xf]
  %v1309 = vld [vmem:[%s1306 + $0x8] sm:$0xf]
  %v1310 = vld [vmem:[%s1306 + $0xc] sm:$0xf]
  %s1311 = scalar_lea.vmem %s5, 112
  %v1312 = vld [vmem:[%s1311] sm:$0xf]
  %v1313 = vld [vmem:[%s1311 + $0x4] sm:$0xf]
  %v1314 = vld [vmem:[%s1311 + $0x8] sm:$0xf]
  %v1315 = vld [vmem:[%s1311 + $0xc] sm:$0xf]
  %s1316 = scalar_lea.vmem %s6, 3
  %v1317 = vld [vmem:[%s1316] sm:$0x1]
  %v1318 = vpack.c.bf16 %v1303, %v1302
  %v1319 = vpack.c.bf16 %v1305, %v1304
  %v1324 = vunpack.c.l.b16 %v1307
  %v1325 = vunpack.c.l.b16 %v1308
  %v1326 = vunpack.c.l.b16 %v1309
  %v1327 = vunpack.c.l.b16 %v1310
  %v1328 = vpack.c.b16 %v1325, %v1324
  %v1329 = vpack.c.b16 %v1327, %v1326
  %v1333 = vsel %vm184, %v1318, 0
  %v1336 = vsel %vm184, %v1319, 0
  %1338 = vmatprep.subr.bf16.mxu0 0
  %1339 = vmatpush1.bf16.msra.mxu0 %v1328
  %1340 = vmatprep.subr.bf16.mxu0 0
  %1341 = vmatpush1.bf16.msra.mxu0 %v1329
  %1342 = vmatprep.subr.bf16.mxu0 0
  %1343 = vmatpush1.bf16.msra.mxu0 0
  %1344 = vmatprep.subr.bf16.mxu0 0
  %1345 = vmatpush1.bf16.msra.mxu0 0
  %1346 = vmatprep.subr.bf16.mxu0 0
  %1347 = vmatpush1.bf16.msra.mxu0 0
  %1348 = vmatprep.subr.bf16.mxu0 0
  %1349 = vmatpush1.bf16.msra.mxu0 0
  %1350 = vmatprep.subr.bf16.mxu0 0
  %1351 = vmatpush1.bf16.msra.mxu0 0
  %1352 = vmatprep.subr.bf16.mxu0 0
  %1353 = vmatpush1.bf16.msra.mxu0 0
  %1354 = vmatprep.subr.bf16.mxu0 0
  %1355 = vmatpush1.bf16.msra.mxu0 0
  %1356 = vmatprep.subr.bf16.mxu0 0
  %1357 = vmatpush1.bf16.msra.mxu0 0
  %1358 = vmatprep.subr.bf16.mxu0 0
  %1359 = vmatpush1.bf16.msra.mxu0 0
  %1360 = vmatprep.subr.bf16.mxu0 0
  %1361 = vmatpush1.bf16.msra.mxu0 0
  %1362 = vmatprep.subr.bf16.mxu0 0
  %1363 = vmatpush1.bf16.msra.mxu0 0
  %1364 = vmatprep.subr.bf16.mxu0 0
  %1365 = vmatpush1.bf16.msra.mxu0 0
  %1366 = vmatprep.subr.bf16.mxu0 0
  %1367 = vmatpush1.bf16.msra.mxu0 0
  %1368 = vmatprep.subr.bf16.mxu0 0
  %1369 = vmatpush1.bf16.msra.mxu0 0
  %1370 = vmatprep.mubr.bf16.mxu0 0
  %1371 = vmatmul.mubr.bf16.gmra.mrb[0].mxu0 %v1333
  %v1372 = vpop.f32.mrb[0].mxu0
  %v1373 = vadd.f32 0.0, %v1372
  %v1374 = vpop.f32.mrb[0].mxu0
  %v1375 = vpop.f32.mrb[0].mxu0
  %v1376 = vadd.f32 0.0, %v1375
  %v1377 = vpop.f32.mrb[0].mxu0
  %1378 = vmatprep.mubr.bf16.mxu0 0
  %1379 = vmatmul.mubr.bf16.gmra.mrb[0].mxu0 %v1336
  %v1380 = vpop.f32.mrb[0].mxu0
  %v1381 = vadd.f32 0.0, %v1380
  %v1382 = vpop.f32.mrb[0].mxu0
  %v1383 = vpop.f32.mrb[0].mxu0
  %v1384 = vadd.f32 0.0, %v1383
  %v1385 = vpop.f32.mrb[0].mxu0
  %1386 = vdwg.mxu0
  %v1391 = vunpack.c.l.b16 %v1312
  %v1392 = vunpack.c.l.b16 %v1313
  %v1393 = vunpack.c.l.b16 %v1314
  %v1394 = vunpack.c.l.b16 %v1315
  %v1395 = vpack.c.b16 %v1392, %v1391
  %v1396 = vpack.c.b16 %v1394, %v1393
  %1399 = vmatprep.subr.bf16.mxu0 0
  %1400 = vmatpush1.bf16.msra.mxu0 %v1395
  %1401 = vmatprep.subr.bf16.mxu0 0
  %1402 = vmatpush1.bf16.msra.mxu0 %v1396
  %1403 = vmatprep.subr.bf16.mxu0 0
  %1404 = vmatpush1.bf16.msra.mxu0 0
  %1405 = vmatprep.subr.bf16.mxu0 0
  %1406 = vmatpush1.bf16.msra.mxu0 0
  %1407 = vmatprep.subr.bf16.mxu0 0
  %1408 = vmatpush1.bf16.msra.mxu0 0
  %1409 = vmatprep.subr.bf16.mxu0 0
  %1410 = vmatpush1.bf16.msra.mxu0 0
  %1411 = vmatprep.subr.bf16.mxu0 0
  %1412 = vmatpush1.bf16.msra.mxu0 0
  %1413 = vmatprep.subr.bf16.mxu0 0
  %1414 = vmatpush1.bf16.msra.mxu0 0
  %1415 = vmatprep.subr.bf16.mxu0 0
  %1416 = vmatpush1.bf16.msra.mxu0 0
  %1417 = vmatprep.subr.bf16.mxu0 0
  %1418 = vmatpush1.bf16.msra.mxu0 0
  %1419 = vmatprep.subr.bf16.mxu0 0
  %1420 = vmatpush1.bf16.msra.mxu0 0
  %1421 = vmatprep.subr.bf16.mxu0 0
  %1422 = vmatpush1.bf16.msra.mxu0 0
  %1423 = vmatprep.subr.bf16.mxu0 0
  %1424 = vmatpush1.bf16.msra.mxu0 0
  %1425 = vmatprep.subr.bf16.mxu0 0
  %1426 = vmatpush1.bf16.msra.mxu0 0
  %1427 = vmatprep.subr.bf16.mxu0 0
  %1428 = vmatpush1.bf16.msra.mxu0 0
  %1429 = vmatprep.subr.bf16.mxu0 0
  %1430 = vmatpush1.bf16.msra.mxu0 0
  %1431 = vmatprep.mubr.bf16.mxu0 0
  %1432 = vmatmul.mubr.bf16.gmra.mrb[0].mxu0 %v1333
  %v1433 = vpop.f32.mrb[0].mxu0
  %v1434 = vadd.f32 0.0, %v1433
  %v1435 = vpop.f32.mrb[0].mxu0
  %v1436 = vpop.f32.mrb[0].mxu0
  %v1437 = vadd.f32 0.0, %v1436
  %v1438 = vpop.f32.mrb[0].mxu0
  %1439 = vmatprep.mubr.bf16.mxu0 0
  %1440 = vmatmul.mubr.bf16.gmra.mrb[0].mxu0 %v1336
  %v1441 = vpop.f32.mrb[0].mxu0
  %v1442 = vadd.f32 0.0, %v1441
  %v1443 = vpop.f32.mrb[0].mxu0
  %v1444 = vpop.f32.mrb[0].mxu0
  %v1445 = vadd.f32 0.0, %v1444
  %v1446 = vpop.f32.mrb[0].mxu0
  %1447 = vdwg.mxu0
  %v1448 = vpack.c.bf16 %v1437, %v1434
  %v1449 = vpack.c.bf16 %v1445, %v1442
  %1450 = vmatprep.subr.bf16.mxu0 0
  %1451 = vmatpush1.bf16.msra.mxu0 %v1448
  %1452 = vmatprep.subr.bf16.mxu0 0
  %1453 = vmatpush1.bf16.msra.mxu0 %v1449
  %1454 = vmatprep.subr.bf16.mxu0 0
  %1455 = vmatpush1.bf16.msra.mxu0 0
  %1456 = vmatprep.subr.bf16.mxu0 0
  %1457 = vmatpush1.bf16.msra.mxu0 0
  %1458 = vmatprep.subr.bf16.mxu0 0
  %1459 = vmatpush1.bf16.msra.mxu0 0
  %1460 = vmatprep.subr.bf16.mxu0 0
  %1461 = vmatpush1.bf16.msra.mxu0 0
  %1462 = vmatprep.subr.bf16.mxu0 0
  %1463 = vmatpush1.bf16.msra.mxu0 0
  %1464 = vmatprep.subr.bf16.mxu0 0
  %1465 = vmatpush1.bf16.msra.mxu0 0
  %1466 = vmatprep.subr.bf16.mxu0 0
  %1467 = vmatpush1.bf16.msra.mxu0 0
  %1468 = vmatprep.subr.bf16.mxu0 0
  %1469 = vmatpush1.bf16.msra.mxu0 0
  %1470 = vmatprep.subr.bf16.mxu0 0
  %1471 = vmatpush1.bf16.msra.mxu0 0
  %1472 = vmatprep.subr.bf16.mxu0 0
  %1473 = vmatpush1.bf16.msra.mxu0 0
  %1474 = vmatprep.subr.bf16.mxu0 0
  %1475 = vmatpush1.bf16.msra.mxu0 0
  %1476 = vmatprep.subr.bf16.mxu0 0
  %1477 = vmatpush1.bf16.msra.mxu0 0
  %1478 = vmatprep.subr.bf16.mxu0 0
  %1479 = vmatpush1.bf16.msra.mxu0 0
  %1480 = vmatprep.subr.bf16.mxu0 0
  %1481 = vmatpush1.bf16.msra.mxu0 0
  %1482 = vmatprep.mubr.bf16.mxu0 0
  %1483 = vmatmul.mubr.bf16.gmra.mrb[0].mxu0 %v186
  %v1484 = vpop.f32.mrb[0].mxu0
  %v1485 = vadd.f32 0.0, %v1484
  %v1486 = vpop.f32.mrb[0].mxu0
  %v1487 = vpop.f32.mrb[0].mxu0
  %v1488 = vadd.f32 0.0, %v1487
  %v1489 = vpop.f32.mrb[0].mxu0
  %1490 = vmatprep.mubr.bf16.mxu0 0
  %1491 = vmatmul.mubr.bf16.gmra.mrb[0].mxu0 %v189
  %v1492 = vpop.f32.mrb[0].mxu0
  %v1493 = vadd.f32 0.0, %v1492
  %v1494 = vpop.f32.mrb[0].mxu0
  %v1495 = vpop.f32.mrb[0].mxu0
  %v1496 = vadd.f32 0.0, %v1495
  %v1497 = vpop.f32.mrb[0].mxu0
  %1498 = vdwg.mxu0
  %v1499 = vmul.f32 %v243, %v1373
  %v1500 = vmul.f32 %v248, %v1376
  %v1501 = vmul.f32 %v253, %v1381
  %v1502 = vmul.f32 %v258, %v1384
  %v1503 = vadd.f32 %v1499, %v1485
  %v1504 = vadd.f32 %v1500, %v1488
  %v1505 = vadd.f32 %v1501, %v1493
  %v1506 = vadd.f32 %v1502, %v1496
  %v1508 = vlaneseq
  %v1509 = vshrl.u32 %v1508, 7
  %v1510 = vsub.s32 0, %v1509
  %v1511 = vrot.slane %v1317, %v1510
  %v1513 = vadd.f32 %v1503, %v1511
  %v1514 = vadd.f32 %v1504, %v1511
  %v1515 = vadd.f32 %v1505, %v1511
  %v1516 = vadd.f32 %v1506, %v1511
  %s1517 = scalar_lea.vmem %s7, 3
  %v1518 = vld [vmem:[%s1517] sm:$0x1]
  %s1519 = scalar_lea.vmem %s8, 3
  %v1520 = vld [vmem:[%s1519] sm:$0x1]
  %v1521 = vmul.f32 %v1513, %v1513
  %v1522 = vmul.f32 %v1514, %v1514
  %v1523 = vmul.f32 %v1515, %v1515
  %v1524 = vmul.f32 %v1516, %v1516
  %1529 = vrot.lane.b32.xlu0 %v1521, 32
  %v1530 = vpop.permute.xlu0 %1529
  %1531 = vrot.lane.b32.xlu0 %v1522, 32
  %v1532 = vpop.permute.xlu0 %1531
  %1533 = vrot.lane.b32.xlu0 %v1523, 32
  %v1534 = vpop.permute.xlu0 %1533
  %1535 = vrot.lane.b32.xlu0 %v1524, 32
  %v1536 = vpop.permute.xlu0 %1535
  %v1541 = vsel %vm184, %v1513, %v1530
  %v1542 = vsel %vm184, %v1514, %v1532
  %v1543 = vsel %vm184, %v1515, %v1534
  %v1544 = vsel %vm184, %v1516, %v1536
  %v1545 = vsel %vm304, %v1541, 0.0
  %v1546 = vsel %vm304, %v1542, 0.0
  %v1547 = vadd.f32 %v1545, %v1546
  %v1548 = vsel %vm304, %v1543, 0.0
  %v1549 = vadd.f32 %v1547, %v1548
  %v1550 = vsel %vm304, %v1544, 0.0
  %v1551 = vadd.f32 %v1549, %v1550
  %v1552 = vrot.slane %v1551, 4
  %v1553 = vadd.f32 %v1551, %v1552
  %v1554 = vrot.slane %v1553, 2
  %v1555 = vadd.f32 %v1553, %v1554
  %v1556 = vrot.slane %v1555, 1
  %v1557 = vadd.f32 %v1555, %v1556
  %v1558 = vmul.f32 %v1557, 0.03125
  %v1559 = vmul.f32 %v1558, %v1558
  %1561 = vrot.lane.b32.xlu0 %v1559, 32
  %v1562 = vpop.permute.xlu0 %1561
  %v1564 = vsub.f32 %v1558, %v1562
  %v1565 = vsub.f32 %v1513, %v1558
  %v1566 = vsub.f32 %v1514, %v1558
  %v1567 = vsub.f32 %v1515, %v1558
  %v1568 = vsub.f32 %v1516, %v1558
  %v1569 = vadd.f32 %v1564, 1e-05
  %v1570 = vrsqrt.pop %v1569
  %v1571 = vlaneseq
  %v1572 = vshrl.u32 %v1571, 7
  %v1573 = vsub.s32 0, %v1572
  %v1574 = vrot.slane %v1570, %v1573
  %1576 = vrot.lane.b32.xlu0 %v1574, 96
  %v1577 = vpop.permute.xlu0 %1576
  %v1579 = vmul.f32 %v1565, %v1577
  %v1580 = vmul.f32 %v1566, %v1577
  %v1581 = vmul.f32 %v1567, %v1577
  %v1582 = vmul.f32 %v1568, %v1577
  %v1584 = vlaneseq
  %v1585 = vshrl.u32 %v1584, 7
  %v1586 = vsub.s32 0, %v1585
  %v1587 = vrot.slane %v1518, %v1586
  %v1589 = vmul.f32 %v1579, %v1587
  %v1590 = vmul.f32 %v1580, %v1587
  %v1591 = vmul.f32 %v1581, %v1587
  %v1592 = vmul.f32 %v1582, %v1587
  %v1594 = vlaneseq
  %v1595 = vshrl.u32 %v1594, 7
  %v1596 = vsub.s32 0, %v1595
  %v1597 = vrot.slane %v1520, %v1596
  %v1599 = vadd.f32 %v1589, %v1597
  %v1600 = vadd.f32 %v1590, %v1597
  %v1601 = vadd.f32 %v1591, %v1597
  %v1602 = vadd.f32 %v1592, %v1597
  %v1603 = vmax.f32 %v1599, 0.0
  %v1604 = vmax.f32 %v1600, 0.0
  %v1605 = vmax.f32 %v1601, 0.0
  %v1606 = vmax.f32 %v1602, 0.0
  %s1607 = scalar_lea.vmem %s5, 128
  %v1608 = vld [vmem:[%s1607] sm:$0xf]
  %v1609 = vld [vmem:[%s1607 + $0x4] sm:$0xf]
  %v1610 = vld [vmem:[%s1607 + $0x8] sm:$0xf]
  %v1611 = vld [vmem:[%s1607 + $0xc] sm:$0xf]
  %s1612 = scalar_lea.vmem %s5, 144
  %v1613 = vld [vmem:[%s1612] sm:$0xf]
  %v1614 = vld [vmem:[%s1612 + $0x4] sm:$0xf]
  %v1615 = vld [vmem:[%s1612 + $0x8] sm:$0xf]
  %v1616 = vld [vmem:[%s1612 + $0xc] sm:$0xf]
  %s1617 = scalar_lea.vmem %s6, 4
  %v1618 = vld [vmem:[%s1617] sm:$0x1]
  %v1619 = vpack.c.bf16 %v1604, %v1603
  %v1620 = vpack.c.bf16 %v1606, %v1605
  %v1625 = vunpack.c.l.b16 %v1608
  %v1626 = vunpack.c.l.b16 %v1609
  %v1627 = vunpack.c.l.b16 %v1610
  %v1628 = vunpack.c.l.b16 %v1611
  %v1629 = vpack.c.b16 %v1626, %v1625
  %v1630 = vpack.c.b16 %v1628, %v1627
  %v1634 = vsel %vm184, %v1619, 0
  %v1637 = vsel %vm184, %v1620, 0
  %1639 = vmatprep.subr.bf16.mxu0 0
  %1640 = vmatpush1.bf16.msra.mxu0 %v1629
  %1641 = vmatprep.subr.bf16.mxu0 0
  %1642 = vmatpush1.bf16.msra.mxu0 %v1630
  %1643 = vmatprep.subr.bf16.mxu0 0
  %1644 = vmatpush1.bf16.msra.mxu0 0
  %1645 = vmatprep.subr.bf16.mxu0 0
  %1646 = vmatpush1.bf16.msra.mxu0 0
  %1647 = vmatprep.subr.bf16.mxu0 0
  %1648 = vmatpush1.bf16.msra.mxu0 0
  %1649 = vmatprep.subr.bf16.mxu0 0
  %1650 = vmatpush1.bf16.msra.mxu0 0
  %1651 = vmatprep.subr.bf16.mxu0 0
  %1652 = vmatpush1.bf16.msra.mxu0 0
  %1653 = vmatprep.subr.bf16.mxu0 0
  %1654 = vmatpush1.bf16.msra.mxu0 0
  %1655 = vmatprep.subr.bf16.mxu0 0
  %1656 = vmatpush1.bf16.msra.mxu0 0
  %1657 = vmatprep.subr.bf16.mxu0 0
  %1658 = vmatpush1.bf16.msra.mxu0 0
  %1659 = vmatprep.subr.bf16.mxu0 0
  %1660 = vmatpush1.bf16.msra.mxu0 0
  %1661 = vmatprep.subr.bf16.mxu0 0
  %1662 = vmatpush1.bf16.msra.mxu0 0
  %1663 = vmatprep.subr.bf16.mxu0 0
  %1664 = vmatpush1.bf16.msra.mxu0 0
  %1665 = vmatprep.subr.bf16.mxu0 0
  %1666 = vmatpush1.bf16.msra.mxu0 0
  %1667 = vmatprep.subr.bf16.mxu0 0
  %1668 = vmatpush1.bf16.msra.mxu0 0
  %1669 = vmatprep.subr.bf16.mxu0 0
  %1670 = vmatpush1.bf16.msra.mxu0 0
  %1671 = vmatprep.mubr.bf16.mxu0 0
  %1672 = vmatmul.mubr.bf16.gmra.mrb[0].mxu0 %v1634
  %v1673 = vpop.f32.mrb[0].mxu0
  %v1674 = vadd.f32 0.0, %v1673
  %v1675 = vpop.f32.mrb[0].mxu0
  %v1676 = vpop.f32.mrb[0].mxu0
  %v1677 = vadd.f32 0.0, %v1676
  %v1678 = vpop.f32.mrb[0].mxu0
  %1679 = vmatprep.mubr.bf16.mxu0 0
  %1680 = vmatmul.mubr.bf16.gmra.mrb[0].mxu0 %v1637
  %v1681 = vpop.f32.mrb[0].mxu0
  %v1682 = vadd.f32 0.0, %v1681
  %v1683 = vpop.f32.mrb[0].mxu0
  %v1684 = vpop.f32.mrb[0].mxu0
  %v1685 = vadd.f32 0.0, %v1684
  %v1686 = vpop.f32.mrb[0].mxu0
  %1687 = vdwg.mxu0
  %v1692 = vunpack.c.l.b16 %v1613
  %v1693 = vunpack.c.l.b16 %v1614
  %v1694 = vunpack.c.l.b16 %v1615
  %v1695 = vunpack.c.l.b16 %v1616
  %v1696 = vpack.c.b16 %v1693, %v1692
  %v1697 = vpack.c.b16 %v1695, %v1694
  %1700 = vmatprep.subr.bf16.mxu0 0
  %1701 = vmatpush1.bf16.msra.mxu0 %v1696
  %1702 = vmatprep.subr.bf16.mxu0 0
  %1703 = vmatpush1.bf16.msra.mxu0 %v1697
  %1704 = vmatprep.subr.bf16.mxu0 0
  %1705 = vmatpush1.bf16.msra.mxu0 0
  %1706 = vmatprep.subr.bf16.mxu0 0
  %1707 = vmatpush1.bf16.msra.mxu0 0
  %1708 = vmatprep.subr.bf16.mxu0 0
  %1709 = vmatpush1.bf16.msra.mxu0 0
  %1710 = vmatprep.subr.bf16.mxu0 0
  %1711 = vmatpush1.bf16.msra.mxu0 0
  %1712 = vmatprep.subr.bf16.mxu0 0
  %1713 = vmatpush1.bf16.msra.mxu0 0
  %1714 = vmatprep.subr.bf16.mxu0 0
  %1715 = vmatpush1.bf16.msra.mxu0 0
  %1716 = vmatprep.subr.bf16.mxu0 0
  %1717 = vmatpush1.bf16.msra.mxu0 0
  %1718 = vmatprep.subr.bf16.mxu0 0
  %1719 = vmatpush1.bf16.msra.mxu0 0
  %1720 = vmatprep.subr.bf16.mxu0 0
  %1721 = vmatpush1.bf16.msra.mxu0 0
  %1722 = vmatprep.subr.bf16.mxu0 0
  %1723 = vmatpush1.bf16.msra.mxu0 0
  %1724 = vmatprep.subr.bf16.mxu0 0
  %1725 = vmatpush1.bf16.msra.mxu0 0
  %1726 = vmatprep.subr.bf16.mxu0 0
  %1727 = vmatpush1.bf16.msra.mxu0 0
  %1728 = vmatprep.subr.bf16.mxu0 0
  %1729 = vmatpush1.bf16.msra.mxu0 0
  %1730 = vmatprep.subr.bf16.mxu0 0
  %1731 = vmatpush1.bf16.msra.mxu0 0
  %1732 = vmatprep.mubr.bf16.mxu0 0
  %1733 = vmatmul.mubr.bf16.gmra.mrb[0].mxu0 %v1634
  %v1734 = vpop.f32.mrb[0].mxu0
  %v1735 = vadd.f32 0.0, %v1734
  %v1736 = vpop.f32.mrb[0].mxu0
  %v1737 = vpop.f32.mrb[0].mxu0
  %v1738 = vadd.f32 0.0, %v1737
  %v1739 = vpop.f32.mrb[0].mxu0
  %1740 = vmatprep.mubr.bf16.mxu0 0
  %1741 = vmatmul.mubr.bf16.gmra.mrb[0].mxu0 %v1637
  %v1742 = vpop.f32.mrb[0].mxu0
  %v1743 = vadd.f32 0.0, %v1742
  %v1744 = vpop.f32.mrb[0].mxu0
  %v1745 = vpop.f32.mrb[0].mxu0
  %v1746 = vadd.f32 0.0, %v1745
  %v1747 = vpop.f32.mrb[0].mxu0
  %1748 = vdwg.mxu0
  %v1749 = vpack.c.bf16 %v1738, %v1735
  %v1750 = vpack.c.bf16 %v1746, %v1743
  %1751 = vmatprep.subr.bf16.mxu0 0
  %1752 = vmatpush1.bf16.msra.mxu0 %v1749
  %1753 = vmatprep.subr.bf16.mxu0 0
  %1754 = vmatpush1.bf16.msra.mxu0 %v1750
  %1755 = vmatprep.subr.bf16.mxu0 0
  %1756 = vmatpush1.bf16.msra.mxu0 0
  %1757 = vmatprep.subr.bf16.mxu0 0
  %1758 = vmatpush1.bf16.msra.mxu0 0
  %1759 = vmatprep.subr.bf16.mxu0 0
  %1760 = vmatpush1.bf16.msra.mxu0 0
  %1761 = vmatprep.subr.bf16.mxu0 0
  %1762 = vmatpush1.bf16.msra.mxu0 0
  %1763 = vmatprep.subr.bf16.mxu0 0
  %1764 = vmatpush1.bf16.msra.mxu0 0
  %1765 = vmatprep.subr.bf16.mxu0 0
  %1766 = vmatpush1.bf16.msra.mxu0 0
  %1767 = vmatprep.subr.bf16.mxu0 0
  %1768 = vmatpush1.bf16.msra.mxu0 0
  %1769 = vmatprep.subr.bf16.mxu0 0
  %1770 = vmatpush1.bf16.msra.mxu0 0
  %1771 = vmatprep.subr.bf16.mxu0 0
  %1772 = vmatpush1.bf16.msra.mxu0 0
  %1773 = vmatprep.subr.bf16.mxu0 0
  %1774 = vmatpush1.bf16.msra.mxu0 0
  %1775 = vmatprep.subr.bf16.mxu0 0
  %1776 = vmatpush1.bf16.msra.mxu0 0
  %1777 = vmatprep.subr.bf16.mxu0 0
  %1778 = vmatpush1.bf16.msra.mxu0 0
  %1779 = vmatprep.subr.bf16.mxu0 0
  %1780 = vmatpush1.bf16.msra.mxu0 0
  %1781 = vmatprep.subr.bf16.mxu0 0
  %1782 = vmatpush1.bf16.msra.mxu0 0
  %1783 = vmatprep.mubr.bf16.mxu0 0
  %1784 = vmatmul.mubr.bf16.gmra.mrb[0].mxu0 %v186
  %v1785 = vpop.f32.mrb[0].mxu0
  %v1786 = vadd.f32 0.0, %v1785
  %v1787 = vpop.f32.mrb[0].mxu0
  %v1788 = vpop.f32.mrb[0].mxu0
  %v1789 = vadd.f32 0.0, %v1788
  %v1790 = vpop.f32.mrb[0].mxu0
  %1791 = vmatprep.mubr.bf16.mxu0 0
  %1792 = vmatmul.mubr.bf16.gmra.mrb[0].mxu0 %v189
  %v1793 = vpop.f32.mrb[0].mxu0
  %v1794 = vadd.f32 0.0, %v1793
  %v1795 = vpop.f32.mrb[0].mxu0
  %v1796 = vpop.f32.mrb[0].mxu0
  %v1797 = vadd.f32 0.0, %v1796
  %v1798 = vpop.f32.mrb[0].mxu0
  %1799 = vdwg.mxu0
  %v1800 = vmul.f32 %v243, %v1674
  %v1801 = vmul.f32 %v248, %v1677
  %v1802 = vmul.f32 %v253, %v1682
  %v1803 = vmul.f32 %v258, %v1685
  %v1804 = vadd.f32 %v1800, %v1786
  %v1805 = vadd.f32 %v1801, %v1789
  %v1806 = vadd.f32 %v1802, %v1794
  %v1807 = vadd.f32 %v1803, %v1797
  %v1809 = vlaneseq
  %v1810 = vshrl.u32 %v1809, 7
  %v1811 = vsub.s32 0, %v1810
  %v1812 = vrot.slane %v1618, %v1811
  %v1814 = vadd.f32 %v1804, %v1812
  %v1815 = vadd.f32 %v1805, %v1812
  %v1816 = vadd.f32 %v1806, %v1812
  %v1817 = vadd.f32 %v1807, %v1812
  %s1818 = scalar_lea.vmem %s7, 4
  %v1819 = vld [vmem:[%s1818] sm:$0x1]
  %s1820 = scalar_lea.vmem %s8, 4
  %v1821 = vld [vmem:[%s1820] sm:$0x1]
  %v1822 = vmul.f32 %v1814, %v1814
  %v1823 = vmul.f32 %v1815, %v1815
  %v1824 = vmul.f32 %v1816, %v1816
  %v1825 = vmul.f32 %v1817, %v1817
  %1830 = vrot.lane.b32.xlu0 %v1822, 32
  %v1831 = vpop.permute.xlu0 %1830
  %1832 = vrot.lane.b32.xlu0 %v1823, 32
  %v1833 = vpop.permute.xlu0 %1832
  %1834 = vrot.lane.b32.xlu0 %v1824, 32
  %v1835 = vpop.permute.xlu0 %1834
  %1836 = vrot.lane.b32.xlu0 %v1825, 32
  %v1837 = vpop.permute.xlu0 %1836
  %v1842 = vsel %vm184, %v1814, %v1831
  %v1843 = vsel %vm184, %v1815, %v1833
  %v1844 = vsel %vm184, %v1816, %v1835
  %v1845 = vsel %vm184, %v1817, %v1837
  %v1846 = vsel %vm304, %v1842, 0.0
  %v1847 = vsel %vm304, %v1843, 0.0
  %v1848 = vadd.f32 %v1846, %v1847
  %v1849 = vsel %vm304, %v1844, 0.0
  %v1850 = vadd.f32 %v1848, %v1849
  %v1851 = vsel %vm304, %v1845, 0.0
  %v1852 = vadd.f32 %v1850, %v1851
  %v1853 = vrot.slane %v1852, 4
  %v1854 = vadd.f32 %v1852, %v1853
  %v1855 = vrot.slane %v1854, 2
  %v1856 = vadd.f32 %v1854, %v1855
  %v1857 = vrot.slane %v1856, 1
  %v1858 = vadd.f32 %v1856, %v1857
  %v1859 = vmul.f32 %v1858, 0.03125
  %v1860 = vmul.f32 %v1859, %v1859
  %1862 = vrot.lane.b32.xlu0 %v1860, 32
  %v1863 = vpop.permute.xlu0 %1862
  %v1865 = vsub.f32 %v1859, %v1863
  %v1866 = vsub.f32 %v1814, %v1859
  %v1867 = vsub.f32 %v1815, %v1859
  %v1868 = vsub.f32 %v1816, %v1859
  %v1869 = vsub.f32 %v1817, %v1859
  %v1870 = vadd.f32 %v1865, 1e-05
  %v1871 = vrsqrt.pop %v1870
  %v1872 = vlaneseq
  %v1873 = vshrl.u32 %v1872, 7
  %v1874 = vsub.s32 0, %v1873
  %v1875 = vrot.slane %v1871, %v1874
  %1877 = vrot.lane.b32.xlu0 %v1875, 96
  %v1878 = vpop.permute.xlu0 %1877
  %v1880 = vmul.f32 %v1866, %v1878
  %v1881 = vmul.f32 %v1867, %v1878
  %v1882 = vmul.f32 %v1868, %v1878
  %v1883 = vmul.f32 %v1869, %v1878
  %v1885 = vlaneseq
  %v1886 = vshrl.u32 %v1885, 7
  %v1887 = vsub.s32 0, %v1886
  %v1888 = vrot.slane %v1819, %v1887
  %v1890 = vmul.f32 %v1880, %v1888
  %v1891 = vmul.f32 %v1881, %v1888
  %v1892 = vmul.f32 %v1882, %v1888
  %v1893 = vmul.f32 %v1883, %v1888
  %v1895 = vlaneseq
  %v1896 = vshrl.u32 %v1895, 7
  %v1897 = vsub.s32 0, %v1896
  %v1898 = vrot.slane %v1821, %v1897
  %v1900 = vadd.f32 %v1890, %v1898
  %v1901 = vadd.f32 %v1891, %v1898
  %v1902 = vadd.f32 %v1892, %v1898
  %v1903 = vadd.f32 %v1893, %v1898
  %v1904 = vmax.f32 %v1900, 0.0
  %v1905 = vmax.f32 %v1901, 0.0
  %v1906 = vmax.f32 %v1902, 0.0
  %v1907 = vmax.f32 %v1903, 0.0
  %v1908 = vadd.f32 %v1302, %v1904
  %v1909 = vadd.f32 %v1303, %v1905
  %v1910 = vadd.f32 %v1304, %v1906
  %v1911 = vadd.f32 %v1305, %v1907
  %s1912 = scalar_lea.vmem %s5, 160
  %v1913 = vld [vmem:[%s1912] sm:$0xf]
  %v1914 = vld [vmem:[%s1912 + $0x4] sm:$0xf]
  %v1915 = vld [vmem:[%s1912 + $0x8] sm:$0xf]
  %v1916 = vld [vmem:[%s1912 + $0xc] sm:$0xf]
  %s1917 = scalar_lea.vmem %s5, 176
  %v1918 = vld [vmem:[%s1917] sm:$0xf]
  %v1919 = vld [vmem:[%s1917 + $0x4] sm:$0xf]
  %v1920 = vld [vmem:[%s1917 + $0x8] sm:$0xf]
  %v1921 = vld [vmem:[%s1917 + $0xc] sm:$0xf]
  %s1922 = scalar_lea.vmem %s6, 5
  %v1923 = vld [vmem:[%s1922] sm:$0x1]
  %v1924 = vpack.c.bf16 %v1909, %v1908
  %v1925 = vpack.c.bf16 %v1911, %v1910
  %v1930 = vunpack.c.l.b16 %v1913
  %v1931 = vunpack.c.l.b16 %v1914
  %v1932 = vunpack.c.l.b16 %v1915
  %v1933 = vunpack.c.l.b16 %v1916
  %v1934 = vpack.c.b16 %v1931, %v1930
  %v1935 = vpack.c.b16 %v1933, %v1932
  %v1939 = vsel %vm184, %v1924, 0
  %v1942 = vsel %vm184, %v1925, 0
  %1944 = vmatprep.subr.bf16.mxu0 0
  %1945 = vmatpush1.bf16.msra.mxu0 %v1934
  %1946 = vmatprep.subr.bf16.mxu0 0
  %1947 = vmatpush1.bf16.msra.mxu0 %v1935
  %1948 = vmatprep.subr.bf16.mxu0 0
  %1949 = vmatpush1.bf16.msra.mxu0 0
  %1950 = vmatprep.subr.bf16.mxu0 0
  %1951 = vmatpush1.bf16.msra.mxu0 0
  %1952 = vmatprep.subr.bf16.mxu0 0
  %1953 = vmatpush1.bf16.msra.mxu0 0
  %1954 = vmatprep.subr.bf16.mxu0 0
  %1955 = vmatpush1.bf16.msra.mxu0 0
  %1956 = vmatprep.subr.bf16.mxu0 0
  %1957 = vmatpush1.bf16.msra.mxu0 0
  %1958 = vmatprep.subr.bf16.mxu0 0
  %1959 = vmatpush1.bf16.msra.mxu0 0
  %1960 = vmatprep.subr.bf16.mxu0 0
  %1961 = vmatpush1.bf16.msra.mxu0 0
  %1962 = vmatprep.subr.bf16.mxu0 0
  %1963 = vmatpush1.bf16.msra.mxu0 0
  %1964 = vmatprep.subr.bf16.mxu0 0
  %1965 = vmatpush1.bf16.msra.mxu0 0
  %1966 = vmatprep.subr.bf16.mxu0 0
  %1967 = vmatpush1.bf16.msra.mxu0 0
  %1968 = vmatprep.subr.bf16.mxu0 0
  %1969 = vmatpush1.bf16.msra.mxu0 0
  %1970 = vmatprep.subr.bf16.mxu0 0
  %1971 = vmatpush1.bf16.msra.mxu0 0
  %1972 = vmatprep.subr.bf16.mxu0 0
  %1973 = vmatpush1.bf16.msra.mxu0 0
  %1974 = vmatprep.subr.bf16.mxu0 0
  %1975 = vmatpush1.bf16.msra.mxu0 0
  %1976 = vmatprep.mubr.bf16.mxu0 0
  %1977 = vmatmul.mubr.bf16.gmra.mrb[0].mxu0 %v1939
  %v1978 = vpop.f32.mrb[0].mxu0
  %v1979 = vadd.f32 0.0, %v1978
  %v1980 = vpop.f32.mrb[0].mxu0
  %v1981 = vpop.f32.mrb[0].mxu0
  %v1982 = vadd.f32 0.0, %v1981
  %v1983 = vpop.f32.mrb[0].mxu0
  %1984 = vmatprep.mubr.bf16.mxu0 0
  %1985 = vmatmul.mubr.bf16.gmra.mrb[0].mxu0 %v1942
  %v1986 = vpop.f32.mrb[0].mxu0
  %v1987 = vadd.f32 0.0, %v1986
  %v1988 = vpop.f32.mrb[0].mxu0
  %v1989 = vpop.f32.mrb[0].mxu0
  %v1990 = vadd.f32 0.0, %v1989
  %v1991 = vpop.f32.mrb[0].mxu0
  %1992 = vdwg.mxu0
  %v1997 = vunpack.c.l.b16 %v1918
  %v1998 = vunpack.c.l.b16 %v1919
  %v1999 = vunpack.c.l.b16 %v1920
  %v2000 = vunpack.c.l.b16 %v1921
  %v2001 = vpack.c.b16 %v1998, %v1997
  %v2002 = vpack.c.b16 %v2000, %v1999
  %2005 = vmatprep.subr.bf16.mxu0 0
  %2006 = vmatpush1.bf16.msra.mxu0 %v2001
  %2007 = vmatprep.subr.bf16.mxu0 0
  %2008 = vmatpush1.bf16.msra.mxu0 %v2002
  %2009 = vmatprep.subr.bf16.mxu0 0
  %2010 = vmatpush1.bf16.msra.mxu0 0
  %2011 = vmatprep.subr.bf16.mxu0 0
  %2012 = vmatpush1.bf16.msra.mxu0 0
  %2013 = vmatprep.subr.bf16.mxu0 0
  %2014 = vmatpush1.bf16.msra.mxu0 0
  %2015 = vmatprep.subr.bf16.mxu0 0
  %2016 = vmatpush1.bf16.msra.mxu0 0
  %2017 = vmatprep.subr.bf16.mxu0 0
  %2018 = vmatpush1.bf16.msra.mxu0 0
  %2019 = vmatprep.subr.bf16.mxu0 0
  %2020 = vmatpush1.bf16.msra.mxu0 0
  %2021 = vmatprep.subr.bf16.mxu0 0
  %2022 = vmatpush1.bf16.msra.mxu0 0
  %2023 = vmatprep.subr.bf16.mxu0 0
  %2024 = vmatpush1.bf16.msra.mxu0 0
  %2025 = vmatprep.subr.bf16.mxu0 0
  %2026 = vmatpush1.bf16.msra.mxu0 0
  %2027 = vmatprep.subr.bf16.mxu0 0
  %2028 = vmatpush1.bf16.msra.mxu0 0
  %2029 = vmatprep.subr.bf16.mxu0 0
  %2030 = vmatpush1.bf16.msra.mxu0 0
  %2031 = vmatprep.subr.bf16.mxu0 0
  %2032 = vmatpush1.bf16.msra.mxu0 0
  %2033 = vmatprep.subr.bf16.mxu0 0
  %2034 = vmatpush1.bf16.msra.mxu0 0
  %2035 = vmatprep.subr.bf16.mxu0 0
  %2036 = vmatpush1.bf16.msra.mxu0 0
  %2037 = vmatprep.mubr.bf16.mxu0 0
  %2038 = vmatmul.mubr.bf16.gmra.mrb[0].mxu0 %v1939
  %v2039 = vpop.f32.mrb[0].mxu0
  %v2040 = vadd.f32 0.0, %v2039
  %v2041 = vpop.f32.mrb[0].mxu0
  %v2042 = vpop.f32.mrb[0].mxu0
  %v2043 = vadd.f32 0.0, %v2042
  %v2044 = vpop.f32.mrb[0].mxu0
  %2045 = vmatprep.mubr.bf16.mxu0 0
  %2046 = vmatmul.mubr.bf16.gmra.mrb[0].mxu0 %v1942
  %v2047 = vpop.f32.mrb[0].mxu0
  %v2048 = vadd.f32 0.0, %v2047
  %v2049 = vpop.f32.mrb[0].mxu0
  %v2050 = vpop.f32.mrb[0].mxu0
  %v2051 = vadd.f32 0.0, %v2050
  %v2052 = vpop.f32.mrb[0].mxu0
  %2053 = vdwg.mxu0
  %v2054 = vpack.c.bf16 %v2043, %v2040
  %v2055 = vpack.c.bf16 %v2051, %v2048
  %2056 = vmatprep.subr.bf16.mxu0 0
  %2057 = vmatpush1.bf16.msra.mxu0 %v2054
  %2058 = vmatprep.subr.bf16.mxu0 0
  %2059 = vmatpush1.bf16.msra.mxu0 %v2055
  %2060 = vmatprep.subr.bf16.mxu0 0
  %2061 = vmatpush1.bf16.msra.mxu0 0
  %2062 = vmatprep.subr.bf16.mxu0 0
  %2063 = vmatpush1.bf16.msra.mxu0 0
  %2064 = vmatprep.subr.bf16.mxu0 0
  %2065 = vmatpush1.bf16.msra.mxu0 0
  %2066 = vmatprep.subr.bf16.mxu0 0
  %2067 = vmatpush1.bf16.msra.mxu0 0
  %2068 = vmatprep.subr.bf16.mxu0 0
  %2069 = vmatpush1.bf16.msra.mxu0 0
  %2070 = vmatprep.subr.bf16.mxu0 0
  %2071 = vmatpush1.bf16.msra.mxu0 0
  %2072 = vmatprep.subr.bf16.mxu0 0
  %2073 = vmatpush1.bf16.msra.mxu0 0
  %2074 = vmatprep.subr.bf16.mxu0 0
  %2075 = vmatpush1.bf16.msra.mxu0 0
  %2076 = vmatprep.subr.bf16.mxu0 0
  %2077 = vmatpush1.bf16.msra.mxu0 0
  %2078 = vmatprep.subr.bf16.mxu0 0
  %2079 = vmatpush1.bf16.msra.mxu0 0
  %2080 = vmatprep.subr.bf16.mxu0 0
  %2081 = vmatpush1.bf16.msra.mxu0 0
  %2082 = vmatprep.subr.bf16.mxu0 0
  %2083 = vmatpush1.bf16.msra.mxu0 0
  %2084 = vmatprep.subr.bf16.mxu0 0
  %2085 = vmatpush1.bf16.msra.mxu0 0
  %2086 = vmatprep.subr.bf16.mxu0 0
  %2087 = vmatpush1.bf16.msra.mxu0 0
  %2088 = vmatprep.mubr.bf16.mxu0 0
  %2089 = vmatmul.mubr.bf16.gmra.mrb[0].mxu0 %v1124
  %v2090 = vpop.f32.mrb[0].mxu0
  %v2091 = vadd.f32 0.0, %v2090
  %v2092 = vpop.f32.mrb[0].mxu0
  %v2093 = vpop.f32.mrb[0].mxu0
  %v2094 = vadd.f32 0.0, %v2093
  %v2095 = vpop.f32.mrb[0].mxu0
  %2096 = vmatprep.mubr.bf16.mxu0 0
  %2097 = vmatmul.mubr.bf16.gmra.mrb[0].mxu0 %v1127
  %v2098 = vpop.f32.mrb[0].mxu0
  %v2099 = vadd.f32 0.0, %v2098
  %v2100 = vpop.f32.mrb[0].mxu0
  %v2101 = vpop.f32.mrb[0].mxu0
  %v2102 = vadd.f32 0.0, %v2101
  %v2103 = vpop.f32.mrb[0].mxu0
  %2104 = vdwg.mxu0
  %v2105 = vmul.f32 %v1181, %v1979
  %v2106 = vmul.f32 %v1186, %v1982
  %v2107 = vmul.f32 %v1191, %v1987
  %v2108 = vmul.f32 %v1196, %v1990
  %v2109 = vadd.f32 %v2105, %v2091
  %v2110 = vadd.f32 %v2106, %v2094
  %v2111 = vadd.f32 %v2107, %v2099
  %v2112 = vadd.f32 %v2108, %v2102
  %v2114 = vlaneseq
  %v2115 = vshrl.u32 %v2114, 7
  %v2116 = vsub.s32 0, %v2115
  %v2117 = vrot.slane %v1923, %v2116
  %v2119 = vadd.f32 %v2109, %v2117
  %v2120 = vadd.f32 %v2110, %v2117
  %v2121 = vadd.f32 %v2111, %v2117
  %v2122 = vadd.f32 %v2112, %v2117
  %s2123 = scalar_lea.vmem %s7, 5
  %v2124 = vld [vmem:[%s2123] sm:$0x1]
  %s2125 = scalar_lea.vmem %s8, 5
  %v2126 = vld [vmem:[%s2125] sm:$0x1]
  %v2127 = vmul.f32 %v2119, %v2119
  %v2128 = vmul.f32 %v2120, %v2120
  %v2129 = vmul.f32 %v2121, %v2121
  %v2130 = vmul.f32 %v2122, %v2122
  %2135 = vrot.lane.b32.xlu0 %v2127, 32
  %v2136 = vpop.permute.xlu0 %2135
  %2137 = vrot.lane.b32.xlu0 %v2128, 32
  %v2138 = vpop.permute.xlu0 %2137
  %2139 = vrot.lane.b32.xlu0 %v2129, 32
  %v2140 = vpop.permute.xlu0 %2139
  %2141 = vrot.lane.b32.xlu0 %v2130, 32
  %v2142 = vpop.permute.xlu0 %2141
  %v2147 = vsel %vm184, %v2119, %v2136
  %v2148 = vsel %vm184, %v2120, %v2138
  %v2149 = vsel %vm184, %v2121, %v2140
  %v2150 = vsel %vm184, %v2122, %v2142
  %v2151 = vsel %vm304, %v2147, 0.0
  %v2152 = vsel %vm304, %v2148, 0.0
  %v2153 = vadd.f32 %v2151, %v2152
  %v2154 = vsel %vm304, %v2149, 0.0
  %v2155 = vadd.f32 %v2153, %v2154
  %v2156 = vsel %vm304, %v2150, 0.0
  %v2157 = vadd.f32 %v2155, %v2156
  %v2158 = vrot.slane %v2157, 4
  %v2159 = vadd.f32 %v2157, %v2158
  %v2160 = vrot.slane %v2159, 2
  %v2161 = vadd.f32 %v2159, %v2160
  %v2162 = vrot.slane %v2161, 1
  %v2163 = vadd.f32 %v2161, %v2162
  %v2164 = vmul.f32 %v2163, 0.03125
  %v2165 = vmul.f32 %v2164, %v2164
  %2167 = vrot.lane.b32.xlu0 %v2165, 32
  %v2168 = vpop.permute.xlu0 %2167
  %v2170 = vsub.f32 %v2164, %v2168
  %v2171 = vsub.f32 %v2119, %v2164
  %v2172 = vsub.f32 %v2120, %v2164
  %v2173 = vsub.f32 %v2121, %v2164
  %v2174 = vsub.f32 %v2122, %v2164
  %v2175 = vadd.f32 %v2170, 1e-05
  %v2176 = vrsqrt.pop %v2175
  %v2177 = vlaneseq
  %v2178 = vshrl.u32 %v2177, 7
  %v2179 = vsub.s32 0, %v2178
  %v2180 = vrot.slane %v2176, %v2179
  %2182 = vrot.lane.b32.xlu0 %v2180, 96
  %v2183 = vpop.permute.xlu0 %2182
  %v2185 = vmul.f32 %v2171, %v2183
  %v2186 = vmul.f32 %v2172, %v2183
  %v2187 = vmul.f32 %v2173, %v2183
  %v2188 = vmul.f32 %v2174, %v2183
  %v2190 = vlaneseq
  %v2191 = vshrl.u32 %v2190, 7
  %v2192 = vsub.s32 0, %v2191
  %v2193 = vrot.slane %v2124, %v2192
  %v2195 = vmul.f32 %v2185, %v2193
  %v2196 = vmul.f32 %v2186, %v2193
  %v2197 = vmul.f32 %v2187, %v2193
  %v2198 = vmul.f32 %v2188, %v2193
  %v2200 = vlaneseq
  %v2201 = vshrl.u32 %v2200, 7
  %v2202 = vsub.s32 0, %v2201
  %v2203 = vrot.slane %v2126, %v2202
  %v2205 = vadd.f32 %v2195, %v2203
  %v2206 = vadd.f32 %v2196, %v2203
  %v2207 = vadd.f32 %v2197, %v2203
  %v2208 = vadd.f32 %v2198, %v2203
  %v2209 = vmax.f32 %v2205, 0.0
  %v2210 = vmax.f32 %v2206, 0.0
  %v2211 = vmax.f32 %v2207, 0.0
  %v2212 = vmax.f32 %v2208, 0.0
  %s2213 = scalar_lea.vmem %s5, 192
  %v2214 = vld [vmem:[%s2213] sm:$0xf]
  %v2215 = vld [vmem:[%s2213 + $0x4] sm:$0xf]
  %v2216 = vld [vmem:[%s2213 + $0x8] sm:$0xf]
  %v2217 = vld [vmem:[%s2213 + $0xc] sm:$0xf]
  %s2218 = scalar_lea.vmem %s5, 208
  %v2219 = vld [vmem:[%s2218] sm:$0xf]
  %v2220 = vld [vmem:[%s2218 + $0x4] sm:$0xf]
  %v2221 = vld [vmem:[%s2218 + $0x8] sm:$0xf]
  %v2222 = vld [vmem:[%s2218 + $0xc] sm:$0xf]
  %s2223 = scalar_lea.vmem %s6, 6
  %v2224 = vld [vmem:[%s2223] sm:$0x1]
  %v2225 = vpack.c.bf16 %v2210, %v2209
  %v2226 = vpack.c.bf16 %v2212, %v2211
  %v2231 = vunpack.c.l.b16 %v2214
  %v2232 = vunpack.c.l.b16 %v2215
  %v2233 = vunpack.c.l.b16 %v2216
  %v2234 = vunpack.c.l.b16 %v2217
  %v2235 = vpack.c.b16 %v2232, %v2231
  %v2236 = vpack.c.b16 %v2234, %v2233
  %v2240 = vsel %vm184, %v2225, 0
  %v2243 = vsel %vm184, %v2226, 0
  %2245 = vmatprep.subr.bf16.mxu0 0
  %2246 = vmatpush1.bf16.msra.mxu0 %v2235
  %2247 = vmatprep.subr.bf16.mxu0 0
  %2248 = vmatpush1.bf16.msra.mxu0 %v2236
  %2249 = vmatprep.subr.bf16.mxu0 0
  %2250 = vmatpush1.bf16.msra.mxu0 0
  %2251 = vmatprep.subr.bf16.mxu0 0
  %2252 = vmatpush1.bf16.msra.mxu0 0
  %2253 = vmatprep.subr.bf16.mxu0 0
  %2254 = vmatpush1.bf16.msra.mxu0 0
  %2255 = vmatprep.subr.bf16.mxu0 0
  %2256 = vmatpush1.bf16.msra.mxu0 0
  %2257 = vmatprep.subr.bf16.mxu0 0
  %2258 = vmatpush1.bf16.msra.mxu0 0
  %2259 = vmatprep.subr.bf16.mxu0 0
  %2260 = vmatpush1.bf16.msra.mxu0 0
  %2261 = vmatprep.subr.bf16.mxu0 0
  %2262 = vmatpush1.bf16.msra.mxu0 0
  %2263 = vmatprep.subr.bf16.mxu0 0
  %2264 = vmatpush1.bf16.msra.mxu0 0
  %2265 = vmatprep.subr.bf16.mxu0 0
  %2266 = vmatpush1.bf16.msra.mxu0 0
  %2267 = vmatprep.subr.bf16.mxu0 0
  %2268 = vmatpush1.bf16.msra.mxu0 0
  %2269 = vmatprep.subr.bf16.mxu0 0
  %2270 = vmatpush1.bf16.msra.mxu0 0
  %2271 = vmatprep.subr.bf16.mxu0 0
  %2272 = vmatpush1.bf16.msra.mxu0 0
  %2273 = vmatprep.subr.bf16.mxu0 0
  %2274 = vmatpush1.bf16.msra.mxu0 0
  %2275 = vmatprep.subr.bf16.mxu0 0
  %2276 = vmatpush1.bf16.msra.mxu0 0
  %2277 = vmatprep.mubr.bf16.mxu0 0
  %2278 = vmatmul.mubr.bf16.gmra.mrb[0].mxu0 %v2240
  %v2279 = vpop.f32.mrb[0].mxu0
  %v2280 = vadd.f32 0.0, %v2279
  %v2281 = vpop.f32.mrb[0].mxu0
  %v2282 = vpop.f32.mrb[0].mxu0
  %v2283 = vadd.f32 0.0, %v2282
  %v2284 = vpop.f32.mrb[0].mxu0
  %2285 = vmatprep.mubr.bf16.mxu0 0
  %2286 = vmatmul.mubr.bf16.gmra.mrb[0].mxu0 %v2243
  %v2287 = vpop.f32.mrb[0].mxu0
  %v2288 = vadd.f32 0.0, %v2287
  %v2289 = vpop.f32.mrb[0].mxu0
  %v2290 = vpop.f32.mrb[0].mxu0
  %v2291 = vadd.f32 0.0, %v2290
  %v2292 = vpop.f32.mrb[0].mxu0
  %2293 = vdwg.mxu0
  %v2298 = vunpack.c.l.b16 %v2219
  %v2299 = vunpack.c.l.b16 %v2220
  %v2300 = vunpack.c.l.b16 %v2221
  %v2301 = vunpack.c.l.b16 %v2222
  %v2302 = vpack.c.b16 %v2299, %v2298
  %v2303 = vpack.c.b16 %v2301, %v2300
  %2306 = vmatprep.subr.bf16.mxu0 0
  %2307 = vmatpush1.bf16.msra.mxu0 %v2302
  %2308 = vmatprep.subr.bf16.mxu0 0
  %2309 = vmatpush1.bf16.msra.mxu0 %v2303
  %2310 = vmatprep.subr.bf16.mxu0 0
  %2311 = vmatpush1.bf16.msra.mxu0 0
  %2312 = vmatprep.subr.bf16.mxu0 0
  %2313 = vmatpush1.bf16.msra.mxu0 0
  %2314 = vmatprep.subr.bf16.mxu0 0
  %2315 = vmatpush1.bf16.msra.mxu0 0
  %2316 = vmatprep.subr.bf16.mxu0 0
  %2317 = vmatpush1.bf16.msra.mxu0 0
  %2318 = vmatprep.subr.bf16.mxu0 0
  %2319 = vmatpush1.bf16.msra.mxu0 0
  %2320 = vmatprep.subr.bf16.mxu0 0
  %2321 = vmatpush1.bf16.msra.mxu0 0
  %2322 = vmatprep.subr.bf16.mxu0 0
  %2323 = vmatpush1.bf16.msra.mxu0 0
  %2324 = vmatprep.subr.bf16.mxu0 0
  %2325 = vmatpush1.bf16.msra.mxu0 0
  %2326 = vmatprep.subr.bf16.mxu0 0
  %2327 = vmatpush1.bf16.msra.mxu0 0
  %2328 = vmatprep.subr.bf16.mxu0 0
  %2329 = vmatpush1.bf16.msra.mxu0 0
  %2330 = vmatprep.subr.bf16.mxu0 0
  %2331 = vmatpush1.bf16.msra.mxu0 0
  %2332 = vmatprep.subr.bf16.mxu0 0
  %2333 = vmatpush1.bf16.msra.mxu0 0
  %2334 = vmatprep.subr.bf16.mxu0 0
  %2335 = vmatpush1.bf16.msra.mxu0 0
  %2336 = vmatprep.subr.bf16.mxu0 0
  %2337 = vmatpush1.bf16.msra.mxu0 0
  %2338 = vmatprep.mubr.bf16.mxu0 0
  %2339 = vmatmul.mubr.bf16.gmra.mrb[0].mxu0 %v2240
  %v2340 = vpop.f32.mrb[0].mxu0
  %v2341 = vadd.f32 0.0, %v2340
  %v2342 = vpop.f32.mrb[0].mxu0
  %v2343 = vpop.f32.mrb[0].mxu0
  %v2344 = vadd.f32 0.0, %v2343
  %v2345 = vpop.f32.mrb[0].mxu0
  %2346 = vmatprep.mubr.bf16.mxu0 0
  %2347 = vmatmul.mubr.bf16.gmra.mrb[0].mxu0 %v2243
  %v2348 = vpop.f32.mrb[0].mxu0
  %v2349 = vadd.f32 0.0, %v2348
  %v2350 = vpop.f32.mrb[0].mxu0
  %v2351 = vpop.f32.mrb[0].mxu0
  %v2352 = vadd.f32 0.0, %v2351
  %v2353 = vpop.f32.mrb[0].mxu0
  %2354 = vdwg.mxu0
  %v2355 = vpack.c.bf16 %v2344, %v2341
  %v2356 = vpack.c.bf16 %v2352, %v2349
  %2357 = vmatprep.subr.bf16.mxu0 0
  %2358 = vmatpush1.bf16.msra.mxu0 %v2355
  %2359 = vmatprep.subr.bf16.mxu0 0
  %2360 = vmatpush1.bf16.msra.mxu0 %v2356
  %2361 = vmatprep.subr.bf16.mxu0 0
  %2362 = vmatpush1.bf16.msra.mxu0 0
  %2363 = vmatprep.subr.bf16.mxu0 0
  %2364 = vmatpush1.bf16.msra.mxu0 0
  %2365 = vmatprep.subr.bf16.mxu0 0
  %2366 = vmatpush1.bf16.msra.mxu0 0
  %2367 = vmatprep.subr.bf16.mxu0 0
  %2368 = vmatpush1.bf16.msra.mxu0 0
  %2369 = vmatprep.subr.bf16.mxu0 0
  %2370 = vmatpush1.bf16.msra.mxu0 0
  %2371 = vmatprep.subr.bf16.mxu0 0
  %2372 = vmatpush1.bf16.msra.mxu0 0
  %2373 = vmatprep.subr.bf16.mxu0 0
  %2374 = vmatpush1.bf16.msra.mxu0 0
  %2375 = vmatprep.subr.bf16.mxu0 0
  %2376 = vmatpush1.bf16.msra.mxu0 0
  %2377 = vmatprep.subr.bf16.mxu0 0
  %2378 = vmatpush1.bf16.msra.mxu0 0
  %2379 = vmatprep.subr.bf16.mxu0 0
  %2380 = vmatpush1.bf16.msra.mxu0 0
  %2381 = vmatprep.subr.bf16.mxu0 0
  %2382 = vmatpush1.bf16.msra.mxu0 0
  %2383 = vmatprep.subr.bf16.mxu0 0
  %2384 = vmatpush1.bf16.msra.mxu0 0
  %2385 = vmatprep.subr.bf16.mxu0 0
  %2386 = vmatpush1.bf16.msra.mxu0 0
  %2387 = vmatprep.subr.bf16.mxu0 0
  %2388 = vmatpush1.bf16.msra.mxu0 0
  %2389 = vmatprep.mubr.bf16.mxu0 0
  %2390 = vmatmul.mubr.bf16.gmra.mrb[0].mxu0 %v186
  %v2391 = vpop.f32.mrb[0].mxu0
  %v2392 = vadd.f32 0.0, %v2391
  %v2393 = vpop.f32.mrb[0].mxu0
  %v2394 = vpop.f32.mrb[0].mxu0
  %v2395 = vadd.f32 0.0, %v2394
  %v2396 = vpop.f32.mrb[0].mxu0
  %2397 = vmatprep.mubr.bf16.mxu0 0
  %2398 = vmatmul.mubr.bf16.gmra.mrb[0].mxu0 %v189
  %v2399 = vpop.f32.mrb[0].mxu0
  %v2400 = vadd.f32 0.0, %v2399
  %v2401 = vpop.f32.mrb[0].mxu0
  %v2402 = vpop.f32.mrb[0].mxu0
  %v2403 = vadd.f32 0.0, %v2402
  %v2404 = vpop.f32.mrb[0].mxu0
  %2405 = vdwg.mxu0
  %v2406 = vmul.f32 %v243, %v2280
  %v2407 = vmul.f32 %v248, %v2283
  %v2408 = vmul.f32 %v253, %v2288
  %v2409 = vmul.f32 %v258, %v2291
  %v2410 = vadd.f32 %v2406, %v2392
  %v2411 = vadd.f32 %v2407, %v2395
  %v2412 = vadd.f32 %v2408, %v2400
  %v2413 = vadd.f32 %v2409, %v2403
  %v2415 = vlaneseq
  %v2416 = vshrl.u32 %v2415, 7
  %v2417 = vsub.s32 0, %v2416
  %v2418 = vrot.slane %v2224, %v2417
  %v2420 = vadd.f32 %v2410, %v2418
  %v2421 = vadd.f32 %v2411, %v2418
  %v2422 = vadd.f32 %v2412, %v2418
  %v2423 = vadd.f32 %v2413, %v2418
  %s2424 = scalar_lea.vmem %s7, 6
  %v2425 = vld [vmem:[%s2424] sm:$0x1]
  %s2426 = scalar_lea.vmem %s8, 6
  %v2427 = vld [vmem:[%s2426] sm:$0x1]
  %v2428 = vmul.f32 %v2420, %v2420
  %v2429 = vmul.f32 %v2421, %v2421
  %v2430 = vmul.f32 %v2422, %v2422
  %v2431 = vmul.f32 %v2423, %v2423
  %2436 = vrot.lane.b32.xlu0 %v2428, 32
  %v2437 = vpop.permute.xlu0 %2436
  %2438 = vrot.lane.b32.xlu0 %v2429, 32
  %v2439 = vpop.permute.xlu0 %2438
  %2440 = vrot.lane.b32.xlu0 %v2430, 32
  %v2441 = vpop.permute.xlu0 %2440
  %2442 = vrot.lane.b32.xlu0 %v2431, 32
  %v2443 = vpop.permute.xlu0 %2442
  %v2448 = vsel %vm184, %v2420, %v2437
  %v2449 = vsel %vm184, %v2421, %v2439
  %v2450 = vsel %vm184, %v2422, %v2441
  %v2451 = vsel %vm184, %v2423, %v2443
  %v2452 = vsel %vm304, %v2448, 0.0
  %v2453 = vsel %vm304, %v2449, 0.0
  %v2454 = vadd.f32 %v2452, %v2453
  %v2455 = vsel %vm304, %v2450, 0.0
  %v2456 = vadd.f32 %v2454, %v2455
  %v2457 = vsel %vm304, %v2451, 0.0
  %v2458 = vadd.f32 %v2456, %v2457
  %v2459 = vrot.slane %v2458, 4
  %v2460 = vadd.f32 %v2458, %v2459
  %v2461 = vrot.slane %v2460, 2
  %v2462 = vadd.f32 %v2460, %v2461
  %v2463 = vrot.slane %v2462, 1
  %v2464 = vadd.f32 %v2462, %v2463
  %v2465 = vmul.f32 %v2464, 0.03125
  %v2466 = vmul.f32 %v2465, %v2465
  %2468 = vrot.lane.b32.xlu0 %v2466, 32
  %v2469 = vpop.permute.xlu0 %2468
  %v2471 = vsub.f32 %v2465, %v2469
  %v2472 = vsub.f32 %v2420, %v2465
  %v2473 = vsub.f32 %v2421, %v2465
  %v2474 = vsub.f32 %v2422, %v2465
  %v2475 = vsub.f32 %v2423, %v2465
  %v2476 = vadd.f32 %v2471, 1e-05
  %v2477 = vrsqrt.pop %v2476
  %v2478 = vlaneseq
  %v2479 = vshrl.u32 %v2478, 7
  %v2480 = vsub.s32 0, %v2479
  %v2481 = vrot.slane %v2477, %v2480
  %2483 = vrot.lane.b32.xlu0 %v2481, 96
  %v2484 = vpop.permute.xlu0 %2483
  %v2486 = vmul.f32 %v2472, %v2484
  %v2487 = vmul.f32 %v2473, %v2484
  %v2488 = vmul.f32 %v2474, %v2484
  %v2489 = vmul.f32 %v2475, %v2484
  %v2491 = vlaneseq
  %v2492 = vshrl.u32 %v2491, 7
  %v2493 = vsub.s32 0, %v2492
  %v2494 = vrot.slane %v2425, %v2493
  %v2496 = vmul.f32 %v2486, %v2494
  %v2497 = vmul.f32 %v2487, %v2494
  %v2498 = vmul.f32 %v2488, %v2494
  %v2499 = vmul.f32 %v2489, %v2494
  %v2501 = vlaneseq
  %v2502 = vshrl.u32 %v2501, 7
  %v2503 = vsub.s32 0, %v2502
  %v2504 = vrot.slane %v2427, %v2503
  %v2506 = vadd.f32 %v2496, %v2504
  %v2507 = vadd.f32 %v2497, %v2504
  %v2508 = vadd.f32 %v2498, %v2504
  %v2509 = vadd.f32 %v2499, %v2504
  %v2510 = vmax.f32 %v2506, 0.0
  %v2511 = vmax.f32 %v2507, 0.0
  %v2512 = vmax.f32 %v2508, 0.0
  %v2513 = vmax.f32 %v2509, 0.0
  %s2514 = scalar_lea.vmem %s5, 224
  %v2515 = vld [vmem:[%s2514] sm:$0xf]
  %v2516 = vld [vmem:[%s2514 + $0x4] sm:$0xf]
  %v2517 = vld [vmem:[%s2514 + $0x8] sm:$0xf]
  %v2518 = vld [vmem:[%s2514 + $0xc] sm:$0xf]
  %s2519 = scalar_lea.vmem %s5, 240
  %v2520 = vld [vmem:[%s2519] sm:$0xf]
  %v2521 = vld [vmem:[%s2519 + $0x4] sm:$0xf]
  %v2522 = vld [vmem:[%s2519 + $0x8] sm:$0xf]
  %v2523 = vld [vmem:[%s2519 + $0xc] sm:$0xf]
  %s2524 = scalar_lea.vmem %s6, 7
  %v2525 = vld [vmem:[%s2524] sm:$0x1]
  %v2526 = vpack.c.bf16 %v2511, %v2510
  %v2527 = vpack.c.bf16 %v2513, %v2512
  %v2532 = vunpack.c.l.b16 %v2515
  %v2533 = vunpack.c.l.b16 %v2516
  %v2534 = vunpack.c.l.b16 %v2517
  %v2535 = vunpack.c.l.b16 %v2518
  %v2536 = vpack.c.b16 %v2533, %v2532
  %v2537 = vpack.c.b16 %v2535, %v2534
  %v2541 = vsel %vm184, %v2526, 0
  %v2544 = vsel %vm184, %v2527, 0
  %2546 = vmatprep.subr.bf16.mxu0 0
  %2547 = vmatpush1.bf16.msra.mxu0 %v2536
  %2548 = vmatprep.subr.bf16.mxu0 0
  %2549 = vmatpush1.bf16.msra.mxu0 %v2537
  %2550 = vmatprep.subr.bf16.mxu0 0
  %2551 = vmatpush1.bf16.msra.mxu0 0
  %2552 = vmatprep.subr.bf16.mxu0 0
  %2553 = vmatpush1.bf16.msra.mxu0 0
  %2554 = vmatprep.subr.bf16.mxu0 0
  %2555 = vmatpush1.bf16.msra.mxu0 0
  %2556 = vmatprep.subr.bf16.mxu0 0
  %2557 = vmatpush1.bf16.msra.mxu0 0
  %2558 = vmatprep.subr.bf16.mxu0 0
  %2559 = vmatpush1.bf16.msra.mxu0 0
  %2560 = vmatprep.subr.bf16.mxu0 0
  %2561 = vmatpush1.bf16.msra.mxu0 0
  %2562 = vmatprep.subr.bf16.mxu0 0
  %2563 = vmatpush1.bf16.msra.mxu0 0
  %2564 = vmatprep.subr.bf16.mxu0 0
  %2565 = vmatpush1.bf16.msra.mxu0 0
  %2566 = vmatprep.subr.bf16.mxu0 0
  %2567 = vmatpush1.bf16.msra.mxu0 0
  %2568 = vmatprep.subr.bf16.mxu0 0
  %2569 = vmatpush1.bf16.msra.mxu0 0
  %2570 = vmatprep.subr.bf16.mxu0 0
  %2571 = vmatpush1.bf16.msra.mxu0 0
  %2572 = vmatprep.subr.bf16.mxu0 0
  %2573 = vmatpush1.bf16.msra.mxu0 0
  %2574 = vmatprep.subr.bf16.mxu0 0
  %2575 = vmatpush1.bf16.msra.mxu0 0
  %2576 = vmatprep.subr.bf16.mxu0 0
  %2577 = vmatpush1.bf16.msra.mxu0 0
  %2578 = vmatprep.mubr.bf16.mxu0 0
  %2579 = vmatmul.mubr.bf16.gmra.mrb[0].mxu0 %v2541
  %v2580 = vpop.f32.mrb[0].mxu0
  %v2581 = vadd.f32 0.0, %v2580
  %v2582 = vpop.f32.mrb[0].mxu0
  %v2583 = vpop.f32.mrb[0].mxu0
  %v2584 = vadd.f32 0.0, %v2583
  %v2585 = vpop.f32.mrb[0].mxu0
  %2586 = vmatprep.mubr.bf16.mxu0 0
  %2587 = vmatmul.mubr.bf16.gmra.mrb[0].mxu0 %v2544
  %v2588 = vpop.f32.mrb[0].mxu0
  %v2589 = vadd.f32 0.0, %v2588
  %v2590 = vpop.f32.mrb[0].mxu0
  %v2591 = vpop.f32.mrb[0].mxu0
  %v2592 = vadd.f32 0.0, %v2591
  %v2593 = vpop.f32.mrb[0].mxu0
  %2594 = vdwg.mxu0
  %v2599 = vunpack.c.l.b16 %v2520
  %v2600 = vunpack.c.l.b16 %v2521
  %v2601 = vunpack.c.l.b16 %v2522
  %v2602 = vunpack.c.l.b16 %v2523
  %v2603 = vpack.c.b16 %v2600, %v2599
  %v2604 = vpack.c.b16 %v2602, %v2601
  %2607 = vmatprep.subr.bf16.mxu0 0
  %2608 = vmatpush1.bf16.msra.mxu0 %v2603
  %2609 = vmatprep.subr.bf16.mxu0 0
  %2610 = vmatpush1.bf16.msra.mxu0 %v2604
  %2611 = vmatprep.subr.bf16.mxu0 0
  %2612 = vmatpush1.bf16.msra.mxu0 0
  %2613 = vmatprep.subr.bf16.mxu0 0
  %2614 = vmatpush1.bf16.msra.mxu0 0
  %2615 = vmatprep.subr.bf16.mxu0 0
  %2616 = vmatpush1.bf16.msra.mxu0 0
  %2617 = vmatprep.subr.bf16.mxu0 0
  %2618 = vmatpush1.bf16.msra.mxu0 0
  %2619 = vmatprep.subr.bf16.mxu0 0
  %2620 = vmatpush1.bf16.msra.mxu0 0
  %2621 = vmatprep.subr.bf16.mxu0 0
  %2622 = vmatpush1.bf16.msra.mxu0 0
  %2623 = vmatprep.subr.bf16.mxu0 0
  %2624 = vmatpush1.bf16.msra.mxu0 0
  %2625 = vmatprep.subr.bf16.mxu0 0
  %2626 = vmatpush1.bf16.msra.mxu0 0
  %2627 = vmatprep.subr.bf16.mxu0 0
  %2628 = vmatpush1.bf16.msra.mxu0 0
  %2629 = vmatprep.subr.bf16.mxu0 0
  %2630 = vmatpush1.bf16.msra.mxu0 0
  %2631 = vmatprep.subr.bf16.mxu0 0
  %2632 = vmatpush1.bf16.msra.mxu0 0
  %2633 = vmatprep.subr.bf16.mxu0 0
  %2634 = vmatpush1.bf16.msra.mxu0 0
  %2635 = vmatprep.subr.bf16.mxu0 0
  %2636 = vmatpush1.bf16.msra.mxu0 0
  %2637 = vmatprep.subr.bf16.mxu0 0
  %2638 = vmatpush1.bf16.msra.mxu0 0
  %2639 = vmatprep.mubr.bf16.mxu0 0
  %2640 = vmatmul.mubr.bf16.gmra.mrb[0].mxu0 %v2541
  %v2641 = vpop.f32.mrb[0].mxu0
  %v2642 = vadd.f32 0.0, %v2641
  %v2643 = vpop.f32.mrb[0].mxu0
  %v2644 = vpop.f32.mrb[0].mxu0
  %v2645 = vadd.f32 0.0, %v2644
  %v2646 = vpop.f32.mrb[0].mxu0
  %2647 = vmatprep.mubr.bf16.mxu0 0
  %2648 = vmatmul.mubr.bf16.gmra.mrb[0].mxu0 %v2544
  %v2649 = vpop.f32.mrb[0].mxu0
  %v2650 = vadd.f32 0.0, %v2649
  %v2651 = vpop.f32.mrb[0].mxu0
  %v2652 = vpop.f32.mrb[0].mxu0
  %v2653 = vadd.f32 0.0, %v2652
  %v2654 = vpop.f32.mrb[0].mxu0
  %2655 = vdwg.mxu0
  %v2656 = vpack.c.bf16 %v2645, %v2642
  %v2657 = vpack.c.bf16 %v2653, %v2650
  %2658 = vmatprep.subr.bf16.mxu0 0
  %2659 = vmatpush1.bf16.msra.mxu0 %v2656
  %2660 = vmatprep.subr.bf16.mxu0 0
  %2661 = vmatpush1.bf16.msra.mxu0 %v2657
  %2662 = vmatprep.subr.bf16.mxu0 0
  %2663 = vmatpush1.bf16.msra.mxu0 0
  %2664 = vmatprep.subr.bf16.mxu0 0
  %2665 = vmatpush1.bf16.msra.mxu0 0
  %2666 = vmatprep.subr.bf16.mxu0 0
  %2667 = vmatpush1.bf16.msra.mxu0 0
  %2668 = vmatprep.subr.bf16.mxu0 0
  %2669 = vmatpush1.bf16.msra.mxu0 0
  %2670 = vmatprep.subr.bf16.mxu0 0
  %2671 = vmatpush1.bf16.msra.mxu0 0
  %2672 = vmatprep.subr.bf16.mxu0 0
  %2673 = vmatpush1.bf16.msra.mxu0 0
  %2674 = vmatprep.subr.bf16.mxu0 0
  %2675 = vmatpush1.bf16.msra.mxu0 0
  %2676 = vmatprep.subr.bf16.mxu0 0
  %2677 = vmatpush1.bf16.msra.mxu0 0
  %2678 = vmatprep.subr.bf16.mxu0 0
  %2679 = vmatpush1.bf16.msra.mxu0 0
  %2680 = vmatprep.subr.bf16.mxu0 0
  %2681 = vmatpush1.bf16.msra.mxu0 0
  %2682 = vmatprep.subr.bf16.mxu0 0
  %2683 = vmatpush1.bf16.msra.mxu0 0
  %2684 = vmatprep.subr.bf16.mxu0 0
  %2685 = vmatpush1.bf16.msra.mxu0 0
  %2686 = vmatprep.subr.bf16.mxu0 0
  %2687 = vmatpush1.bf16.msra.mxu0 0
  %2688 = vmatprep.subr.bf16.mxu0 0
  %2689 = vmatpush1.bf16.msra.mxu0 0
  %2690 = vmatprep.mubr.bf16.mxu0 0
  %2691 = vmatmul.mubr.bf16.gmra.mrb[0].mxu0 %v186
  %v2692 = vpop.f32.mrb[0].mxu0
  %v2693 = vadd.f32 0.0, %v2692
  %v2694 = vpop.f32.mrb[0].mxu0
  %v2695 = vpop.f32.mrb[0].mxu0
  %v2696 = vadd.f32 0.0, %v2695
  %v2697 = vpop.f32.mrb[0].mxu0
  %2698 = vmatprep.mubr.bf16.mxu0 0
  %2699 = vmatmul.mubr.bf16.gmra.mrb[0].mxu0 %v189
  %v2700 = vpop.f32.mrb[0].mxu0
  %v2701 = vadd.f32 0.0, %v2700
  %v2702 = vpop.f32.mrb[0].mxu0
  %v2703 = vpop.f32.mrb[0].mxu0
  %v2704 = vadd.f32 0.0, %v2703
  %v2705 = vpop.f32.mrb[0].mxu0
  %2706 = vdwg.mxu0
  %v2707 = vmul.f32 %v243, %v2581
  %v2708 = vmul.f32 %v248, %v2584
  %v2709 = vmul.f32 %v253, %v2589
  %v2710 = vmul.f32 %v258, %v2592
  %v2711 = vadd.f32 %v2707, %v2693
  %v2712 = vadd.f32 %v2708, %v2696
  %v2713 = vadd.f32 %v2709, %v2701
  %v2714 = vadd.f32 %v2710, %v2704
  %v2716 = vlaneseq
  %v2717 = vshrl.u32 %v2716, 7
  %v2718 = vsub.s32 0, %v2717
  %v2719 = vrot.slane %v2525, %v2718
  %v2721 = vadd.f32 %v2711, %v2719
  %v2722 = vadd.f32 %v2712, %v2719
  %v2723 = vadd.f32 %v2713, %v2719
  %v2724 = vadd.f32 %v2714, %v2719
  %s2725 = scalar_lea.vmem %s7, 7
  %v2726 = vld [vmem:[%s2725] sm:$0x1]
  %s2727 = scalar_lea.vmem %s8, 7
  %v2728 = vld [vmem:[%s2727] sm:$0x1]
  %v2729 = vmul.f32 %v2721, %v2721
  %v2730 = vmul.f32 %v2722, %v2722
  %v2731 = vmul.f32 %v2723, %v2723
  %v2732 = vmul.f32 %v2724, %v2724
  %2737 = vrot.lane.b32.xlu0 %v2729, 32
  %v2738 = vpop.permute.xlu0 %2737
  %2739 = vrot.lane.b32.xlu0 %v2730, 32
  %v2740 = vpop.permute.xlu0 %2739
  %2741 = vrot.lane.b32.xlu0 %v2731, 32
  %v2742 = vpop.permute.xlu0 %2741
  %2743 = vrot.lane.b32.xlu0 %v2732, 32
  %v2744 = vpop.permute.xlu0 %2743
  %v2749 = vsel %vm184, %v2721, %v2738
  %v2750 = vsel %vm184, %v2722, %v2740
  %v2751 = vsel %vm184, %v2723, %v2742
  %v2752 = vsel %vm184, %v2724, %v2744
  %v2753 = vsel %vm304, %v2749, 0.0
  %v2754 = vsel %vm304, %v2750, 0.0
  %v2755 = vadd.f32 %v2753, %v2754
  %v2756 = vsel %vm304, %v2751, 0.0
  %v2757 = vadd.f32 %v2755, %v2756
  %v2758 = vsel %vm304, %v2752, 0.0
  %v2759 = vadd.f32 %v2757, %v2758
  %v2760 = vrot.slane %v2759, 4
  %v2761 = vadd.f32 %v2759, %v2760
  %v2762 = vrot.slane %v2761, 2
  %v2763 = vadd.f32 %v2761, %v2762
  %v2764 = vrot.slane %v2763, 1
  %v2765 = vadd.f32 %v2763, %v2764
  %v2766 = vmul.f32 %v2765, 0.03125
  %v2767 = vmul.f32 %v2766, %v2766
  %2769 = vrot.lane.b32.xlu0 %v2767, 32
  %v2770 = vpop.permute.xlu0 %2769
  %v2772 = vsub.f32 %v2766, %v2770
  %v2773 = vsub.f32 %v2721, %v2766
  %v2774 = vsub.f32 %v2722, %v2766
  %v2775 = vsub.f32 %v2723, %v2766
  %v2776 = vsub.f32 %v2724, %v2766
  %v2777 = vadd.f32 %v2772, 1e-05
  %v2778 = vrsqrt.pop %v2777
  %v2779 = vlaneseq
  %v2780 = vshrl.u32 %v2779, 7
  %v2781 = vsub.s32 0, %v2780
  %v2782 = vrot.slane %v2778, %v2781
  %2784 = vrot.lane.b32.xlu0 %v2782, 96
  %v2785 = vpop.permute.xlu0 %2784
  %v2787 = vmul.f32 %v2773, %v2785
  %v2788 = vmul.f32 %v2774, %v2785
  %v2789 = vmul.f32 %v2775, %v2785
  %v2790 = vmul.f32 %v2776, %v2785
  %v2792 = vlaneseq
  %v2793 = vshrl.u32 %v2792, 7
  %v2794 = vsub.s32 0, %v2793
  %v2795 = vrot.slane %v2726, %v2794
  %v2797 = vmul.f32 %v2787, %v2795
  %v2798 = vmul.f32 %v2788, %v2795
  %v2799 = vmul.f32 %v2789, %v2795
  %v2800 = vmul.f32 %v2790, %v2795
  %v2802 = vlaneseq
  %v2803 = vshrl.u32 %v2802, 7
  %v2804 = vsub.s32 0, %v2803
  %v2805 = vrot.slane %v2728, %v2804
  %v2807 = vadd.f32 %v2797, %v2805
  %v2808 = vadd.f32 %v2798, %v2805
  %v2809 = vadd.f32 %v2799, %v2805
  %v2810 = vadd.f32 %v2800, %v2805
  %v2811 = vmax.f32 %v2807, 0.0
  %v2812 = vmax.f32 %v2808, 0.0
  %v2813 = vmax.f32 %v2809, 0.0
  %v2814 = vmax.f32 %v2810, 0.0
  %v2815 = vadd.f32 %v2209, %v2811
  %v2816 = vadd.f32 %v2210, %v2812
  %v2817 = vadd.f32 %v2211, %v2813
  %v2818 = vadd.f32 %v2212, %v2814
  %s2819 = scalar_lea.vmem %s5, 256
  %v2820 = vld [vmem:[%s2819] sm:$0xf]
  %v2821 = vld [vmem:[%s2819 + $0x4] sm:$0xf]
  %v2822 = vld [vmem:[%s2819 + $0x8] sm:$0xf]
  %v2823 = vld [vmem:[%s2819 + $0xc] sm:$0xf]
  %s2824 = scalar_lea.vmem %s5, 272
  %v2825 = vld [vmem:[%s2824] sm:$0xf]
  %v2826 = vld [vmem:[%s2824 + $0x4] sm:$0xf]
  %v2827 = vld [vmem:[%s2824 + $0x8] sm:$0xf]
  %v2828 = vld [vmem:[%s2824 + $0xc] sm:$0xf]
  %s2829 = scalar_lea.vmem %s6, 8
  %v2830 = vld [vmem:[%s2829] sm:$0x1]
  %v2831 = vpack.c.bf16 %v2816, %v2815
  %v2832 = vpack.c.bf16 %v2818, %v2817
  %v2837 = vunpack.c.l.b16 %v2820
  %v2838 = vunpack.c.l.b16 %v2821
  %v2839 = vunpack.c.l.b16 %v2822
  %v2840 = vunpack.c.l.b16 %v2823
  %v2841 = vpack.c.b16 %v2838, %v2837
  %v2842 = vpack.c.b16 %v2840, %v2839
  %v2846 = vsel %vm184, %v2831, 0
  %v2849 = vsel %vm184, %v2832, 0
  %2851 = vmatprep.subr.bf16.mxu0 0
  %2852 = vmatpush1.bf16.msra.mxu0 %v2841
  %2853 = vmatprep.subr.bf16.mxu0 0
  %2854 = vmatpush1.bf16.msra.mxu0 %v2842
  %2855 = vmatprep.subr.bf16.mxu0 0
  %2856 = vmatpush1.bf16.msra.mxu0 0
  %2857 = vmatprep.subr.bf16.mxu0 0
  %2858 = vmatpush1.bf16.msra.mxu0 0
  %2859 = vmatprep.subr.bf16.mxu0 0
  %2860 = vmatpush1.bf16.msra.mxu0 0
  %2861 = vmatprep.subr.bf16.mxu0 0
  %2862 = vmatpush1.bf16.msra.mxu0 0
  %2863 = vmatprep.subr.bf16.mxu0 0
  %2864 = vmatpush1.bf16.msra.mxu0 0
  %2865 = vmatprep.subr.bf16.mxu0 0
  %2866 = vmatpush1.bf16.msra.mxu0 0
  %2867 = vmatprep.subr.bf16.mxu0 0
  %2868 = vmatpush1.bf16.msra.mxu0 0
  %2869 = vmatprep.subr.bf16.mxu0 0
  %2870 = vmatpush1.bf16.msra.mxu0 0
  %2871 = vmatprep.subr.bf16.mxu0 0
  %2872 = vmatpush1.bf16.msra.mxu0 0
  %2873 = vmatprep.subr.bf16.mxu0 0
  %2874 = vmatpush1.bf16.msra.mxu0 0
  %2875 = vmatprep.subr.bf16.mxu0 0
  %2876 = vmatpush1.bf16.msra.mxu0 0
  %2877 = vmatprep.subr.bf16.mxu0 0
  %2878 = vmatpush1.bf16.msra.mxu0 0
  %2879 = vmatprep.subr.bf16.mxu0 0
  %2880 = vmatpush1.bf16.msra.mxu0 0
  %2881 = vmatprep.subr.bf16.mxu0 0
  %2882 = vmatpush1.bf16.msra.mxu0 0
  %2883 = vmatprep.mubr.bf16.mxu0 0
  %2884 = vmatmul.mubr.bf16.gmra.mrb[0].mxu0 %v2846
  %v2885 = vpop.f32.mrb[0].mxu0
  %v2886 = vadd.f32 0.0, %v2885
  %v2887 = vpop.f32.mrb[0].mxu0
  %v2888 = vpop.f32.mrb[0].mxu0
  %v2889 = vadd.f32 0.0, %v2888
  %v2890 = vpop.f32.mrb[0].mxu0
  %2891 = vmatprep.mubr.bf16.mxu0 0
  %2892 = vmatmul.mubr.bf16.gmra.mrb[0].mxu0 %v2849
  %v2893 = vpop.f32.mrb[0].mxu0
  %v2894 = vadd.f32 0.0, %v2893
  %v2895 = vpop.f32.mrb[0].mxu0
  %v2896 = vpop.f32.mrb[0].mxu0
  %v2897 = vadd.f32 0.0, %v2896
  %v2898 = vpop.f32.mrb[0].mxu0
  %2899 = vdwg.mxu0
  %v2904 = vunpack.c.l.b16 %v2825
  %v2905 = vunpack.c.l.b16 %v2826
  %v2906 = vunpack.c.l.b16 %v2827
  %v2907 = vunpack.c.l.b16 %v2828
  %v2908 = vpack.c.b16 %v2905, %v2904
  %v2909 = vpack.c.b16 %v2907, %v2906
  %2912 = vmatprep.subr.bf16.mxu0 0
  %2913 = vmatpush1.bf16.msra.mxu0 %v2908
  %2914 = vmatprep.subr.bf16.mxu0 0
  %2915 = vmatpush1.bf16.msra.mxu0 %v2909
  %2916 = vmatprep.subr.bf16.mxu0 0
  %2917 = vmatpush1.bf16.msra.mxu0 0
  %2918 = vmatprep.subr.bf16.mxu0 0
  %2919 = vmatpush1.bf16.msra.mxu0 0
  %2920 = vmatprep.subr.bf16.mxu0 0
  %2921 = vmatpush1.bf16.msra.mxu0 0
  %2922 = vmatprep.subr.bf16.mxu0 0
  %2923 = vmatpush1.bf16.msra.mxu0 0
  %2924 = vmatprep.subr.bf16.mxu0 0
  %2925 = vmatpush1.bf16.msra.mxu0 0
  %2926 = vmatprep.subr.bf16.mxu0 0
  %2927 = vmatpush1.bf16.msra.mxu0 0
  %2928 = vmatprep.subr.bf16.mxu0 0
  %2929 = vmatpush1.bf16.msra.mxu0 0
  %2930 = vmatprep.subr.bf16.mxu0 0
  %2931 = vmatpush1.bf16.msra.mxu0 0
  %2932 = vmatprep.subr.bf16.mxu0 0
  %2933 = vmatpush1.bf16.msra.mxu0 0
  %2934 = vmatprep.subr.bf16.mxu0 0
  %2935 = vmatpush1.bf16.msra.mxu0 0
  %2936 = vmatprep.subr.bf16.mxu0 0
  %2937 = vmatpush1.bf16.msra.mxu0 0
  %2938 = vmatprep.subr.bf16.mxu0 0
  %2939 = vmatpush1.bf16.msra.mxu0 0
  %2940 = vmatprep.subr.bf16.mxu0 0
  %2941 = vmatpush1.bf16.msra.mxu0 0
  %2942 = vmatprep.subr.bf16.mxu0 0
  %2943 = vmatpush1.bf16.msra.mxu0 0
  %2944 = vmatprep.mubr.bf16.mxu0 0
  %2945 = vmatmul.mubr.bf16.gmra.mrb[0].mxu0 %v2846
  %v2946 = vpop.f32.mrb[0].mxu0
  %v2947 = vadd.f32 0.0, %v2946
  %v2948 = vpop.f32.mrb[0].mxu0
  %v2949 = vpop.f32.mrb[0].mxu0
  %v2950 = vadd.f32 0.0, %v2949
  %v2951 = vpop.f32.mrb[0].mxu0
  %2952 = vmatprep.mubr.bf16.mxu0 0
  %2953 = vmatmul.mubr.bf16.gmra.mrb[0].mxu0 %v2849
  %v2954 = vpop.f32.mrb[0].mxu0
  %v2955 = vadd.f32 0.0, %v2954
  %v2956 = vpop.f32.mrb[0].mxu0
  %v2957 = vpop.f32.mrb[0].mxu0
  %v2958 = vadd.f32 0.0, %v2957
  %v2959 = vpop.f32.mrb[0].mxu0
  %2960 = vdwg.mxu0
  %v2961 = vpack.c.bf16 %v2950, %v2947
  %v2962 = vpack.c.bf16 %v2958, %v2955
  %2963 = vmatprep.subr.bf16.mxu0 0
  %2964 = vmatpush1.bf16.msra.mxu0 %v2961
  %2965 = vmatprep.subr.bf16.mxu0 0
  %2966 = vmatpush1.bf16.msra.mxu0 %v2962
  %2967 = vmatprep.subr.bf16.mxu0 0
  %2968 = vmatpush1.bf16.msra.mxu0 0
  %2969 = vmatprep.subr.bf16.mxu0 0
  %2970 = vmatpush1.bf16.msra.mxu0 0
  %2971 = vmatprep.subr.bf16.mxu0 0
  %2972 = vmatpush1.bf16.msra.mxu0 0
  %2973 = vmatprep.subr.bf16.mxu0 0
  %2974 = vmatpush1.bf16.msra.mxu0 0
  %2975 = vmatprep.subr.bf16.mxu0 0
  %2976 = vmatpush1.bf16.msra.mxu0 0
  %2977 = vmatprep.subr.bf16.mxu0 0
  %2978 = vmatpush1.bf16.msra.mxu0 0
  %2979 = vmatprep.subr.bf16.mxu0 0
  %2980 = vmatpush1.bf16.msra.mxu0 0
  %2981 = vmatprep.subr.bf16.mxu0 0
  %2982 = vmatpush1.bf16.msra.mxu0 0
  %2983 = vmatprep.subr.bf16.mxu0 0
  %2984 = vmatpush1.bf16.msra.mxu0 0
  %2985 = vmatprep.subr.bf16.mxu0 0
  %2986 = vmatpush1.bf16.msra.mxu0 0
  %2987 = vmatprep.subr.bf16.mxu0 0
  %2988 = vmatpush1.bf16.msra.mxu0 0
  %2989 = vmatprep.subr.bf16.mxu0 0
  %2990 = vmatpush1.bf16.msra.mxu0 0
  %2991 = vmatprep.subr.bf16.mxu0 0
  %2992 = vmatpush1.bf16.msra.mxu0 0
  %2993 = vmatprep.subr.bf16.mxu0 0
  %2994 = vmatpush1.bf16.msra.mxu0 0
  %2995 = vmatprep.mubr.bf16.mxu0 0
  %2996 = vmatmul.mubr.bf16.gmra.mrb[0].mxu0 %v1124
  %v2997 = vpop.f32.mrb[0].mxu0
  %v2998 = vadd.f32 0.0, %v2997
  %v2999 = vpop.f32.mrb[0].mxu0
  %v3000 = vpop.f32.mrb[0].mxu0
  %v3001 = vadd.f32 0.0, %v3000
  %v3002 = vpop.f32.mrb[0].mxu0
  %3003 = vmatprep.mubr.bf16.mxu0 0
  %3004 = vmatmul.mubr.bf16.gmra.mrb[0].mxu0 %v1127
  %v3005 = vpop.f32.mrb[0].mxu0
  %v3006 = vadd.f32 0.0, %v3005
  %v3007 = vpop.f32.mrb[0].mxu0
  %v3008 = vpop.f32.mrb[0].mxu0
  %v3009 = vadd.f32 0.0, %v3008
  %v3010 = vpop.f32.mrb[0].mxu0
  %3011 = vdwg.mxu0
  %v3012 = vmul.f32 %v1181, %v2886
  %v3013 = vmul.f32 %v1186, %v2889
  %v3014 = vmul.f32 %v1191, %v2894
  %v3015 = vmul.f32 %v1196, %v2897
  %v3016 = vadd.f32 %v3012, %v2998
  %v3017 = vadd.f32 %v3013, %v3001
  %v3018 = vadd.f32 %v3014, %v3006
  %v3019 = vadd.f32 %v3015, %v3009
  %v3021 = vlaneseq
  %v3022 = vshrl.u32 %v3021, 7
  %v3023 = vsub.s32 0, %v3022
  %v3024 = vrot.slane %v2830, %v3023
  %v3026 = vadd.f32 %v3016, %v3024
  %v3027 = vadd.f32 %v3017, %v3024
  %v3028 = vadd.f32 %v3018, %v3024
  %v3029 = vadd.f32 %v3019, %v3024
  %s3030 = scalar_lea.vmem %s7, 8
  %v3031 = vld [vmem:[%s3030] sm:$0x1]
  %s3032 = scalar_lea.vmem %s8, 8
  %v3033 = vld [vmem:[%s3032] sm:$0x1]
  %v3034 = vmul.f32 %v3026, %v3026
  %v3035 = vmul.f32 %v3027, %v3027
  %v3036 = vmul.f32 %v3028, %v3028
  %v3037 = vmul.f32 %v3029, %v3029
  %3042 = vrot.lane.b32.xlu0 %v3034, 32
  %v3043 = vpop.permute.xlu0 %3042
  %3044 = vrot.lane.b32.xlu0 %v3035, 32
  %v3045 = vpop.permute.xlu0 %3044
  %3046 = vrot.lane.b32.xlu0 %v3036, 32
  %v3047 = vpop.permute.xlu0 %3046
  %3048 = vrot.lane.b32.xlu0 %v3037, 32
  %v3049 = vpop.permute.xlu0 %3048
  %v3054 = vsel %vm184, %v3026, %v3043
  %v3055 = vsel %vm184, %v3027, %v3045
  %v3056 = vsel %vm184, %v3028, %v3047
  %v3057 = vsel %vm184, %v3029, %v3049
  %v3058 = vsel %vm304, %v3054, 0.0
  %v3059 = vsel %vm304, %v3055, 0.0
  %v3060 = vadd.f32 %v3058, %v3059
  %v3061 = vsel %vm304, %v3056, 0.0
  %v3062 = vadd.f32 %v3060, %v3061
  %v3063 = vsel %vm304, %v3057, 0.0
  %v3064 = vadd.f32 %v3062, %v3063
  %v3065 = vrot.slane %v3064, 4
  %v3066 = vadd.f32 %v3064, %v3065
  %v3067 = vrot.slane %v3066, 2
  %v3068 = vadd.f32 %v3066, %v3067
  %v3069 = vrot.slane %v3068, 1
  %v3070 = vadd.f32 %v3068, %v3069
  %v3071 = vmul.f32 %v3070, 0.03125
  %v3072 = vmul.f32 %v3071, %v3071
  %3074 = vrot.lane.b32.xlu0 %v3072, 32
  %v3075 = vpop.permute.xlu0 %3074
  %v3077 = vsub.f32 %v3071, %v3075
  %v3078 = vsub.f32 %v3026, %v3071
  %v3079 = vsub.f32 %v3027, %v3071
  %v3080 = vsub.f32 %v3028, %v3071
  %v3081 = vsub.f32 %v3029, %v3071
  %v3082 = vadd.f32 %v3077, 1e-05
  %v3083 = vrsqrt.pop %v3082
  %v3084 = vlaneseq
  %v3085 = vshrl.u32 %v3084, 7
  %v3086 = vsub.s32 0, %v3085
  %v3087 = vrot.slane %v3083, %v3086
  %3089 = vrot.lane.b32.xlu0 %v3087, 96
  %v3090 = vpop.permute.xlu0 %3089
  %v3092 = vmul.f32 %v3078, %v3090
  %v3093 = vmul.f32 %v3079, %v3090
  %v3094 = vmul.f32 %v3080, %v3090
  %v3095 = vmul.f32 %v3081, %v3090
  %v3097 = vlaneseq
  %v3098 = vshrl.u32 %v3097, 7
  %v3099 = vsub.s32 0, %v3098
  %v3100 = vrot.slane %v3031, %v3099
  %v3102 = vmul.f32 %v3092, %v3100
  %v3103 = vmul.f32 %v3093, %v3100
  %v3104 = vmul.f32 %v3094, %v3100
  %v3105 = vmul.f32 %v3095, %v3100
  %v3107 = vlaneseq
  %v3108 = vshrl.u32 %v3107, 7
  %v3109 = vsub.s32 0, %v3108
  %v3110 = vrot.slane %v3033, %v3109
  %v3112 = vadd.f32 %v3102, %v3110
  %v3113 = vadd.f32 %v3103, %v3110
  %v3114 = vadd.f32 %v3104, %v3110
  %v3115 = vadd.f32 %v3105, %v3110
  %v3116 = vmax.f32 %v3112, 0.0
  %v3117 = vmax.f32 %v3113, 0.0
  %v3118 = vmax.f32 %v3114, 0.0
  %v3119 = vmax.f32 %v3115, 0.0
  %s3120 = scalar_lea.vmem %s5, 288
  %v3121 = vld [vmem:[%s3120] sm:$0xf]
  %v3122 = vld [vmem:[%s3120 + $0x4] sm:$0xf]
  %v3123 = vld [vmem:[%s3120 + $0x8] sm:$0xf]
  %v3124 = vld [vmem:[%s3120 + $0xc] sm:$0xf]
  %s3125 = scalar_lea.vmem %s5, 304
  %v3126 = vld [vmem:[%s3125] sm:$0xf]
  %v3127 = vld [vmem:[%s3125 + $0x4] sm:$0xf]
  %v3128 = vld [vmem:[%s3125 + $0x8] sm:$0xf]
  %v3129 = vld [vmem:[%s3125 + $0xc] sm:$0xf]
  %s3130 = scalar_lea.vmem %s6, 9
  %v3131 = vld [vmem:[%s3130] sm:$0x1]
  %v3132 = vpack.c.bf16 %v3117, %v3116
  %v3133 = vpack.c.bf16 %v3119, %v3118
  %v3138 = vunpack.c.l.b16 %v3121
  %v3139 = vunpack.c.l.b16 %v3122
  %v3140 = vunpack.c.l.b16 %v3123
  %v3141 = vunpack.c.l.b16 %v3124
  %v3142 = vpack.c.b16 %v3139, %v3138
  %v3143 = vpack.c.b16 %v3141, %v3140
  %v3147 = vsel %vm184, %v3132, 0
  %v3150 = vsel %vm184, %v3133, 0
  %3152 = vmatprep.subr.bf16.mxu0 0
  %3153 = vmatpush1.bf16.msra.mxu0 %v3142
  %3154 = vmatprep.subr.bf16.mxu0 0
  %3155 = vmatpush1.bf16.msra.mxu0 %v3143
  %3156 = vmatprep.subr.bf16.mxu0 0
  %3157 = vmatpush1.bf16.msra.mxu0 0
  %3158 = vmatprep.subr.bf16.mxu0 0
  %3159 = vmatpush1.bf16.msra.mxu0 0
  %3160 = vmatprep.subr.bf16.mxu0 0
  %3161 = vmatpush1.bf16.msra.mxu0 0
  %3162 = vmatprep.subr.bf16.mxu0 0
  %3163 = vmatpush1.bf16.msra.mxu0 0
  %3164 = vmatprep.subr.bf16.mxu0 0
  %3165 = vmatpush1.bf16.msra.mxu0 0
  %3166 = vmatprep.subr.bf16.mxu0 0
  %3167 = vmatpush1.bf16.msra.mxu0 0
  %3168 = vmatprep.subr.bf16.mxu0 0
  %3169 = vmatpush1.bf16.msra.mxu0 0
  %3170 = vmatprep.subr.bf16.mxu0 0
  %3171 = vmatpush1.bf16.msra.mxu0 0
  %3172 = vmatprep.subr.bf16.mxu0 0
  %3173 = vmatpush1.bf16.msra.mxu0 0
  %3174 = vmatprep.subr.bf16.mxu0 0
  %3175 = vmatpush1.bf16.msra.mxu0 0
  %3176 = vmatprep.subr.bf16.mxu0 0
  %3177 = vmatpush1.bf16.msra.mxu0 0
  %3178 = vmatprep.subr.bf16.mxu0 0
  %3179 = vmatpush1.bf16.msra.mxu0 0
  %3180 = vmatprep.subr.bf16.mxu0 0
  %3181 = vmatpush1.bf16.msra.mxu0 0
  %3182 = vmatprep.subr.bf16.mxu0 0
  %3183 = vmatpush1.bf16.msra.mxu0 0
  %3184 = vmatprep.mubr.bf16.mxu0 0
  %3185 = vmatmul.mubr.bf16.gmra.mrb[0].mxu0 %v3147
  %v3186 = vpop.f32.mrb[0].mxu0
  %v3187 = vadd.f32 0.0, %v3186
  %v3188 = vpop.f32.mrb[0].mxu0
  %v3189 = vpop.f32.mrb[0].mxu0
  %v3190 = vadd.f32 0.0, %v3189
  %v3191 = vpop.f32.mrb[0].mxu0
  %3192 = vmatprep.mubr.bf16.mxu0 0
  %3193 = vmatmul.mubr.bf16.gmra.mrb[0].mxu0 %v3150
  %v3194 = vpop.f32.mrb[0].mxu0
  %v3195 = vadd.f32 0.0, %v3194
  %v3196 = vpop.f32.mrb[0].mxu0
  %v3197 = vpop.f32.mrb[0].mxu0
  %v3198 = vadd.f32 0.0, %v3197
  %v3199 = vpop.f32.mrb[0].mxu0
  %3200 = vdwg.mxu0
  %v3205 = vunpack.c.l.b16 %v3126
  %v3206 = vunpack.c.l.b16 %v3127
  %v3207 = vunpack.c.l.b16 %v3128
  %v3208 = vunpack.c.l.b16 %v3129
  %v3209 = vpack.c.b16 %v3206, %v3205
  %v3210 = vpack.c.b16 %v3208, %v3207
  %3213 = vmatprep.subr.bf16.mxu0 0
  %3214 = vmatpush1.bf16.msra.mxu0 %v3209
  %3215 = vmatprep.subr.bf16.mxu0 0
  %3216 = vmatpush1.bf16.msra.mxu0 %v3210
  %3217 = vmatprep.subr.bf16.mxu0 0
  %3218 = vmatpush1.bf16.msra.mxu0 0
  %3219 = vmatprep.subr.bf16.mxu0 0
  %3220 = vmatpush1.bf16.msra.mxu0 0
  %3221 = vmatprep.subr.bf16.mxu0 0
  %3222 = vmatpush1.bf16.msra.mxu0 0
  %3223 = vmatprep.subr.bf16.mxu0 0
  %3224 = vmatpush1.bf16.msra.mxu0 0
  %3225 = vmatprep.subr.bf16.mxu0 0
  %3226 = vmatpush1.bf16.msra.mxu0 0
  %3227 = vmatprep.subr.bf16.mxu0 0
  %3228 = vmatpush1.bf16.msra.mxu0 0
  %3229 = vmatprep.subr.bf16.mxu0 0
  %3230 = vmatpush1.bf16.msra.mxu0 0
  %3231 = vmatprep.subr.bf16.mxu0 0
  %3232 = vmatpush1.bf16.msra.mxu0 0
  %3233 = vmatprep.subr.bf16.mxu0 0
  %3234 = vmatpush1.bf16.msra.mxu0 0
  %3235 = vmatprep.subr.bf16.mxu0 0
  %3236 = vmatpush1.bf16.msra.mxu0 0
  %3237 = vmatprep.subr.bf16.mxu0 0
  %3238 = vmatpush1.bf16.msra.mxu0 0
  %3239 = vmatprep.subr.bf16.mxu0 0
  %3240 = vmatpush1.bf16.msra.mxu0 0
  %3241 = vmatprep.subr.bf16.mxu0 0
  %3242 = vmatpush1.bf16.msra.mxu0 0
  %3243 = vmatprep.subr.bf16.mxu0 0
  %3244 = vmatpush1.bf16.msra.mxu0 0
  %3245 = vmatprep.mubr.bf16.mxu0 0
  %3246 = vmatmul.mubr.bf16.gmra.mrb[0].mxu0 %v3147
  %v3247 = vpop.f32.mrb[0].mxu0
  %v3248 = vadd.f32 0.0, %v3247
  %v3249 = vpop.f32.mrb[0].mxu0
  %v3250 = vpop.f32.mrb[0].mxu0
  %v3251 = vadd.f32 0.0, %v3250
  %v3252 = vpop.f32.mrb[0].mxu0
  %3253 = vmatprep.mubr.bf16.mxu0 0
  %3254 = vmatmul.mubr.bf16.gmra.mrb[0].mxu0 %v3150
  %v3255 = vpop.f32.mrb[0].mxu0
  %v3256 = vadd.f32 0.0, %v3255
  %v3257 = vpop.f32.mrb[0].mxu0
  %v3258 = vpop.f32.mrb[0].mxu0
  %v3259 = vadd.f32 0.0, %v3258
  %v3260 = vpop.f32.mrb[0].mxu0
  %3261 = vdwg.mxu0
  %v3262 = vpack.c.bf16 %v3251, %v3248
  %v3263 = vpack.c.bf16 %v3259, %v3256
  %3264 = vmatprep.subr.bf16.mxu0 0
  %3265 = vmatpush1.bf16.msra.mxu0 %v3262
  %3266 = vmatprep.subr.bf16.mxu0 0
  %3267 = vmatpush1.bf16.msra.mxu0 %v3263
  %3268 = vmatprep.subr.bf16.mxu0 0
  %3269 = vmatpush1.bf16.msra.mxu0 0
  %3270 = vmatprep.subr.bf16.mxu0 0
  %3271 = vmatpush1.bf16.msra.mxu0 0
  %3272 = vmatprep.subr.bf16.mxu0 0
  %3273 = vmatpush1.bf16.msra.mxu0 0
  %3274 = vmatprep.subr.bf16.mxu0 0
  %3275 = vmatpush1.bf16.msra.mxu0 0
  %3276 = vmatprep.subr.bf16.mxu0 0
  %3277 = vmatpush1.bf16.msra.mxu0 0
  %3278 = vmatprep.subr.bf16.mxu0 0
  %3279 = vmatpush1.bf16.msra.mxu0 0
  %3280 = vmatprep.subr.bf16.mxu0 0
  %3281 = vmatpush1.bf16.msra.mxu0 0
  %3282 = vmatprep.subr.bf16.mxu0 0
  %3283 = vmatpush1.bf16.msra.mxu0 0
  %3284 = vmatprep.subr.bf16.mxu0 0
  %3285 = vmatpush1.bf16.msra.mxu0 0
  %3286 = vmatprep.subr.bf16.mxu0 0
  %3287 = vmatpush1.bf16.msra.mxu0 0
  %3288 = vmatprep.subr.bf16.mxu0 0
  %3289 = vmatpush1.bf16.msra.mxu0 0
  %3290 = vmatprep.subr.bf16.mxu0 0
  %3291 = vmatpush1.bf16.msra.mxu0 0
  %3292 = vmatprep.subr.bf16.mxu0 0
  %3293 = vmatpush1.bf16.msra.mxu0 0
  %3294 = vmatprep.subr.bf16.mxu0 0
  %3295 = vmatpush1.bf16.msra.mxu0 0
  %3296 = vmatprep.mubr.bf16.mxu0 0
  %3297 = vmatmul.mubr.bf16.gmra.mrb[0].mxu0 %v186
  %v3298 = vpop.f32.mrb[0].mxu0
  %v3299 = vadd.f32 0.0, %v3298
  %v3300 = vpop.f32.mrb[0].mxu0
  %v3301 = vpop.f32.mrb[0].mxu0
  %v3302 = vadd.f32 0.0, %v3301
  %v3303 = vpop.f32.mrb[0].mxu0
  %3304 = vmatprep.mubr.bf16.mxu0 0
  %3305 = vmatmul.mubr.bf16.gmra.mrb[0].mxu0 %v189
  %v3306 = vpop.f32.mrb[0].mxu0
  %v3307 = vadd.f32 0.0, %v3306
  %v3308 = vpop.f32.mrb[0].mxu0
  %v3309 = vpop.f32.mrb[0].mxu0
  %v3310 = vadd.f32 0.0, %v3309
  %v3311 = vpop.f32.mrb[0].mxu0
  %3312 = vdwg.mxu0
  %v3313 = vmul.f32 %v243, %v3187
  %v3314 = vmul.f32 %v248, %v3190
  %v3315 = vmul.f32 %v253, %v3195
  %v3316 = vmul.f32 %v258, %v3198
  %v3317 = vadd.f32 %v3313, %v3299
  %v3318 = vadd.f32 %v3314, %v3302
  %v3319 = vadd.f32 %v3315, %v3307
  %v3320 = vadd.f32 %v3316, %v3310
  %v3322 = vlaneseq
  %v3323 = vshrl.u32 %v3322, 7
  %v3324 = vsub.s32 0, %v3323
  %v3325 = vrot.slane %v3131, %v3324
  %v3327 = vadd.f32 %v3317, %v3325
  %v3328 = vadd.f32 %v3318, %v3325
  %v3329 = vadd.f32 %v3319, %v3325
  %v3330 = vadd.f32 %v3320, %v3325
  %s3331 = scalar_lea.vmem %s7, 9
  %v3332 = vld [vmem:[%s3331] sm:$0x1]
  %s3333 = scalar_lea.vmem %s8, 9
  %v3334 = vld [vmem:[%s3333] sm:$0x1]
  %v3335 = vmul.f32 %v3327, %v3327
  %v3336 = vmul.f32 %v3328, %v3328
  %v3337 = vmul.f32 %v3329, %v3329
  %v3338 = vmul.f32 %v3330, %v3330
  %3343 = vrot.lane.b32.xlu0 %v3335, 32
  %v3344 = vpop.permute.xlu0 %3343
  %3345 = vrot.lane.b32.xlu0 %v3336, 32
  %v3346 = vpop.permute.xlu0 %3345
  %3347 = vrot.lane.b32.xlu0 %v3337, 32
  %v3348 = vpop.permute.xlu0 %3347
  %3349 = vrot.lane.b32.xlu0 %v3338, 32
  %v3350 = vpop.permute.xlu0 %3349
  %v3355 = vsel %vm184, %v3327, %v3344
  %v3356 = vsel %vm184, %v3328, %v3346
  %v3357 = vsel %vm184, %v3329, %v3348
  %v3358 = vsel %vm184, %v3330, %v3350
  %v3359 = vsel %vm304, %v3355, 0.0
  %v3360 = vsel %vm304, %v3356, 0.0
  %v3361 = vadd.f32 %v3359, %v3360
  %v3362 = vsel %vm304, %v3357, 0.0
  %v3363 = vadd.f32 %v3361, %v3362
  %v3364 = vsel %vm304, %v3358, 0.0
  %v3365 = vadd.f32 %v3363, %v3364
  %v3366 = vrot.slane %v3365, 4
  %v3367 = vadd.f32 %v3365, %v3366
  %v3368 = vrot.slane %v3367, 2
  %v3369 = vadd.f32 %v3367, %v3368
  %v3370 = vrot.slane %v3369, 1
  %v3371 = vadd.f32 %v3369, %v3370
  %v3372 = vmul.f32 %v3371, 0.03125
  %v3373 = vmul.f32 %v3372, %v3372
  %3375 = vrot.lane.b32.xlu0 %v3373, 32
  %v3376 = vpop.permute.xlu0 %3375
  %v3378 = vsub.f32 %v3372, %v3376
  %v3379 = vsub.f32 %v3327, %v3372
  %v3380 = vsub.f32 %v3328, %v3372
  %v3381 = vsub.f32 %v3329, %v3372
  %v3382 = vsub.f32 %v3330, %v3372
  %v3383 = vadd.f32 %v3378, 1e-05
  %v3384 = vrsqrt.pop %v3383
  %v3385 = vlaneseq
  %v3386 = vshrl.u32 %v3385, 7
  %v3387 = vsub.s32 0, %v3386
  %v3388 = vrot.slane %v3384, %v3387
  %3390 = vrot.lane.b32.xlu0 %v3388, 96
  %v3391 = vpop.permute.xlu0 %3390
  %v3393 = vmul.f32 %v3379, %v3391
  %v3394 = vmul.f32 %v3380, %v3391
  %v3395 = vmul.f32 %v3381, %v3391
  %v3396 = vmul.f32 %v3382, %v3391
  %v3398 = vlaneseq
  %v3399 = vshrl.u32 %v3398, 7
  %v3400 = vsub.s32 0, %v3399
  %v3401 = vrot.slane %v3332, %v3400
  %v3403 = vmul.f32 %v3393, %v3401
  %v3404 = vmul.f32 %v3394, %v3401
  %v3405 = vmul.f32 %v3395, %v3401
  %v3406 = vmul.f32 %v3396, %v3401
  %v3408 = vlaneseq
  %v3409 = vshrl.u32 %v3408, 7
  %v3410 = vsub.s32 0, %v3409
  %v3411 = vrot.slane %v3334, %v3410
  %v3413 = vadd.f32 %v3403, %v3411
  %v3414 = vadd.f32 %v3404, %v3411
  %v3415 = vadd.f32 %v3405, %v3411
  %v3416 = vadd.f32 %v3406, %v3411
  %v3417 = vmax.f32 %v3413, 0.0
  %v3418 = vmax.f32 %v3414, 0.0
  %v3419 = vmax.f32 %v3415, 0.0
  %v3420 = vmax.f32 %v3416, 0.0
  %s3421 = scalar_lea.vmem %s5, 320
  %v3422 = vld [vmem:[%s3421] sm:$0xf]
  %v3423 = vld [vmem:[%s3421 + $0x4] sm:$0xf]
  %v3424 = vld [vmem:[%s3421 + $0x8] sm:$0xf]
  %v3425 = vld [vmem:[%s3421 + $0xc] sm:$0xf]
  %s3426 = scalar_lea.vmem %s5, 336
  %v3427 = vld [vmem:[%s3426] sm:$0xf]
  %v3428 = vld [vmem:[%s3426 + $0x4] sm:$0xf]
  %v3429 = vld [vmem:[%s3426 + $0x8] sm:$0xf]
  %v3430 = vld [vmem:[%s3426 + $0xc] sm:$0xf]
  %s3431 = scalar_lea.vmem %s6, 10
  %v3432 = vld [vmem:[%s3431] sm:$0x1]
  %v3433 = vpack.c.bf16 %v3418, %v3417
  %v3434 = vpack.c.bf16 %v3420, %v3419
  %v3439 = vunpack.c.l.b16 %v3422
  %v3440 = vunpack.c.l.b16 %v3423
  %v3441 = vunpack.c.l.b16 %v3424
  %v3442 = vunpack.c.l.b16 %v3425
  %v3443 = vpack.c.b16 %v3440, %v3439
  %v3444 = vpack.c.b16 %v3442, %v3441
  %v3448 = vsel %vm184, %v3433, 0
  %v3451 = vsel %vm184, %v3434, 0
  %3453 = vmatprep.subr.bf16.mxu0 0
  %3454 = vmatpush1.bf16.msra.mxu0 %v3443
  %3455 = vmatprep.subr.bf16.mxu0 0
  %3456 = vmatpush1.bf16.msra.mxu0 %v3444
  %3457 = vmatprep.subr.bf16.mxu0 0
  %3458 = vmatpush1.bf16.msra.mxu0 0
  %3459 = vmatprep.subr.bf16.mxu0 0
  %3460 = vmatpush1.bf16.msra.mxu0 0
  %3461 = vmatprep.subr.bf16.mxu0 0
  %3462 = vmatpush1.bf16.msra.mxu0 0
  %3463 = vmatprep.subr.bf16.mxu0 0
  %3464 = vmatpush1.bf16.msra.mxu0 0
  %3465 = vmatprep.subr.bf16.mxu0 0
  %3466 = vmatpush1.bf16.msra.mxu0 0
  %3467 = vmatprep.subr.bf16.mxu0 0
  %3468 = vmatpush1.bf16.msra.mxu0 0
  %3469 = vmatprep.subr.bf16.mxu0 0
  %3470 = vmatpush1.bf16.msra.mxu0 0
  %3471 = vmatprep.subr.bf16.mxu0 0
  %3472 = vmatpush1.bf16.msra.mxu0 0
  %3473 = vmatprep.subr.bf16.mxu0 0
  %3474 = vmatpush1.bf16.msra.mxu0 0
  %3475 = vmatprep.subr.bf16.mxu0 0
  %3476 = vmatpush1.bf16.msra.mxu0 0
  %3477 = vmatprep.subr.bf16.mxu0 0
  %3478 = vmatpush1.bf16.msra.mxu0 0
  %3479 = vmatprep.subr.bf16.mxu0 0
  %3480 = vmatpush1.bf16.msra.mxu0 0
  %3481 = vmatprep.subr.bf16.mxu0 0
  %3482 = vmatpush1.bf16.msra.mxu0 0
  %3483 = vmatprep.subr.bf16.mxu0 0
  %3484 = vmatpush1.bf16.msra.mxu0 0
  %3485 = vmatprep.mubr.bf16.mxu0 0
  %3486 = vmatmul.mubr.bf16.gmra.mrb[0].mxu0 %v3448
  %v3487 = vpop.f32.mrb[0].mxu0
  %v3488 = vadd.f32 0.0, %v3487
  %v3489 = vpop.f32.mrb[0].mxu0
  %v3490 = vpop.f32.mrb[0].mxu0
  %v3491 = vadd.f32 0.0, %v3490
  %v3492 = vpop.f32.mrb[0].mxu0
  %3493 = vmatprep.mubr.bf16.mxu0 0
  %3494 = vmatmul.mubr.bf16.gmra.mrb[0].mxu0 %v3451
  %v3495 = vpop.f32.mrb[0].mxu0
  %v3496 = vadd.f32 0.0, %v3495
  %v3497 = vpop.f32.mrb[0].mxu0
  %v3498 = vpop.f32.mrb[0].mxu0
  %v3499 = vadd.f32 0.0, %v3498
  %v3500 = vpop.f32.mrb[0].mxu0
  %3501 = vdwg.mxu0
  %v3506 = vunpack.c.l.b16 %v3427
  %v3507 = vunpack.c.l.b16 %v3428
  %v3508 = vunpack.c.l.b16 %v3429
  %v3509 = vunpack.c.l.b16 %v3430
  %v3510 = vpack.c.b16 %v3507, %v3506
  %v3511 = vpack.c.b16 %v3509, %v3508
  %3514 = vmatprep.subr.bf16.mxu0 0
  %3515 = vmatpush1.bf16.msra.mxu0 %v3510
  %3516 = vmatprep.subr.bf16.mxu0 0
  %3517 = vmatpush1.bf16.msra.mxu0 %v3511
  %3518 = vmatprep.subr.bf16.mxu0 0
  %3519 = vmatpush1.bf16.msra.mxu0 0
  %3520 = vmatprep.subr.bf16.mxu0 0
  %3521 = vmatpush1.bf16.msra.mxu0 0
  %3522 = vmatprep.subr.bf16.mxu0 0
  %3523 = vmatpush1.bf16.msra.mxu0 0
  %3524 = vmatprep.subr.bf16.mxu0 0
  %3525 = vmatpush1.bf16.msra.mxu0 0
  %3526 = vmatprep.subr.bf16.mxu0 0
  %3527 = vmatpush1.bf16.msra.mxu0 0
  %3528 = vmatprep.subr.bf16.mxu0 0
  %3529 = vmatpush1.bf16.msra.mxu0 0
  %3530 = vmatprep.subr.bf16.mxu0 0
  %3531 = vmatpush1.bf16.msra.mxu0 0
  %3532 = vmatprep.subr.bf16.mxu0 0
  %3533 = vmatpush1.bf16.msra.mxu0 0
  %3534 = vmatprep.subr.bf16.mxu0 0
  %3535 = vmatpush1.bf16.msra.mxu0 0
  %3536 = vmatprep.subr.bf16.mxu0 0
  %3537 = vmatpush1.bf16.msra.mxu0 0
  %3538 = vmatprep.subr.bf16.mxu0 0
  %3539 = vmatpush1.bf16.msra.mxu0 0
  %3540 = vmatprep.subr.bf16.mxu0 0
  %3541 = vmatpush1.bf16.msra.mxu0 0
  %3542 = vmatprep.subr.bf16.mxu0 0
  %3543 = vmatpush1.bf16.msra.mxu0 0
  %3544 = vmatprep.subr.bf16.mxu0 0
  %3545 = vmatpush1.bf16.msra.mxu0 0
  %3546 = vmatprep.mubr.bf16.mxu0 0
  %3547 = vmatmul.mubr.bf16.gmra.mrb[0].mxu0 %v3448
  %v3548 = vpop.f32.mrb[0].mxu0
  %v3549 = vadd.f32 0.0, %v3548
  %v3550 = vpop.f32.mrb[0].mxu0
  %v3551 = vpop.f32.mrb[0].mxu0
  %v3552 = vadd.f32 0.0, %v3551
  %v3553 = vpop.f32.mrb[0].mxu0
  %3554 = vmatprep.mubr.bf16.mxu0 0
  %3555 = vmatmul.mubr.bf16.gmra.mrb[0].mxu0 %v3451
  %v3556 = vpop.f32.mrb[0].mxu0
  %v3557 = vadd.f32 0.0, %v3556
  %v3558 = vpop.f32.mrb[0].mxu0
  %v3559 = vpop.f32.mrb[0].mxu0
  %v3560 = vadd.f32 0.0, %v3559
  %v3561 = vpop.f32.mrb[0].mxu0
  %3562 = vdwg.mxu0
  %v3563 = vpack.c.bf16 %v3552, %v3549
  %v3564 = vpack.c.bf16 %v3560, %v3557
  %3565 = vmatprep.subr.bf16.mxu0 0
  %3566 = vmatpush1.bf16.msra.mxu0 %v3563
  %3567 = vmatprep.subr.bf16.mxu0 0
  %3568 = vmatpush1.bf16.msra.mxu0 %v3564
  %3569 = vmatprep.subr.bf16.mxu0 0
  %3570 = vmatpush1.bf16.msra.mxu0 0
  %3571 = vmatprep.subr.bf16.mxu0 0
  %3572 = vmatpush1.bf16.msra.mxu0 0
  %3573 = vmatprep.subr.bf16.mxu0 0
  %3574 = vmatpush1.bf16.msra.mxu0 0
  %3575 = vmatprep.subr.bf16.mxu0 0
  %3576 = vmatpush1.bf16.msra.mxu0 0
  %3577 = vmatprep.subr.bf16.mxu0 0
  %3578 = vmatpush1.bf16.msra.mxu0 0
  %3579 = vmatprep.subr.bf16.mxu0 0
  %3580 = vmatpush1.bf16.msra.mxu0 0
  %3581 = vmatprep.subr.bf16.mxu0 0
  %3582 = vmatpush1.bf16.msra.mxu0 0
  %3583 = vmatprep.subr.bf16.mxu0 0
  %3584 = vmatpush1.bf16.msra.mxu0 0
  %3585 = vmatprep.subr.bf16.mxu0 0
  %3586 = vmatpush1.bf16.msra.mxu0 0
  %3587 = vmatprep.subr.bf16.mxu0 0
  %3588 = vmatpush1.bf16.msra.mxu0 0
  %3589 = vmatprep.subr.bf16.mxu0 0
  %3590 = vmatpush1.bf16.msra.mxu0 0
  %3591 = vmatprep.subr.bf16.mxu0 0
  %3592 = vmatpush1.bf16.msra.mxu0 0
  %3593 = vmatprep.subr.bf16.mxu0 0
  %3594 = vmatpush1.bf16.msra.mxu0 0
  %3595 = vmatprep.subr.bf16.mxu0 0
  %3596 = vmatpush1.bf16.msra.mxu0 0
  %3597 = vmatprep.mubr.bf16.mxu0 0
  %3598 = vmatmul.mubr.bf16.gmra.mrb[0].mxu0 %v186
  %v3599 = vpop.f32.mrb[0].mxu0
  %v3600 = vadd.f32 0.0, %v3599
  %v3601 = vpop.f32.mrb[0].mxu0
  %v3602 = vpop.f32.mrb[0].mxu0
  %v3603 = vadd.f32 0.0, %v3602
  %v3604 = vpop.f32.mrb[0].mxu0
  %3605 = vmatprep.mubr.bf16.mxu0 0
  %3606 = vmatmul.mubr.bf16.gmra.mrb[0].mxu0 %v189
  %v3607 = vpop.f32.mrb[0].mxu0
  %v3608 = vadd.f32 0.0, %v3607
  %v3609 = vpop.f32.mrb[0].mxu0
  %v3610 = vpop.f32.mrb[0].mxu0
  %v3611 = vadd.f32 0.0, %v3610
  %v3612 = vpop.f32.mrb[0].mxu0
  %3613 = vdwg.mxu0
  %v3614 = vmul.f32 %v243, %v3488
  %v3615 = vmul.f32 %v248, %v3491
  %v3616 = vmul.f32 %v253, %v3496
  %v3617 = vmul.f32 %v258, %v3499
  %v3618 = vadd.f32 %v3614, %v3600
  %v3619 = vadd.f32 %v3615, %v3603
  %v3620 = vadd.f32 %v3616, %v3608
  %v3621 = vadd.f32 %v3617, %v3611
  %v3623 = vlaneseq
  %v3624 = vshrl.u32 %v3623, 7
  %v3625 = vsub.s32 0, %v3624
  %v3626 = vrot.slane %v3432, %v3625
  %v3628 = vadd.f32 %v3618, %v3626
  %v3629 = vadd.f32 %v3619, %v3626
  %v3630 = vadd.f32 %v3620, %v3626
  %v3631 = vadd.f32 %v3621, %v3626
  %s3632 = scalar_lea.vmem %s7, 10
  %v3633 = vld [vmem:[%s3632] sm:$0x1]
  %s3634 = scalar_lea.vmem %s8, 10
  %v3635 = vld [vmem:[%s3634] sm:$0x1]
  %v3636 = vmul.f32 %v3628, %v3628
  %v3637 = vmul.f32 %v3629, %v3629
  %v3638 = vmul.f32 %v3630, %v3630
  %v3639 = vmul.f32 %v3631, %v3631
  %3644 = vrot.lane.b32.xlu0 %v3636, 32
  %v3645 = vpop.permute.xlu0 %3644
  %3646 = vrot.lane.b32.xlu0 %v3637, 32
  %v3647 = vpop.permute.xlu0 %3646
  %3648 = vrot.lane.b32.xlu0 %v3638, 32
  %v3649 = vpop.permute.xlu0 %3648
  %3650 = vrot.lane.b32.xlu0 %v3639, 32
  %v3651 = vpop.permute.xlu0 %3650
  %v3656 = vsel %vm184, %v3628, %v3645
  %v3657 = vsel %vm184, %v3629, %v3647
  %v3658 = vsel %vm184, %v3630, %v3649
  %v3659 = vsel %vm184, %v3631, %v3651
  %v3660 = vsel %vm304, %v3656, 0.0
  %v3661 = vsel %vm304, %v3657, 0.0
  %v3662 = vadd.f32 %v3660, %v3661
  %v3663 = vsel %vm304, %v3658, 0.0
  %v3664 = vadd.f32 %v3662, %v3663
  %v3665 = vsel %vm304, %v3659, 0.0
  %v3666 = vadd.f32 %v3664, %v3665
  %v3667 = vrot.slane %v3666, 4
  %v3668 = vadd.f32 %v3666, %v3667
  %v3669 = vrot.slane %v3668, 2
  %v3670 = vadd.f32 %v3668, %v3669
  %v3671 = vrot.slane %v3670, 1
  %v3672 = vadd.f32 %v3670, %v3671
  %v3673 = vmul.f32 %v3672, 0.03125
  %v3674 = vmul.f32 %v3673, %v3673
  %3676 = vrot.lane.b32.xlu0 %v3674, 32
  %v3677 = vpop.permute.xlu0 %3676
  %v3679 = vsub.f32 %v3673, %v3677
  %v3680 = vsub.f32 %v3628, %v3673
  %v3681 = vsub.f32 %v3629, %v3673
  %v3682 = vsub.f32 %v3630, %v3673
  %v3683 = vsub.f32 %v3631, %v3673
  %v3684 = vadd.f32 %v3679, 1e-05
  %v3685 = vrsqrt.pop %v3684
  %v3686 = vlaneseq
  %v3687 = vshrl.u32 %v3686, 7
  %v3688 = vsub.s32 0, %v3687
  %v3689 = vrot.slane %v3685, %v3688
  %3691 = vrot.lane.b32.xlu0 %v3689, 96
  %v3692 = vpop.permute.xlu0 %3691
  %v3694 = vmul.f32 %v3680, %v3692
  %v3695 = vmul.f32 %v3681, %v3692
  %v3696 = vmul.f32 %v3682, %v3692
  %v3697 = vmul.f32 %v3683, %v3692
  %v3699 = vlaneseq
  %v3700 = vshrl.u32 %v3699, 7
  %v3701 = vsub.s32 0, %v3700
  %v3702 = vrot.slane %v3633, %v3701
  %v3704 = vmul.f32 %v3694, %v3702
  %v3705 = vmul.f32 %v3695, %v3702
  %v3706 = vmul.f32 %v3696, %v3702
  %v3707 = vmul.f32 %v3697, %v3702
  %v3709 = vlaneseq
  %v3710 = vshrl.u32 %v3709, 7
  %v3711 = vsub.s32 0, %v3710
  %v3712 = vrot.slane %v3635, %v3711
  %v3714 = vadd.f32 %v3704, %v3712
  %v3715 = vadd.f32 %v3705, %v3712
  %v3716 = vadd.f32 %v3706, %v3712
  %v3717 = vadd.f32 %v3707, %v3712
  %v3718 = vmax.f32 %v3714, 0.0
  %v3719 = vmax.f32 %v3715, 0.0
  %v3720 = vmax.f32 %v3716, 0.0
  %v3721 = vmax.f32 %v3717, 0.0
  %v3722 = vadd.f32 %v3116, %v3718
  %v3723 = vadd.f32 %v3117, %v3719
  %v3724 = vadd.f32 %v3118, %v3720
  %v3725 = vadd.f32 %v3119, %v3721
  %s3726 = scalar_lea.vmem %s5, 352
  %v3727 = vld [vmem:[%s3726] sm:$0xf]
  %v3728 = vld [vmem:[%s3726 + $0x4] sm:$0xf]
  %v3729 = vld [vmem:[%s3726 + $0x8] sm:$0xf]
  %v3730 = vld [vmem:[%s3726 + $0xc] sm:$0xf]
  %s3731 = scalar_lea.vmem %s5, 368
  %v3732 = vld [vmem:[%s3731] sm:$0xf]
  %v3733 = vld [vmem:[%s3731 + $0x4] sm:$0xf]
  %v3734 = vld [vmem:[%s3731 + $0x8] sm:$0xf]
  %v3735 = vld [vmem:[%s3731 + $0xc] sm:$0xf]
  %s3736 = scalar_lea.vmem %s6, 11
  %v3737 = vld [vmem:[%s3736] sm:$0x1]
  %v3738 = vpack.c.bf16 %v3723, %v3722
  %v3739 = vpack.c.bf16 %v3725, %v3724
  %v3744 = vunpack.c.l.b16 %v3727
  %v3745 = vunpack.c.l.b16 %v3728
  %v3746 = vunpack.c.l.b16 %v3729
  %v3747 = vunpack.c.l.b16 %v3730
  %v3748 = vpack.c.b16 %v3745, %v3744
  %v3749 = vpack.c.b16 %v3747, %v3746
  %v3753 = vsel %vm184, %v3738, 0
  %v3756 = vsel %vm184, %v3739, 0
  %3758 = vmatprep.subr.bf16.mxu0 0
  %3759 = vmatpush1.bf16.msra.mxu0 %v3748
  %3760 = vmatprep.subr.bf16.mxu0 0
  %3761 = vmatpush1.bf16.msra.mxu0 %v3749
  %3762 = vmatprep.subr.bf16.mxu0 0
  %3763 = vmatpush1.bf16.msra.mxu0 0
  %3764 = vmatprep.subr.bf16.mxu0 0
  %3765 = vmatpush1.bf16.msra.mxu0 0
  %3766 = vmatprep.subr.bf16.mxu0 0
  %3767 = vmatpush1.bf16.msra.mxu0 0
  %3768 = vmatprep.subr.bf16.mxu0 0
  %3769 = vmatpush1.bf16.msra.mxu0 0
  %3770 = vmatprep.subr.bf16.mxu0 0
  %3771 = vmatpush1.bf16.msra.mxu0 0
  %3772 = vmatprep.subr.bf16.mxu0 0
  %3773 = vmatpush1.bf16.msra.mxu0 0
  %3774 = vmatprep.subr.bf16.mxu0 0
  %3775 = vmatpush1.bf16.msra.mxu0 0
  %3776 = vmatprep.subr.bf16.mxu0 0
  %3777 = vmatpush1.bf16.msra.mxu0 0
  %3778 = vmatprep.subr.bf16.mxu0 0
  %3779 = vmatpush1.bf16.msra.mxu0 0
  %3780 = vmatprep.subr.bf16.mxu0 0
  %3781 = vmatpush1.bf16.msra.mxu0 0
  %3782 = vmatprep.subr.bf16.mxu0 0
  %3783 = vmatpush1.bf16.msra.mxu0 0
  %3784 = vmatprep.subr.bf16.mxu0 0
  %3785 = vmatpush1.bf16.msra.mxu0 0
  %3786 = vmatprep.subr.bf16.mxu0 0
  %3787 = vmatpush1.bf16.msra.mxu0 0
  %3788 = vmatprep.subr.bf16.mxu0 0
  %3789 = vmatpush1.bf16.msra.mxu0 0
  %3790 = vmatprep.mubr.bf16.mxu0 0
  %3791 = vmatmul.mubr.bf16.gmra.mrb[0].mxu0 %v3753
  %v3792 = vpop.f32.mrb[0].mxu0
  %v3793 = vadd.f32 0.0, %v3792
  %v3794 = vpop.f32.mrb[0].mxu0
  %v3795 = vpop.f32.mrb[0].mxu0
  %v3796 = vadd.f32 0.0, %v3795
  %v3797 = vpop.f32.mrb[0].mxu0
  %3798 = vmatprep.mubr.bf16.mxu0 0
  %3799 = vmatmul.mubr.bf16.gmra.mrb[0].mxu0 %v3756
  %v3800 = vpop.f32.mrb[0].mxu0
  %v3801 = vadd.f32 0.0, %v3800
  %v3802 = vpop.f32.mrb[0].mxu0
  %v3803 = vpop.f32.mrb[0].mxu0
  %v3804 = vadd.f32 0.0, %v3803
  %v3805 = vpop.f32.mrb[0].mxu0
  %3806 = vdwg.mxu0
  %v3811 = vunpack.c.l.b16 %v3732
  %v3812 = vunpack.c.l.b16 %v3733
  %v3813 = vunpack.c.l.b16 %v3734
  %v3814 = vunpack.c.l.b16 %v3735
  %v3815 = vpack.c.b16 %v3812, %v3811
  %v3816 = vpack.c.b16 %v3814, %v3813
  %3819 = vmatprep.subr.bf16.mxu0 0
  %3820 = vmatpush1.bf16.msra.mxu0 %v3815
  %3821 = vmatprep.subr.bf16.mxu0 0
  %3822 = vmatpush1.bf16.msra.mxu0 %v3816
  %3823 = vmatprep.subr.bf16.mxu0 0
  %3824 = vmatpush1.bf16.msra.mxu0 0
  %3825 = vmatprep.subr.bf16.mxu0 0
  %3826 = vmatpush1.bf16.msra.mxu0 0
  %3827 = vmatprep.subr.bf16.mxu0 0
  %3828 = vmatpush1.bf16.msra.mxu0 0
  %3829 = vmatprep.subr.bf16.mxu0 0
  %3830 = vmatpush1.bf16.msra.mxu0 0
  %3831 = vmatprep.subr.bf16.mxu0 0
  %3832 = vmatpush1.bf16.msra.mxu0 0
  %3833 = vmatprep.subr.bf16.mxu0 0
  %3834 = vmatpush1.bf16.msra.mxu0 0
  %3835 = vmatprep.subr.bf16.mxu0 0
  %3836 = vmatpush1.bf16.msra.mxu0 0
  %3837 = vmatprep.subr.bf16.mxu0 0
  %3838 = vmatpush1.bf16.msra.mxu0 0
  %3839 = vmatprep.subr.bf16.mxu0 0
  %3840 = vmatpush1.bf16.msra.mxu0 0
  %3841 = vmatprep.subr.bf16.mxu0 0
  %3842 = vmatpush1.bf16.msra.mxu0 0
  %3843 = vmatprep.subr.bf16.mxu0 0
  %3844 = vmatpush1.bf16.msra.mxu0 0
  %3845 = vmatprep.subr.bf16.mxu0 0
  %3846 = vmatpush1.bf16.msra.mxu0 0
  %3847 = vmatprep.subr.bf16.mxu0 0
  %3848 = vmatpush1.bf16.msra.mxu0 0
  %3849 = vmatprep.subr.bf16.mxu0 0
  %3850 = vmatpush1.bf16.msra.mxu0 0
  %3851 = vmatprep.mubr.bf16.mxu0 0
  %3852 = vmatmul.mubr.bf16.gmra.mrb[0].mxu0 %v3753
  %v3853 = vpop.f32.mrb[0].mxu0
  %v3854 = vadd.f32 0.0, %v3853
  %v3855 = vpop.f32.mrb[0].mxu0
  %v3856 = vpop.f32.mrb[0].mxu0
  %v3857 = vadd.f32 0.0, %v3856
  %v3858 = vpop.f32.mrb[0].mxu0
  %3859 = vmatprep.mubr.bf16.mxu0 0
  %3860 = vmatmul.mubr.bf16.gmra.mrb[0].mxu0 %v3756
  %v3861 = vpop.f32.mrb[0].mxu0
  %v3862 = vadd.f32 0.0, %v3861
  %v3863 = vpop.f32.mrb[0].mxu0
  %v3864 = vpop.f32.mrb[0].mxu0
  %v3865 = vadd.f32 0.0, %v3864
  %v3866 = vpop.f32.mrb[0].mxu0
  %3867 = vdwg.mxu0
  %v3868 = vpack.c.bf16 %v3857, %v3854
  %v3869 = vpack.c.bf16 %v3865, %v3862
  %3870 = vmatprep.subr.bf16.mxu0 0
  %3871 = vmatpush1.bf16.msra.mxu0 %v3868
  %3872 = vmatprep.subr.bf16.mxu0 0
  %3873 = vmatpush1.bf16.msra.mxu0 %v3869
  %3874 = vmatprep.subr.bf16.mxu0 0
  %3875 = vmatpush1.bf16.msra.mxu0 0
  %3876 = vmatprep.subr.bf16.mxu0 0
  %3877 = vmatpush1.bf16.msra.mxu0 0
  %3878 = vmatprep.subr.bf16.mxu0 0
  %3879 = vmatpush1.bf16.msra.mxu0 0
  %3880 = vmatprep.subr.bf16.mxu0 0
  %3881 = vmatpush1.bf16.msra.mxu0 0
  %3882 = vmatprep.subr.bf16.mxu0 0
  %3883 = vmatpush1.bf16.msra.mxu0 0
  %3884 = vmatprep.subr.bf16.mxu0 0
  %3885 = vmatpush1.bf16.msra.mxu0 0
  %3886 = vmatprep.subr.bf16.mxu0 0
  %3887 = vmatpush1.bf16.msra.mxu0 0
  %3888 = vmatprep.subr.bf16.mxu0 0
  %3889 = vmatpush1.bf16.msra.mxu0 0
  %3890 = vmatprep.subr.bf16.mxu0 0
  %3891 = vmatpush1.bf16.msra.mxu0 0
  %3892 = vmatprep.subr.bf16.mxu0 0
  %3893 = vmatpush1.bf16.msra.mxu0 0
  %3894 = vmatprep.subr.bf16.mxu0 0
  %3895 = vmatpush1.bf16.msra.mxu0 0
  %3896 = vmatprep.subr.bf16.mxu0 0
  %3897 = vmatpush1.bf16.msra.mxu0 0
  %3898 = vmatprep.subr.bf16.mxu0 0
  %3899 = vmatpush1.bf16.msra.mxu0 0
  %3900 = vmatprep.subr.bf16.mxu0 0
  %3901 = vmatpush1.bf16.msra.mxu0 0
  %3902 = vmatprep.mubr.bf16.mxu0 0
  %3903 = vmatmul.mubr.bf16.gmra.mrb[0].mxu0 %v1124
  %v3904 = vpop.f32.mrb[0].mxu0
  %v3905 = vadd.f32 0.0, %v3904
  %v3906 = vpop.f32.mrb[0].mxu0
  %v3907 = vpop.f32.mrb[0].mxu0
  %v3908 = vadd.f32 0.0, %v3907
  %v3909 = vpop.f32.mrb[0].mxu0
  %3910 = vmatprep.mubr.bf16.mxu0 0
  %3911 = vmatmul.mubr.bf16.gmra.mrb[0].mxu0 %v1127
  %v3912 = vpop.f32.mrb[0].mxu0
  %v3913 = vadd.f32 0.0, %v3912
  %v3914 = vpop.f32.mrb[0].mxu0
  %v3915 = vpop.f32.mrb[0].mxu0
  %v3916 = vadd.f32 0.0, %v3915
  %v3917 = vpop.f32.mrb[0].mxu0
  %3918 = vdwg.mxu0
  %v3919 = vmul.f32 %v1181, %v3793
  %v3920 = vmul.f32 %v1186, %v3796
  %v3921 = vmul.f32 %v1191, %v3801
  %v3922 = vmul.f32 %v1196, %v3804
  %v3923 = vadd.f32 %v3919, %v3905
  %v3924 = vadd.f32 %v3920, %v3908
  %v3925 = vadd.f32 %v3921, %v3913
  %v3926 = vadd.f32 %v3922, %v3916
  %v3928 = vlaneseq
  %v3929 = vshrl.u32 %v3928, 7
  %v3930 = vsub.s32 0, %v3929
  %v3931 = vrot.slane %v3737, %v3930
  %v3933 = vadd.f32 %v3923, %v3931
  %v3934 = vadd.f32 %v3924, %v3931
  %v3935 = vadd.f32 %v3925, %v3931
  %v3936 = vadd.f32 %v3926, %v3931
  %s3937 = scalar_lea.vmem %s7, 11
  %v3938 = vld [vmem:[%s3937] sm:$0x1]
  %s3939 = scalar_lea.vmem %s8, 11
  %v3940 = vld [vmem:[%s3939] sm:$0x1]
  %v3941 = vmul.f32 %v3933, %v3933
  %v3942 = vmul.f32 %v3934, %v3934
  %v3943 = vmul.f32 %v3935, %v3935
  %v3944 = vmul.f32 %v3936, %v3936
  %3949 = vrot.lane.b32.xlu0 %v3941, 32
  %v3950 = vpop.permute.xlu0 %3949
  %3951 = vrot.lane.b32.xlu0 %v3942, 32
  %v3952 = vpop.permute.xlu0 %3951
  %3953 = vrot.lane.b32.xlu0 %v3943, 32
  %v3954 = vpop.permute.xlu0 %3953
  %3955 = vrot.lane.b32.xlu0 %v3944, 32
  %v3956 = vpop.permute.xlu0 %3955
  %v3961 = vsel %vm184, %v3933, %v3950
  %v3962 = vsel %vm184, %v3934, %v3952
  %v3963 = vsel %vm184, %v3935, %v3954
  %v3964 = vsel %vm184, %v3936, %v3956
  %v3965 = vsel %vm304, %v3961, 0.0
  %v3966 = vsel %vm304, %v3962, 0.0
  %v3967 = vadd.f32 %v3965, %v3966
  %v3968 = vsel %vm304, %v3963, 0.0
  %v3969 = vadd.f32 %v3967, %v3968
  %v3970 = vsel %vm304, %v3964, 0.0
  %v3971 = vadd.f32 %v3969, %v3970
  %v3972 = vrot.slane %v3971, 4
  %v3973 = vadd.f32 %v3971, %v3972
  %v3974 = vrot.slane %v3973, 2
  %v3975 = vadd.f32 %v3973, %v3974
  %v3976 = vrot.slane %v3975, 1
  %v3977 = vadd.f32 %v3975, %v3976
  %v3978 = vmul.f32 %v3977, 0.03125
  %v3979 = vmul.f32 %v3978, %v3978
  %3981 = vrot.lane.b32.xlu0 %v3979, 32
  %v3982 = vpop.permute.xlu0 %3981
  %v3984 = vsub.f32 %v3978, %v3982
  %v3985 = vsub.f32 %v3933, %v3978
  %v3986 = vsub.f32 %v3934, %v3978
  %v3987 = vsub.f32 %v3935, %v3978
  %v3988 = vsub.f32 %v3936, %v3978
  %v3989 = vadd.f32 %v3984, 1e-05
  %v3990 = vrsqrt.pop %v3989
  %v3991 = vlaneseq
  %v3992 = vshrl.u32 %v3991, 7
  %v3993 = vsub.s32 0, %v3992
  %v3994 = vrot.slane %v3990, %v3993
  %3996 = vrot.lane.b32.xlu0 %v3994, 96
  %v3997 = vpop.permute.xlu0 %3996
  %v3999 = vmul.f32 %v3985, %v3997
  %v4000 = vmul.f32 %v3986, %v3997
  %v4001 = vmul.f32 %v3987, %v3997
  %v4002 = vmul.f32 %v3988, %v3997
  %v4004 = vlaneseq
  %v4005 = vshrl.u32 %v4004, 7
  %v4006 = vsub.s32 0, %v4005
  %v4007 = vrot.slane %v3938, %v4006
  %v4009 = vmul.f32 %v3999, %v4007
  %v4010 = vmul.f32 %v4000, %v4007
  %v4011 = vmul.f32 %v4001, %v4007
  %v4012 = vmul.f32 %v4002, %v4007
  %v4014 = vlaneseq
  %v4015 = vshrl.u32 %v4014, 7
  %v4016 = vsub.s32 0, %v4015
  %v4017 = vrot.slane %v3940, %v4016
  %v4019 = vadd.f32 %v4009, %v4017
  %v4020 = vadd.f32 %v4010, %v4017
  %v4021 = vadd.f32 %v4011, %v4017
  %v4022 = vadd.f32 %v4012, %v4017
  %v4023 = vmax.f32 %v4019, 0.0
  %v4024 = vmax.f32 %v4020, 0.0
  %v4025 = vmax.f32 %v4021, 0.0
  %v4026 = vmax.f32 %v4022, 0.0
  %v4027 = vld [vmem:[%s9] sm:$0xf]
  %v4028 = vld [vmem:[%s9 + $0x4] sm:$0xf]
  %v4029 = vld [vmem:[%s9 + $0x8] sm:$0xf]
  %v4030 = vld [vmem:[%s9 + $0xc] sm:$0xf]
  %s4031 = scalar_lea.vmem %s9, 16
  %v4032 = vld [vmem:[%s4031] sm:$0xf]
  %v4033 = vld [vmem:[%s4031 + $0x4] sm:$0xf]
  %v4034 = vld [vmem:[%s4031 + $0x8] sm:$0xf]
  %v4035 = vld [vmem:[%s4031 + $0xc] sm:$0xf]
  %v4036 = vld [vmem:[%s10] sm:$0x1]
  %v4037 = vpack.c.bf16 %v4024, %v4023
  %v4038 = vpack.c.bf16 %v4026, %v4025
  %v4043 = vunpack.c.l.b16 %v4027
  %v4044 = vunpack.c.l.b16 %v4028
  %v4045 = vunpack.c.l.b16 %v4029
  %v4046 = vunpack.c.l.b16 %v4030
  %v4047 = vpack.c.b16 %v4044, %v4043
  %v4048 = vpack.c.b16 %v4046, %v4045
  %v4052 = vsel %vm184, %v4037, 0
  %v4055 = vsel %vm184, %v4038, 0
  %4057 = vmatprep.subr.bf16.mxu0 0
  %4058 = vmatpush1.bf16.msra.mxu0 %v4047
  %4059 = vmatprep.subr.bf16.mxu0 0
  %4060 = vmatpush1.bf16.msra.mxu0 %v4048
  %4061 = vmatprep.subr.bf16.mxu0 0
  %4062 = vmatpush1.bf16.msra.mxu0 0
  %4063 = vmatprep.subr.bf16.mxu0 0
  %4064 = vmatpush1.bf16.msra.mxu0 0
  %4065 = vmatprep.subr.bf16.mxu0 0
  %4066 = vmatpush1.bf16.msra.mxu0 0
  %4067 = vmatprep.subr.bf16.mxu0 0
  %4068 = vmatpush1.bf16.msra.mxu0 0
  %4069 = vmatprep.subr.bf16.mxu0 0
  %4070 = vmatpush1.bf16.msra.mxu0 0
  %4071 = vmatprep.subr.bf16.mxu0 0
  %4072 = vmatpush1.bf16.msra.mxu0 0
  %4073 = vmatprep.subr.bf16.mxu0 0
  %4074 = vmatpush1.bf16.msra.mxu0 0
  %4075 = vmatprep.subr.bf16.mxu0 0
  %4076 = vmatpush1.bf16.msra.mxu0 0
  %4077 = vmatprep.subr.bf16.mxu0 0
  %4078 = vmatpush1.bf16.msra.mxu0 0
  %4079 = vmatprep.subr.bf16.mxu0 0
  %4080 = vmatpush1.bf16.msra.mxu0 0
  %4081 = vmatprep.subr.bf16.mxu0 0
  %4082 = vmatpush1.bf16.msra.mxu0 0
  %4083 = vmatprep.subr.bf16.mxu0 0
  %4084 = vmatpush1.bf16.msra.mxu0 0
  %4085 = vmatprep.subr.bf16.mxu0 0
  %4086 = vmatpush1.bf16.msra.mxu0 0
  %4087 = vmatprep.subr.bf16.mxu0 0
  %4088 = vmatpush1.bf16.msra.mxu0 0
  %4089 = vmatprep.mubr.bf16.mxu0 0
  %4090 = vmatmul.mubr.bf16.gmra.mrb[0].mxu0 %v4052
  %v4091 = vpop.f32.mrb[0].mxu0
  %v4092 = vadd.f32 0.0, %v4091
  %v4093 = vpop.f32.mrb[0].mxu0
  %v4094 = vpop.f32.mrb[0].mxu0
  %v4095 = vadd.f32 0.0, %v4094
  %v4096 = vpop.f32.mrb[0].mxu0
  %4097 = vmatprep.mubr.bf16.mxu0 0
  %4098 = vmatmul.mubr.bf16.gmra.mrb[0].mxu0 %v4055
  %v4099 = vpop.f32.mrb[0].mxu0
  %v4100 = vadd.f32 0.0, %v4099
  %v4101 = vpop.f32.mrb[0].mxu0
  %v4102 = vpop.f32.mrb[0].mxu0
  %v4103 = vadd.f32 0.0, %v4102
  %v4104 = vpop.f32.mrb[0].mxu0
  %4105 = vdwg.mxu0
  %v4110 = vunpack.c.l.b16 %v4032
  %v4111 = vunpack.c.l.b16 %v4033
  %v4112 = vunpack.c.l.b16 %v4034
  %v4113 = vunpack.c.l.b16 %v4035
  %v4114 = vpack.c.b16 %v4111, %v4110
  %v4115 = vpack.c.b16 %v4113, %v4112
  %4118 = vmatprep.subr.bf16.mxu0 0
  %4119 = vmatpush1.bf16.msra.mxu0 %v4114
  %4120 = vmatprep.subr.bf16.mxu0 0
  %4121 = vmatpush1.bf16.msra.mxu0 %v4115
  %4122 = vmatprep.subr.bf16.mxu0 0
  %4123 = vmatpush1.bf16.msra.mxu0 0
  %4124 = vmatprep.subr.bf16.mxu0 0
  %4125 = vmatpush1.bf16.msra.mxu0 0
  %4126 = vmatprep.subr.bf16.mxu0 0
  %4127 = vmatpush1.bf16.msra.mxu0 0
  %4128 = vmatprep.subr.bf16.mxu0 0
  %4129 = vmatpush1.bf16.msra.mxu0 0
  %4130 = vmatprep.subr.bf16.mxu0 0
  %4131 = vmatpush1.bf16.msra.mxu0 0
  %4132 = vmatprep.subr.bf16.mxu0 0
  %4133 = vmatpush1.bf16.msra.mxu0 0
  %4134 = vmatprep.subr.bf16.mxu0 0
  %4135 = vmatpush1.bf16.msra.mxu0 0
  %4136 = vmatprep.subr.bf16.mxu0 0
  %4137 = vmatpush1.bf16.msra.mxu0 0
  %4138 = vmatprep.subr.bf16.mxu0 0
  %4139 = vmatpush1.bf16.msra.mxu0 0
  %4140 = vmatprep.subr.bf16.mxu0 0
  %4141 = vmatpush1.bf16.msra.mxu0 0
  %4142 = vmatprep.subr.bf16.mxu0 0
  %4143 = vmatpush1.bf16.msra.mxu0 0
  %4144 = vmatprep.subr.bf16.mxu0 0
  %4145 = vmatpush1.bf16.msra.mxu0 0
  %4146 = vmatprep.subr.bf16.mxu0 0
  %4147 = vmatpush1.bf16.msra.mxu0 0
  %4148 = vmatprep.subr.bf16.mxu0 0
  %4149 = vmatpush1.bf16.msra.mxu0 0
  %4150 = vmatprep.mubr.bf16.mxu0 0
  %4151 = vmatmul.mubr.bf16.gmra.mrb[0].mxu0 %v4052
  %v4152 = vpop.f32.mrb[0].mxu0
  %v4153 = vadd.f32 0.0, %v4152
  %v4154 = vpop.f32.mrb[0].mxu0
  %v4155 = vpop.f32.mrb[0].mxu0
  %v4156 = vadd.f32 0.0, %v4155
  %v4157 = vpop.f32.mrb[0].mxu0
  %4158 = vmatprep.mubr.bf16.mxu0 0
  %4159 = vmatmul.mubr.bf16.gmra.mrb[0].mxu0 %v4055
  %v4160 = vpop.f32.mrb[0].mxu0
  %v4161 = vadd.f32 0.0, %v4160
  %v4162 = vpop.f32.mrb[0].mxu0
  %v4163 = vpop.f32.mrb[0].mxu0
  %v4164 = vadd.f32 0.0, %v4163
  %v4165 = vpop.f32.mrb[0].mxu0
  %4166 = vdwg.mxu0
  %v4167 = vpack.c.bf16 %v4156, %v4153
  %v4168 = vpack.c.bf16 %v4164, %v4161
  %4169 = vmatprep.subr.bf16.mxu0 0
  %4170 = vmatpush1.bf16.msra.mxu0 %v4167
  %4171 = vmatprep.subr.bf16.mxu0 0
  %4172 = vmatpush1.bf16.msra.mxu0 %v4168
  %4173 = vmatprep.subr.bf16.mxu0 0
  %4174 = vmatpush1.bf16.msra.mxu0 0
  %4175 = vmatprep.subr.bf16.mxu0 0
  %4176 = vmatpush1.bf16.msra.mxu0 0
  %4177 = vmatprep.subr.bf16.mxu0 0
  %4178 = vmatpush1.bf16.msra.mxu0 0
  %4179 = vmatprep.subr.bf16.mxu0 0
  %4180 = vmatpush1.bf16.msra.mxu0 0
  %4181 = vmatprep.subr.bf16.mxu0 0
  %4182 = vmatpush1.bf16.msra.mxu0 0
  %4183 = vmatprep.subr.bf16.mxu0 0
  %4184 = vmatpush1.bf16.msra.mxu0 0
  %4185 = vmatprep.subr.bf16.mxu0 0
  %4186 = vmatpush1.bf16.msra.mxu0 0
  %4187 = vmatprep.subr.bf16.mxu0 0
  %4188 = vmatpush1.bf16.msra.mxu0 0
  %4189 = vmatprep.subr.bf16.mxu0 0
  %4190 = vmatpush1.bf16.msra.mxu0 0
  %4191 = vmatprep.subr.bf16.mxu0 0
  %4192 = vmatpush1.bf16.msra.mxu0 0
  %4193 = vmatprep.subr.bf16.mxu0 0
  %4194 = vmatpush1.bf16.msra.mxu0 0
  %4195 = vmatprep.subr.bf16.mxu0 0
  %4196 = vmatpush1.bf16.msra.mxu0 0
  %4197 = vmatprep.subr.bf16.mxu0 0
  %4198 = vmatpush1.bf16.msra.mxu0 0
  %4199 = vmatprep.subr.bf16.mxu0 0
  %4200 = vmatpush1.bf16.msra.mxu0 0
  %4201 = vmatprep.mubr.bf16.mxu0 0
  %4202 = vmatmul.mubr.bf16.gmra.mrb[0].mxu0 %v186
  %v4203 = vpop.f32.mrb[0].mxu0
  %v4204 = vadd.f32 0.0, %v4203
  %v4205 = vpop.f32.mrb[0].mxu0
  %v4206 = vpop.f32.mrb[0].mxu0
  %v4207 = vadd.f32 0.0, %v4206
  %v4208 = vpop.f32.mrb[0].mxu0
  %4209 = vmatprep.mubr.bf16.mxu0 0
  %4210 = vmatmul.mubr.bf16.gmra.mrb[0].mxu0 %v189
  %v4211 = vpop.f32.mrb[0].mxu0
  %v4212 = vadd.f32 0.0, %v4211
  %v4213 = vpop.f32.mrb[0].mxu0
  %v4214 = vpop.f32.mrb[0].mxu0
  %v4215 = vadd.f32 0.0, %v4214
  %v4216 = vpop.f32.mrb[0].mxu0
  %4217 = vdwg.mxu0
  %v4218 = vmul.f32 %v243, %v4092
  %v4219 = vmul.f32 %v248, %v4095
  %v4220 = vmul.f32 %v253, %v4100
  %v4221 = vmul.f32 %v258, %v4103
  %v4222 = vadd.f32 %v4218, %v4204
  %v4223 = vadd.f32 %v4219, %v4207
  %v4224 = vadd.f32 %v4220, %v4212
  %v4225 = vadd.f32 %v4221, %v4215
  %v4227 = vlaneseq
  %v4228 = vshrl.u32 %v4227, 7
  %v4229 = vsub.s32 0, %v4228
  %v4230 = vrot.slane %v4036, %v4229
  %v4232 = vadd.f32 %v4222, %v4230
  %v4233 = vadd.f32 %v4223, %v4230
  %v4234 = vadd.f32 %v4224, %v4230
  %v4235 = vadd.f32 %v4225, %v4230
  %4236 = vst [vmem:[%s15] sm:$0xff] %v4232
  %4237 = vst [vmem:[%s15 + $0x8] sm:$0xff] %v4233
  %4238 = vst [vmem:[%s15 + $0x10] sm:$0xff] %v4234
  %4239 = vst [vmem:[%s15 + $0x18] sm:$0xff] %v4235
  // Predicated region
  $region62: #{semgcn7_forward.1} parent=0 // pred_check
    _
  $region63: #{semgcn7_forward.1} parent=0 // pred_check_branch
    %4241 = sbr.rel (0) target = $region65
  $region64: #{semgcn7_forward.1} parent=0 // pred_region
    _
  $region65: #{semgcn7_forward.1} parent=0 // pred_fallthru
    _
  // Predicated region
  $region66: #{semgcn7_forward.1} parent=0 // pred_check
    _
  $region67: #{semgcn7_forward.1} parent=0 // pred_check_branch
    %4243 = sbr.rel (0) target = $region69
  $region68: #{semgcn7_forward.1} parent=0 // pred_region
    _
  $region69: #{semgcn7_forward.1} parent=0 // pred_fallthru
    _

</llo_original>
